<compile_context>
chip_gen: v7x
topology: tpu7x:2x2x1
jax: 0.10.0
libtpu: 0.0.40
codegen_flags: <defaults>
</compile_context>

<pallas_src>
import functools

import jax
import jax.numpy as jnp
import numpy as np
from jax.experimental import pallas as pl
from jax.experimental.pallas import tpu as pltpu


def _dot(a, b, dims=((1,), (0,))):
    """MXU matmul: bf16 operands, f32 accumulation."""
    return jax.lax.dot_general(
        a.astype(jnp.bfloat16), b.astype(jnp.bfloat16),
        dimension_numbers=(dims, ((), ())),
        preferred_element_type=jnp.float32)


# ----------------------------------------------------------------------------
# Fused kernel: one sample (T*V token rows) per grid step.
# ----------------------------------------------------------------------------
def _make_fused_kernel(T, V, C_in, C_out, K, KT, n_head, d_k, d_v):
    R = T * V                      # token rows per sample
    pad = (KT - 1) // 2            # "same" temporal padding
    HK = n_head * d_k
    HV = n_head * d_v
    inv_sqrt_dk = 1.0 / float(d_k) ** 0.5

    def kernel(x_ref, a_bd_ref, bias_ref, bn1_s, bn1_b, wq_ref, wkvc_ref,
               bconv_ref, ln_g, ln_b, wfc_ref, gate_ref, bn2_s, bn2_b,
               wt_ref, bt_ref, bn3_s, bn3_b, o_ref, lhs_scr):
        x_raw = x_ref[0]                                        # (R, C_in) f32
        # ---- BN1 (eval mode, folded scale/shift) -------------------------
        inp = x_raw * bn1_s[...] + bn1_b[...]

        # ---- fused projections from the same LHS: [w_k | w_v | w_conv] ---
        kvc = _dot(inp, wkvc_ref[...])                          # (R, HK+HV+K*C)
        kk = kvc[:, 0:HK]
        vv = kvc[:, HK:HK + HV]
        y = kvc[:, HK + HV:HK + HV + K * C_out] + bconv_ref[...]

        # ---- spatial graph conv: f_c = sum_k blockdiag(A_k)^T @ y_k ------
        f_c = jnp.zeros((R, C_out), jnp.float32)
        for k in range(K):
            f_c = f_c + _dot(a_bd_ref[k], y[:, k * C_out:(k + 1) * C_out])

        # ---- adaptive graph conv (MHSA over V, batched over T via mask) --
        mu = jnp.mean(inp, axis=-1, keepdims=True)
        var = jnp.mean((inp - mu) ** 2, axis=-1, keepdims=True)
        qn = (inp - mu) * jax.lax.rsqrt(var + 1e-6) * ln_g[...] + ln_b[...]
        q = _dot(qn, wq_ref[...])                               # (R, HK)

        f_a = jnp.zeros((R, C_out), jnp.float32)
        for h in range(n_head):
            qh = q[:, h * d_k:(h + 1) * d_k]
            kh = kk[:, h * d_k:(h + 1) * d_k]
            vh = vv[:, h * d_v:(h + 1) * d_v]
            s = _dot(qh, kh, dims=((1,), (1,))) * inv_sqrt_dk   # (R, R)
            s = s + bias_ref[...]                               # block-diag mask
            s = s - jnp.max(s, axis=-1, keepdims=True)
            p = jnp.exp(s)
            p = p * pl.reciprocal(jnp.sum(p, axis=-1, keepdims=True),
                                  approx=True)
            oh = _dot(p, vh)                                    # (R, d_v)
            f_a = f_a + _dot(oh, wfc_ref[h])                    # (R, C_out)
        f_a = f_a + inp        # AdapGraphConv residual (identity, d_in==d_out)

        # ---- gated fusion + BN2 + ReLU -----------------------------------
        gate = gate_ref[0, 0]
        f = (f_a * gate + f_c) * 0.5
        f = jnp.maximum(f * bn2_s[...] + bn2_b[...], 0.0)

        # ---- temporal conv (KT,1) folded into one matmul ------------------
        # lhs[t*V+v, dt*C + c] = f[(t+dt-pad)*V + v, c]  (0 outside range)
        lhs_scr[...] = jnp.zeros((R, KT * C_out), jnp.float32)
        for dt in range(KT):
            shift = (dt - pad) * V
            if shift >= 0:
                lhs_scr[0:R - shift, dt * C_out:(dt + 1) * C_out] = f[shift:R, :]
            else:
                lhs_scr[-shift:R, dt * C_out:(dt + 1) * C_out] = f[0:R + shift, :]
        tcn = _dot(lhs_scr[...], wt_ref[...]) + bt_ref[...]     # (R, C_out)

        # ---- BN3 + block residual (identity) + ReLU ----------------------
        out = tcn * bn3_s[...] + bn3_b[...] + x_raw
        o_ref[0] = jnp.maximum(out, 0.0)

    return kernel


# ----------------------------------------------------------------------------
# Wrapper: GraphConvBlock.forward(x, A)
# ----------------------------------------------------------------------------
def graph_conv_block_forward(x, A, p, *, kernel_size, n_head, d_k, d_v):
    N, C_in, T, V = x.shape
    KT, K = kernel_size
    C_out = p["w_fc"].shape[1]
    assert C_in == C_out and KT % 2 == 1   # identity residual, "same" pad
    R = T * V

    # token layout (N, T*V, C).
    # TODO(synk): when stacking GraphConvBlocks, keep activations in this
    # layout between blocks instead of transposing NCHW <-> NTVC per block.
    x_tok = jnp.transpose(x, (0, 2, 3, 1)).reshape(N, R, C_in)

    # Block-diagonal spatial graph: a_bd[k] = kron(I_T, A[k]^T), so the v-
    # contraction (with t preserved) is a single (R,R)x(R,C) matmul per k.
    eye_t = jnp.eye(T, dtype=jnp.float32)
    a_bd = jnp.einsum("ts,kvw->ktwsv", eye_t, A).reshape(K, R, R)
    a_bd = a_bd.astype(jnp.bfloat16)

    # Block-diagonal attention mask (additive bias).
    blk = jnp.kron(eye_t, jnp.ones((V, V), jnp.float32))        # (R, R)
    attn_bias = jnp.where(blk > 0.5, 0.0, -1e30).astype(jnp.float32)

    # Fused K / V / spatial-conv projection (same LHS) + bf16 MXU weights.
    w_kvc = jnp.concatenate([p["w_k"], p["w_v"], p["w_conv"]], axis=1)
    w_kvc = w_kvc.astype(jnp.bfloat16)                          # (C_in, HK+HV+K*C)
    w_q = p["w_q"].astype(jnp.bfloat16)                         # (C_in, HK)
    w_fc = p["w_fc"].reshape(n_head, d_v, C_out).astype(jnp.bfloat16)
    w_t = p["w_t"].reshape(KT * C_out, C_out).astype(jnp.bfloat16)

    kern = _make_fused_kernel(T, V, C_in, C_out, K, KT, n_head, d_k, d_v)

    def _full(shape):
        return pl.BlockSpec(shape, lambda n: (0,) * len(shape))

    out_tok = pl.pallas_call(
        kern,
        out_shape=jax.ShapeDtypeStruct((N, R, C_out), jnp.float32),
        grid=(N,),
        in_specs=[
            pl.BlockSpec((1, R, C_in), lambda n: (n, 0, 0)),     # x tokens
            _full((K, R, R)),                                    # a_bd
            _full((R, R)),                                       # attn_bias
            _full((1, C_in)), _full((1, C_in)),                  # bn1
            _full((C_in, n_head * d_k)),                         # w_q
            _full((C_in, n_head * d_k + n_head * d_v + K * C_out)),  # w_kvc
            _full((1, K * C_out)),                               # b_conv
            _full((1, C_in)), _full((1, C_in)),                  # layernorm
            _full((n_head, d_v, C_out)),                         # w_fc
            pl.BlockSpec(memory_space=pltpu.MemorySpace.SMEM),   # gate scalar
            _full((1, C_out)), _full((1, C_out)),                # bn2
            _full((KT * C_out, C_out)),                          # w_t (flat)
            _full((1, C_out)),                                   # b_t
            _full((1, C_out)), _full((1, C_out)),                # bn3
        ],
        out_specs=pl.BlockSpec((1, R, C_out), lambda n: (n, 0, 0)),
        scratch_shapes=[pltpu.VMEM((R, KT * C_out), jnp.float32)],
        compiler_params=pltpu.CompilerParams(
            dimension_semantics=("parallel",)),
    )(x_tok, a_bd, attn_bias, p["bn1_s"], p["bn1_b"], w_q, w_kvc, p["b_conv"],
      p["ln_g"], p["ln_b"], w_fc, p["gate"], p["bn2_s"], p["bn2_b"],
      w_t, p["b_t"], p["bn3_s"], p["bn3_b"])

    return out_tok.reshape(N, T, V, C_out).transpose(0, 3, 1, 2)  # back to NCHW


# ----------------------------------------------------------------------------
# Pure-JAX reference (same math, same bf16 MXU-operand policy, no Pallas).
# ----------------------------------------------------------------------------
def reference_forward(x, A, p, *, kernel_size, n_head, d_k, d_v):
    N, C_in, T, V = x.shape
    KT, K = kernel_size
    C_out = p["w_fc"].shape[1]
    bf = jnp.bfloat16

    def mm(eq, a, b):
        return jnp.einsum(eq, a.astype(bf), b.astype(bf),
                          preferred_element_type=jnp.float32)

    x_tvc = jnp.transpose(x, (0, 2, 3, 1))
    inp = x_tvc * p["bn1_s"] + p["bn1_b"]

    y = mm("ntvc,cd->ntvd", inp, p["w_conv"]) + p["b_conv"]
    y = y.reshape(N, T, V, K, C_out)
    f_c = mm("ntvkc,kvw->ntwc", y, A)

    mu = inp.mean(-1, keepdims=True)
    var = ((inp - mu) ** 2).mean(-1, keepdims=True)
    qn = (inp - mu) / jnp.sqrt(var + 1e-6) * p["ln_g"] + p["ln_b"]
    q = mm("ntvc,cd->ntvd", qn, p["w_q"]).reshape(N, T, V, n_head, d_k)
    k_ = mm("ntvc,cd->ntvd", inp, p["w_k"]).reshape(N, T, V, n_head, d_k)
    v_ = mm("ntvc,cd->ntvd", inp, p["w_v"]).reshape(N, T, V, n_head, d_v)
    s = mm("ntvhd,ntwhd->nthvw", q, k_) / float(d_k) ** 0.5
    att = jax.nn.softmax(s, axis=-1)
    o = mm("nthvw,ntwhd->ntvhd", att, v_).reshape(N, T, V, n_head * d_v)
    f_a = mm("ntvd,dc->ntvc", o, p["w_fc"]) + inp

    f = (f_a * p["gate"][0, 0] + f_c) / 2.0
    f = jnp.maximum(f * p["bn2_s"] + p["bn2_b"], 0.0)

    pad = (KT - 1) // 2
    fp = jnp.pad(f, ((0, 0), (pad, pad), (0, 0), (0, 0)))
    out = jnp.zeros((N, T, V, C_out), jnp.float32)
    for dt in range(KT):
        out = out + mm("ntvc,cd->ntvd", fp[:, dt:dt + T], p["w_t"][dt])
    out = out + p["b_t"]
    out = out * p["bn3_s"] + p["bn3_b"]
    out = out + x_tvc
    out = jnp.maximum(out, 0.0)
    return jnp.transpose(out, (0, 3, 1, 2))


# ----------------------------------------------------------------------------
# Deterministic synthetic parameter init (shapes follow the module __init__).
# ----------------------------------------------------------------------------
def init_params(key, C_in, C_out, K, KT, n_head, d_k, d_v):
    ks = jax.random.split(key, 24)
    eps = 1e-5

    def folded_bn(k0, k1, k2, k3, C):
        gamma = 1.0 + 0.1 * jax.random.normal(k0, (C,), jnp.float32)
        beta = 0.1 * jax.random.normal(k1, (C,), jnp.float32)
        mean = 0.1 * jax.random.normal(k2, (C,), jnp.float32)
        var = 1.0 + 0.2 * jax.random.uniform(k3, (C,), jnp.float32)
        s = gamma / jnp.sqrt(var + eps)
        return s.reshape(1, C), (beta - mean * s).reshape(1, C)

    def lin(k, fan_in, fan_out):
        return jax.random.normal(k, (fan_in, fan_out), jnp.float32) / jnp.sqrt(
            float(fan_in))

    p = {}
    p["bn1_s"], p["bn1_b"] = folded_bn(ks[0], ks[1], ks[2], ks[3], C_in)
    p["w_conv"] = lin(ks[4], C_in, K * C_out)
    p["b_conv"] = (0.05 * jax.random.normal(ks[5], (K * C_out,))).reshape(1, -1)
    p["ln_g"] = (1.0 + 0.1 * jax.random.normal(ks[6], (C_in,))).reshape(1, C_in)
    p["ln_b"] = (0.1 * jax.random.normal(ks[7], (C_in,))).reshape(1, C_in)
    p["w_q"] = lin(ks[8], C_in, n_head * d_k)
    p["w_k"] = lin(ks[9], C_in, n_head * d_k)
    p["w_v"] = lin(ks[10], C_in, n_head * d_v)
    p["w_fc"] = lin(ks[11], n_head * d_v, C_out)
    p["gate"] = jnp.ones((1, 1), jnp.float32)          # nn.Parameter(1.0)
    p["bn2_s"], p["bn2_b"] = folded_bn(ks[12], ks[13], ks[14], ks[15], C_out)
    p["w_t"] = jax.random.normal(ks[16], (KT, C_out, C_out), jnp.float32) \
        / jnp.sqrt(float(KT * C_out))
    p["b_t"] = (0.05 * jax.random.normal(ks[17], (C_out,))).reshape(1, C_out)
    p["bn3_s"], p["bn3_b"] = folded_bn(ks[18], ks[19], ks[20], ks[21], C_out)
    return jax.tree_util.tree_map(lambda a: a.astype(jnp.float32), p)


if __name__ == "__main__":
    # TODO(synk): training-mode BatchNorm (batch statistics) and Dropout are
    # implemented with inference semantics only.
    N, C_in, C_out, T, V = 2, 16, 16, 16, 8       # T*V = 128 rows / sample
    kernel_size = (3, 3)                          # (temporal KT, spatial K)
    n_head = 4
    d_k = int(0.25 * C_out)                       # d_kc * out_channels
    d_v = int(0.25 * C_out)

    key = jax.random.PRNGKey(0)
    k_x, k_a, k_p = jax.random.split(key, 3)
    x = jax.random.normal(k_x, (N, C_in, T, V), jnp.float32)
    A = 0.5 * jax.random.uniform(k_a, (kernel_size[1], V, V), jnp.float32)
    params = init_params(k_p, C_in, C_out, kernel_size[1], kernel_size[0],
                         n_head, d_k, d_v)

    fwd = jax.jit(functools.partial(graph_conv_block_forward,
                                    kernel_size=kernel_size, n_head=n_head,
                                    d_k=d_k, d_v=d_v))
    out = jax.block_until_ready(fwd(x, A, params))

    ref = reference_forward(x, A, params, kernel_size=kernel_size,
                            n_head=n_head, d_k=d_k, d_v=d_v)
    np.testing.assert_allclose(np.asarray(out), np.asarray(ref),
                               rtol=2e-2, atol=2e-2)
    print("KERNEL_OK")
</pallas_src>

<mosaic_0001>
module attributes {stable_mosaic.version = 11 : i64} {
  func.func @kernel(%arg0: i32, %arg1: memref<1x128x16xf32, #tpu.memory_space<vmem>>, %arg2: memref<3x128x128xbf16, #tpu.memory_space<vmem>>, %arg3: memref<128x128xf32, #tpu.memory_space<vmem>>, %arg4: memref<1x16xf32, #tpu.memory_space<vmem>>, %arg5: memref<1x16xf32, #tpu.memory_space<vmem>>, %arg6: memref<16x16xbf16, #tpu.memory_space<vmem>>, %arg7: memref<16x80xbf16, #tpu.memory_space<vmem>>, %arg8: memref<1x48xf32, #tpu.memory_space<vmem>>, %arg9: memref<1x16xf32, #tpu.memory_space<vmem>>, %arg10: memref<1x16xf32, #tpu.memory_space<vmem>>, %arg11: memref<4x4x16xbf16, #tpu.memory_space<vmem>>, %arg12: memref<1x1xf32, #tpu.memory_space<smem>>, %arg13: memref<1x16xf32, #tpu.memory_space<vmem>>, %arg14: memref<1x16xf32, #tpu.memory_space<vmem>>, %arg15: memref<48x16xbf16, #tpu.memory_space<vmem>>, %arg16: memref<1x16xf32, #tpu.memory_space<vmem>>, %arg17: memref<1x16xf32, #tpu.memory_space<vmem>>, %arg18: memref<1x16xf32, #tpu.memory_space<vmem>>, %arg19: memref<1x128x16xf32, #tpu.memory_space<vmem>>, %arg20: memref<128x48xf32, #tpu.memory_space<vmem>>) attributes {dimension_semantics = [#tpu.dimension_semantics<parallel>], iteration_bounds = array<i64: 2>, scalar_prefetch = 0 : i64, scratch_operands = 1 : i64, tpu.core_type = #tpu.core_type<tc>, window_params = [{transform_indices = @transform_0, window_bounds = array<i64: 1, 128, 16>}, {pipeline_mode = #tpu.pipeline_mode<synchronous>, transform_indices = @transform_1, window_bounds = array<i64: 3, 128, 128>}, {pipeline_mode = #tpu.pipeline_mode<synchronous>, transform_indices = @transform_2, window_bounds = array<i64: 128, 128>}, {pipeline_mode = #tpu.pipeline_mode<synchronous>, transform_indices = @transform_3, window_bounds = array<i64: 1, 16>}, {pipeline_mode = #tpu.pipeline_mode<synchronous>, transform_indices = @transform_4, window_bounds = array<i64: 1, 16>}, {pipeline_mode = #tpu.pipeline_mode<synchronous>, transform_indices = @transform_5, window_bounds = array<i64: 16, 16>}, {pipeline_mode = #tpu.pipeline_mode<synchronous>, transform_indices = @transform_6, window_bounds = array<i64: 16, 80>}, {pipeline_mode = #tpu.pipeline_mode<synchronous>, transform_indices = @transform_7, window_bounds = array<i64: 1, 48>}, {pipeline_mode = #tpu.pipeline_mode<synchronous>, transform_indices = @transform_8, window_bounds = array<i64: 1, 16>}, {pipeline_mode = #tpu.pipeline_mode<synchronous>, transform_indices = @transform_9, window_bounds = array<i64: 1, 16>}, {pipeline_mode = #tpu.pipeline_mode<synchronous>, transform_indices = @transform_10, window_bounds = array<i64: 4, 4, 16>}, {transform_indices = @transform_11, window_bounds = array<i64: 1, 1>}, {pipeline_mode = #tpu.pipeline_mode<synchronous>, transform_indices = @transform_12, window_bounds = array<i64: 1, 16>}, {pipeline_mode = #tpu.pipeline_mode<synchronous>, transform_indices = @transform_13, window_bounds = array<i64: 1, 16>}, {pipeline_mode = #tpu.pipeline_mode<synchronous>, transform_indices = @transform_14, window_bounds = array<i64: 48, 16>}, {pipeline_mode = #tpu.pipeline_mode<synchronous>, transform_indices = @transform_15, window_bounds = array<i64: 1, 16>}, {pipeline_mode = #tpu.pipeline_mode<synchronous>, transform_indices = @transform_16, window_bounds = array<i64: 1, 16>}, {pipeline_mode = #tpu.pipeline_mode<synchronous>, transform_indices = @transform_17, window_bounds = array<i64: 1, 16>}, {transform_indices = @transform_18, window_bounds = array<i64: 1, 128, 16>}]} {
    %c0 = arith.constant 0 : index
    %c0_0 = arith.constant 0 : index
    %c0_1 = arith.constant 0 : index
    %0 = vector.load %arg1[%c0, %c0_0, %c0_1] : memref<1x128x16xf32, #tpu.memory_space<vmem>>, vector<1x128x16xf32>
    %1 = vector.shape_cast %0 : vector<1x128x16xf32> to vector<128x16xf32>
    %c0_2 = arith.constant 0 : index
    %c0_3 = arith.constant 0 : index
    %2 = vector.load %arg4[%c0_2, %c0_3] : memref<1x16xf32, #tpu.memory_space<vmem>>, vector<1x16xf32>
    %3 = vector.broadcast %2 : vector<1x16xf32> to vector<128x16xf32>
    %4 = arith.mulf %1, %3 : vector<128x16xf32>
    %c0_4 = arith.constant 0 : index
    %c0_5 = arith.constant 0 : index
    %5 = vector.load %arg5[%c0_4, %c0_5] : memref<1x16xf32, #tpu.memory_space<vmem>>, vector<1x16xf32>
    %6 = vector.broadcast %5 : vector<1x16xf32> to vector<128x16xf32>
    %7 = arith.addf %4, %6 : vector<128x16xf32>
    %c0_6 = arith.constant 0 : index
    %c0_7 = arith.constant 0 : index
    %8 = vector.load %arg7[%c0_6, %c0_7] : memref<16x80xbf16, #tpu.memory_space<vmem>>, vector<16x80xbf16>
    %9 = arith.truncf %7 : vector<128x16xf32> to vector<128x16xbf16>
    %cst = arith.constant dense<0.000000e+00> : vector<128x80xf32>
    %10 = tpu.matmul %9, %8, %cst {dimension_numbers = #tpu.dot_dimension_numbers<[1], [0], [0], [1], [0, 0, 1, 1], [], []>} : vector<128x16xbf16>, vector<16x80xbf16>, vector<128x80xf32> -> vector<128x80xf32>
    %11 = vector.extract_strided_slice %10 {offsets = [0, 0], sizes = [128, 16], strides = [1, 1]} : vector<128x80xf32> to vector<128x16xf32>
    %12 = vector.extract_strided_slice %10 {offsets = [0, 16], sizes = [128, 16], strides = [1, 1]} : vector<128x80xf32> to vector<128x16xf32>
    %13 = vector.extract_strided_slice %10 {offsets = [0, 32], sizes = [128, 48], strides = [1, 1]} : vector<128x80xf32> to vector<128x48xf32>
    %c0_8 = arith.constant 0 : index
    %c0_9 = arith.constant 0 : index
    %14 = vector.load %arg8[%c0_8, %c0_9] : memref<1x48xf32, #tpu.memory_space<vmem>>, vector<1x48xf32>
    %15 = vector.broadcast %14 : vector<1x48xf32> to vector<128x48xf32>
    %16 = arith.addf %13, %15 : vector<128x48xf32>
    %cst_10 = arith.constant 0.000000e+00 : f32
    %17 = vector.broadcast %cst_10 : f32 to vector<128x16xf32>
    %c0_11 = arith.constant 0 : index
    %c0_12 = arith.constant 0 : index
    %c0_13 = arith.constant 0 : index
    %18 = vector.load %arg2[%c0_11, %c0_12, %c0_13] : memref<3x128x128xbf16, #tpu.memory_space<vmem>>, vector<1x128x128xbf16>
    %19 = vector.shape_cast %18 : vector<1x128x128xbf16> to vector<128x128xbf16>
    %20 = vector.extract_strided_slice %16 {offsets = [0, 0], sizes = [128, 16], strides = [1, 1]} : vector<128x48xf32> to vector<128x16xf32>
    %21 = arith.truncf %20 : vector<128x16xf32> to vector<128x16xbf16>
    %cst_14 = arith.constant dense<0.000000e+00> : vector<128x16xf32>
    %22 = tpu.matmul %19, %21, %cst_14 {dimension_numbers = #tpu.dot_dimension_numbers<[1], [0], [0], [1], [0, 0, 1, 1], [], []>} : vector<128x128xbf16>, vector<128x16xbf16>, vector<128x16xf32> -> vector<128x16xf32>
    %23 = arith.addf %17, %22 : vector<128x16xf32>
    %c1 = arith.constant 1 : index
    %c0_15 = arith.constant 0 : index
    %c0_16 = arith.constant 0 : index
    %24 = vector.load %arg2[%c1, %c0_15, %c0_16] : memref<3x128x128xbf16, #tpu.memory_space<vmem>>, vector<1x128x128xbf16>
    %25 = vector.shape_cast %24 : vector<1x128x128xbf16> to vector<128x128xbf16>
    %26 = vector.extract_strided_slice %16 {offsets = [0, 16], sizes = [128, 16], strides = [1, 1]} : vector<128x48xf32> to vector<128x16xf32>
    %27 = arith.truncf %26 : vector<128x16xf32> to vector<128x16xbf16>
    %cst_17 = arith.constant dense<0.000000e+00> : vector<128x16xf32>
    %28 = tpu.matmul %25, %27, %cst_17 {dimension_numbers = #tpu.dot_dimension_numbers<[1], [0], [0], [1], [0, 0, 1, 1], [], []>} : vector<128x128xbf16>, vector<128x16xbf16>, vector<128x16xf32> -> vector<128x16xf32>
    %29 = arith.addf %23, %28 : vector<128x16xf32>
    %c2 = arith.constant 2 : index
    %c0_18 = arith.constant 0 : index
    %c0_19 = arith.constant 0 : index
    %30 = vector.load %arg2[%c2, %c0_18, %c0_19] : memref<3x128x128xbf16, #tpu.memory_space<vmem>>, vector<1x128x128xbf16>
    %31 = vector.shape_cast %30 : vector<1x128x128xbf16> to vector<128x128xbf16>
    %32 = vector.extract_strided_slice %16 {offsets = [0, 32], sizes = [128, 16], strides = [1, 1]} : vector<128x48xf32> to vector<128x16xf32>
    %33 = arith.truncf %32 : vector<128x16xf32> to vector<128x16xbf16>
    %cst_20 = arith.constant dense<0.000000e+00> : vector<128x16xf32>
    %34 = tpu.matmul %31, %33, %cst_20 {dimension_numbers = #tpu.dot_dimension_numbers<[1], [0], [0], [1], [0, 0, 1, 1], [], []>} : vector<128x128xbf16>, vector<128x16xbf16>, vector<128x16xf32> -> vector<128x16xf32>
    %35 = arith.addf %29, %34 : vector<128x16xf32>
    %cst_21 = arith.constant dense<0.000000e+00> : vector<128xf32>
    %36 = vector.multi_reduction <add>, %7, %cst_21 [1] : vector<128x16xf32> to vector<128xf32>
    %37 = vector.shape_cast %36 : vector<128xf32> to vector<128x1xf32>
    %cst_22 = arith.constant 1.600000e+01 : f32
    %38 = vector.broadcast %cst_22 : f32 to vector<128x1xf32>
    %39 = arith.divf %37, %38 : vector<128x1xf32>
    %40 = vector.broadcast %39 : vector<128x1xf32> to vector<128x16xf32>
    %41 = arith.subf %7, %40 : vector<128x16xf32>
    %42 = arith.mulf %41, %41 : vector<128x16xf32>
    %cst_23 = arith.constant dense<0.000000e+00> : vector<128xf32>
    %43 = vector.multi_reduction <add>, %42, %cst_23 [1] : vector<128x16xf32> to vector<128xf32>
    %44 = vector.shape_cast %43 : vector<128xf32> to vector<128x1xf32>
    %cst_24 = arith.constant 1.600000e+01 : f32
    %45 = vector.broadcast %cst_24 : f32 to vector<128x1xf32>
    %46 = arith.divf %44, %45 : vector<128x1xf32>
    %47 = vector.broadcast %39 : vector<128x1xf32> to vector<128x16xf32>
    %48 = arith.subf %7, %47 : vector<128x16xf32>
    %cst_25 = arith.constant 9.99999997E-7 : f32
    %49 = vector.broadcast %cst_25 : f32 to vector<128x1xf32>
    %50 = arith.addf %46, %49 : vector<128x1xf32>
    %51 = math.rsqrt %50 : vector<128x1xf32>
    %52 = vector.broadcast %51 : vector<128x1xf32> to vector<128x16xf32>
    %53 = arith.mulf %48, %52 : vector<128x16xf32>
    %c0_26 = arith.constant 0 : index
    %c0_27 = arith.constant 0 : index
    %54 = vector.load %arg9[%c0_26, %c0_27] : memref<1x16xf32, #tpu.memory_space<vmem>>, vector<1x16xf32>
    %55 = vector.broadcast %54 : vector<1x16xf32> to vector<128x16xf32>
    %56 = arith.mulf %53, %55 : vector<128x16xf32>
    %c0_28 = arith.constant 0 : index
    %c0_29 = arith.constant 0 : index
    %57 = vector.load %arg10[%c0_28, %c0_29] : memref<1x16xf32, #tpu.memory_space<vmem>>, vector<1x16xf32>
    %58 = vector.broadcast %57 : vector<1x16xf32> to vector<128x16xf32>
    %59 = arith.addf %56, %58 : vector<128x16xf32>
    %c0_30 = arith.constant 0 : index
    %c0_31 = arith.constant 0 : index
    %60 = vector.load %arg6[%c0_30, %c0_31] : memref<16x16xbf16, #tpu.memory_space<vmem>>, vector<16x16xbf16>
    %61 = arith.truncf %59 : vector<128x16xf32> to vector<128x16xbf16>
    %cst_32 = arith.constant dense<0.000000e+00> : vector<128x16xf32>
    %62 = tpu.matmul %61, %60, %cst_32 {dimension_numbers = #tpu.dot_dimension_numbers<[1], [0], [0], [1], [0, 0, 1, 1], [], []>} : vector<128x16xbf16>, vector<16x16xbf16>, vector<128x16xf32> -> vector<128x16xf32>
    %cst_33 = arith.constant 0.000000e+00 : f32
    %63 = vector.broadcast %cst_33 : f32 to vector<128x16xf32>
    %64 = vector.extract_strided_slice %62 {offsets = [0, 0], sizes = [128, 4], strides = [1, 1]} : vector<128x16xf32> to vector<128x4xf32>
    %65 = vector.extract_strided_slice %11 {offsets = [0, 0], sizes = [128, 4], strides = [1, 1]} : vector<128x16xf32> to vector<128x4xf32>
    %66 = vector.extract_strided_slice %12 {offsets = [0, 0], sizes = [128, 4], strides = [1, 1]} : vector<128x16xf32> to vector<128x4xf32>
    %67 = arith.truncf %64 : vector<128x4xf32> to vector<128x4xbf16>
    %68 = arith.truncf %65 : vector<128x4xf32> to vector<128x4xbf16>
    %cst_34 = arith.constant dense<0.000000e+00> : vector<128x128xf32>
    %69 = tpu.matmul %67, %68, %cst_34 {dimension_numbers = #tpu.dot_dimension_numbers<[1], [1], [0], [0], [0, 0, 1, 0], [], []>} : vector<128x4xbf16>, vector<128x4xbf16>, vector<128x128xf32> -> vector<128x128xf32>
    %cst_35 = arith.constant 5.000000e-01 : f32
    %70 = vector.broadcast %cst_35 : f32 to vector<128x128xf32>
    %71 = arith.mulf %69, %70 : vector<128x128xf32>
    %c0_36 = arith.constant 0 : index
    %c0_37 = arith.constant 0 : index
    %72 = vector.load %arg3[%c0_36, %c0_37] : memref<128x128xf32, #tpu.memory_space<vmem>>, vector<128x128xf32>
    %73 = arith.addf %71, %72 : vector<128x128xf32>
    %cst_38 = arith.constant dense<0xFF800000> : vector<128xf32>
    %74 = vector.multi_reduction <maximumf>, %73, %cst_38 [1] : vector<128x128xf32> to vector<128xf32>
    %75 = vector.shape_cast %74 : vector<128xf32> to vector<128x1xf32>
    %76 = vector.broadcast %75 : vector<128x1xf32> to vector<128x128xf32>
    %77 = arith.subf %73, %76 : vector<128x128xf32>
    %78 = math.exp %77 : vector<128x128xf32>
    %cst_39 = arith.constant dense<0.000000e+00> : vector<128xf32>
    %79 = vector.multi_reduction <add>, %78, %cst_39 [1] : vector<128x128xf32> to vector<128xf32>
    %80 = vector.shape_cast %79 : vector<128xf32> to vector<128x1xf32>
    %81 = tpu.reciprocal %80 {approx = true} : vector<128x1xf32> -> vector<128x1xf32>
    %82 = vector.broadcast %81 : vector<128x1xf32> to vector<128x128xf32>
    %83 = arith.mulf %78, %82 : vector<128x128xf32>
    %84 = arith.truncf %83 : vector<128x128xf32> to vector<128x128xbf16>
    %85 = arith.truncf %66 : vector<128x4xf32> to vector<128x4xbf16>
    %cst_40 = arith.constant dense<0.000000e+00> : vector<128x4xf32>
    %86 = tpu.matmul %84, %85, %cst_40 {dimension_numbers = #tpu.dot_dimension_numbers<[1], [0], [0], [1], [0, 0, 1, 1], [], []>} : vector<128x128xbf16>, vector<128x4xbf16>, vector<128x4xf32> -> vector<128x4xf32>
    %c0_41 = arith.constant 0 : index
    %c0_42 = arith.constant 0 : index
    %c0_43 = arith.constant 0 : index
    %87 = vector.load %arg11[%c0_41, %c0_42, %c0_43] : memref<4x4x16xbf16, #tpu.memory_space<vmem>>, vector<1x4x16xbf16>
    %88 = vector.shape_cast %87 : vector<1x4x16xbf16> to vector<4x16xbf16>
    %89 = arith.truncf %86 : vector<128x4xf32> to vector<128x4xbf16>
    %cst_44 = arith.constant dense<0.000000e+00> : vector<128x16xf32>
    %90 = tpu.matmul %89, %88, %cst_44 {dimension_numbers = #tpu.dot_dimension_numbers<[1], [0], [0], [1], [0, 0, 1, 1], [], []>} : vector<128x4xbf16>, vector<4x16xbf16>, vector<128x16xf32> -> vector<128x16xf32>
    %91 = arith.addf %63, %90 : vector<128x16xf32>
    %92 = vector.extract_strided_slice %62 {offsets = [0, 4], sizes = [128, 4], strides = [1, 1]} : vector<128x16xf32> to vector<128x4xf32>
    %93 = vector.extract_strided_slice %11 {offsets = [0, 4], sizes = [128, 4], strides = [1, 1]} : vector<128x16xf32> to vector<128x4xf32>
    %94 = vector.extract_strided_slice %12 {offsets = [0, 4], sizes = [128, 4], strides = [1, 1]} : vector<128x16xf32> to vector<128x4xf32>
    %95 = arith.truncf %92 : vector<128x4xf32> to vector<128x4xbf16>
    %96 = arith.truncf %93 : vector<128x4xf32> to vector<128x4xbf16>
    %cst_45 = arith.constant dense<0.000000e+00> : vector<128x128xf32>
    %97 = tpu.matmul %95, %96, %cst_45 {dimension_numbers = #tpu.dot_dimension_numbers<[1], [1], [0], [0], [0, 0, 1, 0], [], []>} : vector<128x4xbf16>, vector<128x4xbf16>, vector<128x128xf32> -> vector<128x128xf32>
    %cst_46 = arith.constant 5.000000e-01 : f32
    %98 = vector.broadcast %cst_46 : f32 to vector<128x128xf32>
    %99 = arith.mulf %97, %98 : vector<128x128xf32>
    %c0_47 = arith.constant 0 : index
    %c0_48 = arith.constant 0 : index
    %100 = vector.load %arg3[%c0_47, %c0_48] : memref<128x128xf32, #tpu.memory_space<vmem>>, vector<128x128xf32>
    %101 = arith.addf %99, %100 : vector<128x128xf32>
    %cst_49 = arith.constant dense<0xFF800000> : vector<128xf32>
    %102 = vector.multi_reduction <maximumf>, %101, %cst_49 [1] : vector<128x128xf32> to vector<128xf32>
    %103 = vector.shape_cast %102 : vector<128xf32> to vector<128x1xf32>
    %104 = vector.broadcast %103 : vector<128x1xf32> to vector<128x128xf32>
    %105 = arith.subf %101, %104 : vector<128x128xf32>
    %106 = math.exp %105 : vector<128x128xf32>
    %cst_50 = arith.constant dense<0.000000e+00> : vector<128xf32>
    %107 = vector.multi_reduction <add>, %106, %cst_50 [1] : vector<128x128xf32> to vector<128xf32>
    %108 = vector.shape_cast %107 : vector<128xf32> to vector<128x1xf32>
    %109 = tpu.reciprocal %108 {approx = true} : vector<128x1xf32> -> vector<128x1xf32>
    %110 = vector.broadcast %109 : vector<128x1xf32> to vector<128x128xf32>
    %111 = arith.mulf %106, %110 : vector<128x128xf32>
    %112 = arith.truncf %111 : vector<128x128xf32> to vector<128x128xbf16>
    %113 = arith.truncf %94 : vector<128x4xf32> to vector<128x4xbf16>
    %cst_51 = arith.constant dense<0.000000e+00> : vector<128x4xf32>
    %114 = tpu.matmul %112, %113, %cst_51 {dimension_numbers = #tpu.dot_dimension_numbers<[1], [0], [0], [1], [0, 0, 1, 1], [], []>} : vector<128x128xbf16>, vector<128x4xbf16>, vector<128x4xf32> -> vector<128x4xf32>
    %c1_52 = arith.constant 1 : index
    %c0_53 = arith.constant 0 : index
    %c0_54 = arith.constant 0 : index
    %115 = vector.load %arg11[%c1_52, %c0_53, %c0_54] : memref<4x4x16xbf16, #tpu.memory_space<vmem>>, vector<1x4x16xbf16>
    %116 = vector.shape_cast %115 : vector<1x4x16xbf16> to vector<4x16xbf16>
    %117 = arith.truncf %114 : vector<128x4xf32> to vector<128x4xbf16>
    %cst_55 = arith.constant dense<0.000000e+00> : vector<128x16xf32>
    %118 = tpu.matmul %117, %116, %cst_55 {dimension_numbers = #tpu.dot_dimension_numbers<[1], [0], [0], [1], [0, 0, 1, 1], [], []>} : vector<128x4xbf16>, vector<4x16xbf16>, vector<128x16xf32> -> vector<128x16xf32>
    %119 = arith.addf %91, %118 : vector<128x16xf32>
    %120 = vector.extract_strided_slice %62 {offsets = [0, 8], sizes = [128, 4], strides = [1, 1]} : vector<128x16xf32> to vector<128x4xf32>
    %121 = vector.extract_strided_slice %11 {offsets = [0, 8], sizes = [128, 4], strides = [1, 1]} : vector<128x16xf32> to vector<128x4xf32>
    %122 = vector.extract_strided_slice %12 {offsets = [0, 8], sizes = [128, 4], strides = [1, 1]} : vector<128x16xf32> to vector<128x4xf32>
    %123 = arith.truncf %120 : vector<128x4xf32> to vector<128x4xbf16>
    %124 = arith.truncf %121 : vector<128x4xf32> to vector<128x4xbf16>
    %cst_56 = arith.constant dense<0.000000e+00> : vector<128x128xf32>
    %125 = tpu.matmul %123, %124, %cst_56 {dimension_numbers = #tpu.dot_dimension_numbers<[1], [1], [0], [0], [0, 0, 1, 0], [], []>} : vector<128x4xbf16>, vector<128x4xbf16>, vector<128x128xf32> -> vector<128x128xf32>
    %cst_57 = arith.constant 5.000000e-01 : f32
    %126 = vector.broadcast %cst_57 : f32 to vector<128x128xf32>
    %127 = arith.mulf %125, %126 : vector<128x128xf32>
    %c0_58 = arith.constant 0 : index
    %c0_59 = arith.constant 0 : index
    %128 = vector.load %arg3[%c0_58, %c0_59] : memref<128x128xf32, #tpu.memory_space<vmem>>, vector<128x128xf32>
    %129 = arith.addf %127, %128 : vector<128x128xf32>
    %cst_60 = arith.constant dense<0xFF800000> : vector<128xf32>
    %130 = vector.multi_reduction <maximumf>, %129, %cst_60 [1] : vector<128x128xf32> to vector<128xf32>
    %131 = vector.shape_cast %130 : vector<128xf32> to vector<128x1xf32>
    %132 = vector.broadcast %131 : vector<128x1xf32> to vector<128x128xf32>
    %133 = arith.subf %129, %132 : vector<128x128xf32>
    %134 = math.exp %133 : vector<128x128xf32>
    %cst_61 = arith.constant dense<0.000000e+00> : vector<128xf32>
    %135 = vector.multi_reduction <add>, %134, %cst_61 [1] : vector<128x128xf32> to vector<128xf32>
    %136 = vector.shape_cast %135 : vector<128xf32> to vector<128x1xf32>
    %137 = tpu.reciprocal %136 {approx = true} : vector<128x1xf32> -> vector<128x1xf32>
    %138 = vector.broadcast %137 : vector<128x1xf32> to vector<128x128xf32>
    %139 = arith.mulf %134, %138 : vector<128x128xf32>
    %140 = arith.truncf %139 : vector<128x128xf32> to vector<128x128xbf16>
    %141 = arith.truncf %122 : vector<128x4xf32> to vector<128x4xbf16>
    %cst_62 = arith.constant dense<0.000000e+00> : vector<128x4xf32>
    %142 = tpu.matmul %140, %141, %cst_62 {dimension_numbers = #tpu.dot_dimension_numbers<[1], [0], [0], [1], [0, 0, 1, 1], [], []>} : vector<128x128xbf16>, vector<128x4xbf16>, vector<128x4xf32> -> vector<128x4xf32>
    %c2_63 = arith.constant 2 : index
    %c0_64 = arith.constant 0 : index
    %c0_65 = arith.constant 0 : index
    %143 = vector.load %arg11[%c2_63, %c0_64, %c0_65] : memref<4x4x16xbf16, #tpu.memory_space<vmem>>, vector<1x4x16xbf16>
    %144 = vector.shape_cast %143 : vector<1x4x16xbf16> to vector<4x16xbf16>
    %145 = arith.truncf %142 : vector<128x4xf32> to vector<128x4xbf16>
    %cst_66 = arith.constant dense<0.000000e+00> : vector<128x16xf32>
    %146 = tpu.matmul %145, %144, %cst_66 {dimension_numbers = #tpu.dot_dimension_numbers<[1], [0], [0], [1], [0, 0, 1, 1], [], []>} : vector<128x4xbf16>, vector<4x16xbf16>, vector<128x16xf32> -> vector<128x16xf32>
    %147 = arith.addf %119, %146 : vector<128x16xf32>
    %148 = vector.extract_strided_slice %62 {offsets = [0, 12], sizes = [128, 4], strides = [1, 1]} : vector<128x16xf32> to vector<128x4xf32>
    %149 = vector.extract_strided_slice %11 {offsets = [0, 12], sizes = [128, 4], strides = [1, 1]} : vector<128x16xf32> to vector<128x4xf32>
    %150 = vector.extract_strided_slice %12 {offsets = [0, 12], sizes = [128, 4], strides = [1, 1]} : vector<128x16xf32> to vector<128x4xf32>
    %151 = arith.truncf %148 : vector<128x4xf32> to vector<128x4xbf16>
    %152 = arith.truncf %149 : vector<128x4xf32> to vector<128x4xbf16>
    %cst_67 = arith.constant dense<0.000000e+00> : vector<128x128xf32>
    %153 = tpu.matmul %151, %152, %cst_67 {dimension_numbers = #tpu.dot_dimension_numbers<[1], [1], [0], [0], [0, 0, 1, 0], [], []>} : vector<128x4xbf16>, vector<128x4xbf16>, vector<128x128xf32> -> vector<128x128xf32>
    %cst_68 = arith.constant 5.000000e-01 : f32
    %154 = vector.broadcast %cst_68 : f32 to vector<128x128xf32>
    %155 = arith.mulf %153, %154 : vector<128x128xf32>
    %c0_69 = arith.constant 0 : index
    %c0_70 = arith.constant 0 : index
    %156 = vector.load %arg3[%c0_69, %c0_70] : memref<128x128xf32, #tpu.memory_space<vmem>>, vector<128x128xf32>
    %157 = arith.addf %155, %156 : vector<128x128xf32>
    %cst_71 = arith.constant dense<0xFF800000> : vector<128xf32>
    %158 = vector.multi_reduction <maximumf>, %157, %cst_71 [1] : vector<128x128xf32> to vector<128xf32>
    %159 = vector.shape_cast %158 : vector<128xf32> to vector<128x1xf32>
    %160 = vector.broadcast %159 : vector<128x1xf32> to vector<128x128xf32>
    %161 = arith.subf %157, %160 : vector<128x128xf32>
    %162 = math.exp %161 : vector<128x128xf32>
    %cst_72 = arith.constant dense<0.000000e+00> : vector<128xf32>
    %163 = vector.multi_reduction <add>, %162, %cst_72 [1] : vector<128x128xf32> to vector<128xf32>
    %164 = vector.shape_cast %163 : vector<128xf32> to vector<128x1xf32>
    %165 = tpu.reciprocal %164 {approx = true} : vector<128x1xf32> -> vector<128x1xf32>
    %166 = vector.broadcast %165 : vector<128x1xf32> to vector<128x128xf32>
    %167 = arith.mulf %162, %166 : vector<128x128xf32>
    %168 = arith.truncf %167 : vector<128x128xf32> to vector<128x128xbf16>
    %169 = arith.truncf %150 : vector<128x4xf32> to vector<128x4xbf16>
    %cst_73 = arith.constant dense<0.000000e+00> : vector<128x4xf32>
    %170 = tpu.matmul %168, %169, %cst_73 {dimension_numbers = #tpu.dot_dimension_numbers<[1], [0], [0], [1], [0, 0, 1, 1], [], []>} : vector<128x128xbf16>, vector<128x4xbf16>, vector<128x4xf32> -> vector<128x4xf32>
    %c3 = arith.constant 3 : index
    %c0_74 = arith.constant 0 : index
    %c0_75 = arith.constant 0 : index
    %171 = vector.load %arg11[%c3, %c0_74, %c0_75] : memref<4x4x16xbf16, #tpu.memory_space<vmem>>, vector<1x4x16xbf16>
    %172 = vector.shape_cast %171 : vector<1x4x16xbf16> to vector<4x16xbf16>
    %173 = arith.truncf %170 : vector<128x4xf32> to vector<128x4xbf16>
    %cst_76 = arith.constant dense<0.000000e+00> : vector<128x16xf32>
    %174 = tpu.matmul %173, %172, %cst_76 {dimension_numbers = #tpu.dot_dimension_numbers<[1], [0], [0], [1], [0, 0, 1, 1], [], []>} : vector<128x4xbf16>, vector<4x16xbf16>, vector<128x16xf32> -> vector<128x16xf32>
    %175 = arith.addf %147, %174 : vector<128x16xf32>
    %176 = arith.addf %175, %7 : vector<128x16xf32>
    %c0_77 = arith.constant 0 : index
    %c0_78 = arith.constant 0 : index
    %177 = memref.load %arg12[%c0_77, %c0_78] : memref<1x1xf32, #tpu.memory_space<smem>>
    %178 = vector.broadcast %177 : f32 to vector<128x16xf32>
    %179 = arith.mulf %176, %178 : vector<128x16xf32>
    %180 = arith.addf %179, %35 : vector<128x16xf32>
    %cst_79 = arith.constant 5.000000e-01 : f32
    %181 = vector.broadcast %cst_79 : f32 to vector<128x16xf32>
    %182 = arith.mulf %180, %181 : vector<128x16xf32>
    %c0_80 = arith.constant 0 : index
    %c0_81 = arith.constant 0 : index
    %183 = vector.load %arg13[%c0_80, %c0_81] : memref<1x16xf32, #tpu.memory_space<vmem>>, vector<1x16xf32>
    %184 = vector.broadcast %183 : vector<1x16xf32> to vector<128x16xf32>
    %185 = arith.mulf %182, %184 : vector<128x16xf32>
    %c0_82 = arith.constant 0 : index
    %c0_83 = arith.constant 0 : index
    %186 = vector.load %arg14[%c0_82, %c0_83] : memref<1x16xf32, #tpu.memory_space<vmem>>, vector<1x16xf32>
    %187 = vector.broadcast %186 : vector<1x16xf32> to vector<128x16xf32>
    %188 = arith.addf %185, %187 : vector<128x16xf32>
    %cst_84 = arith.constant 0.000000e+00 : f32
    %189 = vector.broadcast %cst_84 : f32 to vector<128x16xf32>
    %190 = arith.maximumf %188, %189 : vector<128x16xf32>
    %cst_85 = arith.constant 0.000000e+00 : f32
    %191 = vector.broadcast %cst_85 : f32 to vector<128x48xf32>
    %c0_86 = arith.constant 0 : index
    %c0_87 = arith.constant 0 : index
    %192 = vector.load %arg20[%c0_86, %c0_87] : memref<128x48xf32, #tpu.memory_space<vmem>>, vector<128x48xf32>
    tpu.vector_store %arg20[%c0_86, %c0_87], %191 {strides = array<i32>} : memref<128x48xf32, #tpu.memory_space<vmem>>, vector<128x48xf32>,
    %193 = vector.extract_strided_slice %190 {offsets = [0, 0], sizes = [120, 16], strides = [1, 1]} : vector<128x16xf32> to vector<120x16xf32>
    %c8 = arith.constant 8 : index
    %c0_88 = arith.constant 0 : index
    %194 = vector.load %arg20[%c8, %c0_88] : memref<128x48xf32, #tpu.memory_space<vmem>>, vector<120x16xf32>
    tpu.vector_store %arg20[%c8, %c0_88], %193 {strides = array<i32>} : memref<128x48xf32, #tpu.memory_space<vmem>>, vector<120x16xf32>,
    %c0_89 = arith.constant 0 : index
    %c16 = arith.constant 16 : index
    %195 = vector.load %arg20[%c0_89, %c16] : memref<128x48xf32, #tpu.memory_space<vmem>>, vector<128x16xf32>
    tpu.vector_store %arg20[%c0_89, %c16], %190 {strides = array<i32>} : memref<128x48xf32, #tpu.memory_space<vmem>>, vector<128x16xf32>,
    %196 = vector.extract_strided_slice %190 {offsets = [8, 0], sizes = [120, 16], strides = [1, 1]} : vector<128x16xf32> to vector<120x16xf32>
    %c0_90 = arith.constant 0 : index
    %c32 = arith.constant 32 : index
    %197 = vector.load %arg20[%c0_90, %c32] : memref<128x48xf32, #tpu.memory_space<vmem>>, vector<120x16xf32>
    tpu.vector_store %arg20[%c0_90, %c32], %196 {strides = array<i32>} : memref<128x48xf32, #tpu.memory_space<vmem>>, vector<120x16xf32>,
    %c0_91 = arith.constant 0 : index
    %c0_92 = arith.constant 0 : index
    %198 = vector.load %arg20[%c0_91, %c0_92] : memref<128x48xf32, #tpu.memory_space<vmem>>, vector<128x48xf32>
    %c0_93 = arith.constant 0 : index
    %c0_94 = arith.constant 0 : index
    %199 = vector.load %arg15[%c0_93, %c0_94] : memref<48x16xbf16, #tpu.memory_space<vmem>>, vector<48x16xbf16>
    %200 = arith.truncf %198 : vector<128x48xf32> to vector<128x48xbf16>
    %cst_95 = arith.constant dense<0.000000e+00> : vector<128x16xf32>
    %201 = tpu.matmul %200, %199, %cst_95 {dimension_numbers = #tpu.dot_dimension_numbers<[1], [0], [0], [1], [0, 0, 1, 1], [], []>} : vector<128x48xbf16>, vector<48x16xbf16>, vector<128x16xf32> -> vector<128x16xf32>
    %c0_96 = arith.constant 0 : index
    %c0_97 = arith.constant 0 : index
    %202 = vector.load %arg16[%c0_96, %c0_97] : memref<1x16xf32, #tpu.memory_space<vmem>>, vector<1x16xf32>
    %203 = vector.broadcast %202 : vector<1x16xf32> to vector<128x16xf32>
    %204 = arith.addf %201, %203 : vector<128x16xf32>
    %c0_98 = arith.constant 0 : index
    %c0_99 = arith.constant 0 : index
    %205 = vector.load %arg17[%c0_98, %c0_99] : memref<1x16xf32, #tpu.memory_space<vmem>>, vector<1x16xf32>
    %206 = vector.broadcast %205 : vector<1x16xf32> to vector<128x16xf32>
    %207 = arith.mulf %204, %206 : vector<128x16xf32>
    %c0_100 = arith.constant 0 : index
    %c0_101 = arith.constant 0 : index
    %208 = vector.load %arg18[%c0_100, %c0_101] : memref<1x16xf32, #tpu.memory_space<vmem>>, vector<1x16xf32>
    %209 = vector.broadcast %208 : vector<1x16xf32> to vector<128x16xf32>
    %210 = arith.addf %207, %209 : vector<128x16xf32>
    %211 = arith.addf %210, %1 : vector<128x16xf32>
    %cst_102 = arith.constant 0.000000e+00 : f32
    %212 = vector.broadcast %cst_102 : f32 to vector<128x16xf32>
    %213 = arith.maximumf %211, %212 : vector<128x16xf32>
    %c0_103 = arith.constant 0 : index
    %c0_104 = arith.constant 0 : index
    %c0_105 = arith.constant 0 : index
    %214 = vector.load %arg19[%c0_103, %c0_104, %c0_105] : memref<1x128x16xf32, #tpu.memory_space<vmem>>, vector<1x128x16xf32>
    %215 = vector.shape_cast %214 : vector<1x128x16xf32> to vector<128x16xf32>
    %216 = vector.shape_cast %213 : vector<128x16xf32> to vector<1x128x16xf32>
    tpu.vector_store %arg19[%c0_103, %c0_104, %c0_105], %216 {strides = array<i32>} : memref<1x128x16xf32, #tpu.memory_space<vmem>>, vector<1x128x16xf32>,
    return
  }
  func.func @transform_0(%arg0: i32) -> (i32, i32, i32) {
    %c0_i32 = arith.constant 0 : i32
    %c0_i32_0 = arith.constant 0 : i32
    %c0_i32_1 = arith.constant 0 : i32
    return %arg0, %c0_i32, %c0_i32_0 : i32, i32, i32
  }
  func.func @transform_1(%arg0: i32) -> (i32, i32, i32) {
    %c0_i32 = arith.constant 0 : i32
    %c0_i32_0 = arith.constant 0 : i32
    %c0_i32_1 = arith.constant 0 : i32
    %c0_i32_2 = arith.constant 0 : i32
    return %c0_i32, %c0_i32_0, %c0_i32_1 : i32, i32, i32
  }
  func.func @transform_2(%arg0: i32) -> (i32, i32) {
    %c0_i32 = arith.constant 0 : i32
    %c0_i32_0 = arith.constant 0 : i32
    %c0_i32_1 = arith.constant 0 : i32
    return %c0_i32, %c0_i32_0 : i32, i32
  }
  func.func @transform_3(%arg0: i32) -> (i32, i32) {
    %c0_i32 = arith.constant 0 : i32
    %c0_i32_0 = arith.constant 0 : i32
    %c0_i32_1 = arith.constant 0 : i32
    return %c0_i32, %c0_i32_0 : i32, i32
  }
  func.func @transform_4(%arg0: i32) -> (i32, i32) {
    %c0_i32 = arith.constant 0 : i32
    %c0_i32_0 = arith.constant 0 : i32
    %c0_i32_1 = arith.constant 0 : i32
    return %c0_i32, %c0_i32_0 : i32, i32
  }
  func.func @transform_5(%arg0: i32) -> (i32, i32) {
    %c0_i32 = arith.constant 0 : i32
    %c0_i32_0 = arith.constant 0 : i32
    %c0_i32_1 = arith.constant 0 : i32
    return %c0_i32, %c0_i32_0 : i32, i32
  }
  func.func @transform_6(%arg0: i32) -> (i32, i32) {
    %c0_i32 = arith.constant 0 : i32
    %c0_i32_0 = arith.constant 0 : i32
    %c0_i32_1 = arith.constant 0 : i32
    return %c0_i32, %c0_i32_0 : i32, i32
  }
  func.func @transform_7(%arg0: i32) -> (i32, i32) {
    %c0_i32 = arith.constant 0 : i32
    %c0_i32_0 = arith.constant 0 : i32
    %c0_i32_1 = arith.constant 0 : i32
    return %c0_i32, %c0_i32_0 : i32, i32
  }
  func.func @transform_8(%arg0: i32) -> (i32, i32) {
    %c0_i32 = arith.constant 0 : i32
    %c0_i32_0 = arith.constant 0 : i32
    %c0_i32_1 = arith.constant 0 : i32
    return %c0_i32, %c0_i32_0 : i32, i32
  }
  func.func @transform_9(%arg0: i32) -> (i32, i32) {
    %c0_i32 = arith.constant 0 : i32
    %c0_i32_0 = arith.constant 0 : i32
    %c0_i32_1 = arith.constant 0 : i32
    return %c0_i32, %c0_i32_0 : i32, i32
  }
  func.func @transform_10(%arg0: i32) -> (i32, i32, i32) {
    %c0_i32 = arith.constant 0 : i32
    %c0_i32_0 = arith.constant 0 : i32
    %c0_i32_1 = arith.constant 0 : i32
    %c0_i32_2 = arith.constant 0 : i32
    return %c0_i32, %c0_i32_0, %c0_i32_1 : i32, i32, i32
  }
  func.func @transform_11(%arg0: i32) -> (i32, i32) {
    %c0_i32 = arith.constant 0 : i32
    %c0_i32_0 = arith.constant 0 : i32
    %c0_i32_1 = arith.constant 0 : i32
    return %c0_i32, %c0_i32_0 : i32, i32
  }
  func.func @transform_12(%arg0: i32) -> (i32, i32) {
    %c0_i32 = arith.constant 0 : i32
    %c0_i32_0 = arith.constant 0 : i32
    %c0_i32_1 = arith.constant 0 : i32
    return %c0_i32, %c0_i32_0 : i32, i32
  }
  func.func @transform_13(%arg0: i32) -> (i32, i32) {
    %c0_i32 = arith.constant 0 : i32
    %c0_i32_0 = arith.constant 0 : i32
    %c0_i32_1 = arith.constant 0 : i32
    return %c0_i32, %c0_i32_0 : i32, i32
  }
  func.func @transform_14(%arg0: i32) -> (i32, i32) {
    %c0_i32 = arith.constant 0 : i32
    %c0_i32_0 = arith.constant 0 : i32
    %c0_i32_1 = arith.constant 0 : i32
    return %c0_i32, %c0_i32_0 : i32, i32
  }
  func.func @transform_15(%arg0: i32) -> (i32, i32) {
    %c0_i32 = arith.constant 0 : i32
    %c0_i32_0 = arith.constant 0 : i32
    %c0_i32_1 = arith.constant 0 : i32
    return %c0_i32, %c0_i32_0 : i32, i32
  }
  func.func @transform_16(%arg0: i32) -> (i32, i32) {
    %c0_i32 = arith.constant 0 : i32
    %c0_i32_0 = arith.constant 0 : i32
    %c0_i32_1 = arith.constant 0 : i32
    return %c0_i32, %c0_i32_0 : i32, i32
  }
  func.func @transform_17(%arg0: i32) -> (i32, i32) {
    %c0_i32 = arith.constant 0 : i32
    %c0_i32_0 = arith.constant 0 : i32
    %c0_i32_1 = arith.constant 0 : i32
    return %c0_i32, %c0_i32_0 : i32, i32
  }
  func.func @transform_18(%arg0: i32) -> (i32, i32, i32) {
    %c0_i32 = arith.constant 0 : i32
    %c0_i32_0 = arith.constant 0 : i32
    %c0_i32_1 = arith.constant 0 : i32
    return %arg0, %c0_i32, %c0_i32_0 : i32, i32, i32
  }
}

</mosaic_0001>

<llo_original>
// kernel: graph_conv_block_forward.1
$region0: #{graph_conv_block_forward.1}
  #allocation0 [shape = 'u32[]', space=smem, size = 0x4, offset = 0x4, fixed_abs, tag = 'smem constant byte address 0x4 - core index']
  #allocation1 [shape = 'u32[144,128]{1,0:T(1,128)}', space=vmem, size = 0x12000, scoped, tag = 'internal scratch']
  #allocation2 [shape = 'f32[128,48]{1,0:T(8,128)}', space=vmem, size = 0x10000, scoped, tag = 'scratch operand']
  #allocation3 [shape = 'f32[1,1]{1,0:T(1,128)S(6)}', space=smem, size = 0x200, scoped, tag = 'scoped memory for graph_conv_block_forward.1']
  %s0 = inlined_call_operand.vmem [shape: f32[2,128,16], index: 0, kind: input, shape index: {}]
  %s1 = inlined_call_operand.vmem [shape: bf16[3,128,128], index: 1, kind: input, shape index: {}]
  %s2 = inlined_call_operand.vmem [shape: f32[128,128], index: 2, kind: input, shape index: {}]
  %s3 = inlined_call_operand.vmem [shape: f32[1,16], index: 3, kind: input, shape index: {}]
  %s4 = inlined_call_operand.vmem [shape: f32[1,16], index: 4, kind: input, shape index: {}]
  %s5 = inlined_call_operand.vmem [shape: bf16[16,16], index: 5, kind: input, shape index: {}]
  %s6 = inlined_call_operand.vmem [shape: bf16[16,80], index: 6, kind: input, shape index: {}]
  %s7 = inlined_call_operand.vmem [shape: f32[1,48], index: 7, kind: input, shape index: {}]
  %s8 = inlined_call_operand.vmem [shape: f32[1,16], index: 8, kind: input, shape index: {}]
  %s9 = inlined_call_operand.vmem [shape: f32[1,16], index: 9, kind: input, shape index: {}]
  %s10 = inlined_call_operand.vmem [shape: bf16[4,4,16], index: 10, kind: input, shape index: {}]
  %s11 = inlined_call_operand.<no memory space> [shape: f32[1,1], index: 11, kind: input, shape index: {}]
  %s12 = inlined_call_operand.vmem [shape: f32[1,16], index: 12, kind: input, shape index: {}]
  %s13 = inlined_call_operand.vmem [shape: f32[1,16], index: 13, kind: input, shape index: {}]
  %s14 = inlined_call_operand.vmem [shape: bf16[48,16], index: 14, kind: input, shape index: {}]
  %s15 = inlined_call_operand.vmem [shape: f32[1,16], index: 15, kind: input, shape index: {}]
  %s16 = inlined_call_operand.vmem [shape: f32[1,16], index: 16, kind: input, shape index: {}]
  %s17 = inlined_call_operand.vmem [shape: f32[1,16], index: 17, kind: input, shape index: {}]
  %s18 = inlined_call_operand.vmem [shape: f32[2,128,16], index: 18, kind: output, shape index: {}]
  %s19 = sld [smem:[#allocation0]]
  $region105: #{graph_conv_block_forward.1} parent=0
    _
  %s21 = ssub.s32 1, %s19
  %s22 = scalar_select 0, %s21, %s19
  %23 = sst [smem:[#allocation3]] %s11
  loop: start=0, step=1, limit=4
  $region2: #{graph_conv_block_forward.1} parent=0 // loop_pre_header
    _
  $region3: #{graph_conv_block_forward.1} parent=0 // loop_header
    %s25 = sphi 0, %s29
    %p26 = scmp.ge.s32.totalorder %s25, 4
    %s35 = sphi 0, %s37
    %s38 = sphi 0, %s35
    %s39 = sphi 0, %s38
    %s55 = sphi 0, %s39
    %s59 = sphi 0, %s59
    %s61 = sphi 0, %s59
    %s62 = sphi 0, %s61
    %s76 = sphi 0, %s62
    %s80 = sphi 0, %s80
    %s82 = sphi 0, %s80
    %s83 = sphi 0, %s82
    %s97 = sphi 0, %s83
    %s101 = sphi 0, %s101
    %s103 = sphi 0, %s101
    %s104 = sphi 0, %s103
    %s118 = sphi 0, %s104
    %s122 = sphi 0, %s122
    %s124 = sphi 0, %s122
    %s125 = sphi 0, %s124
    %s139 = sphi 0, %s125
    %s143 = sphi 0, %s143
    %s145 = sphi 0, %s143
    %s146 = sphi 0, %s145
    %s160 = sphi 0, %s146
    %s164 = sphi 0, %s164
    %s166 = sphi 0, %s164
    %s167 = sphi 0, %s166
    %s181 = sphi 0, %s167
    %s185 = sphi 0, %s185
    %s187 = sphi 0, %s185
    %s188 = sphi 0, %s187
    %s202 = sphi 0, %s188
    %s206 = sphi 0, %s206
    %s208 = sphi 0, %s206
    %s209 = sphi 0, %s208
    %s223 = sphi 0, %s209
    %s227 = sphi 0, %s227
    %s229 = sphi 0, %s227
    %s230 = sphi 0, %s229
    %s244 = sphi 0, %s230
    %s248 = sphi 0, %s248
    %s250 = sphi 0, %s248
    %s251 = sphi 0, %s250
    %s265 = sphi 0, %s251
    %s269 = sphi 0, %s269
    %s271 = sphi 0, %s269
    %s272 = sphi 0, %s271
    %s286 = sphi 0, %s272
    %s290 = sphi 0, %s290
    %s292 = sphi 0, %s290
    %s293 = sphi 0, %s292
    %s307 = sphi 0, %s293
    %s311 = sphi 0, %s311
    %s313 = sphi 0, %s311
    %s314 = sphi 0, %s313
    %s328 = sphi 0, %s314
    %s332 = sphi 0, %s332
    %s334 = sphi 0, %s332
    %s335 = sphi 0, %s334
    %s349 = sphi 0, %s335
    %s353 = sphi 0, %s353
    %s355 = sphi 0, %s353
    %s356 = sphi 0, %s355
    %s370 = sphi 0, %s356
    %s374 = sphi 0, %s374
    %s376 = sphi 0, %s374
    %s377 = sphi 0, %s376
    %s391 = sphi 0, %s377
    %s395 = sphi 0, %s395
    %s397 = sphi 0, %s395
    %s398 = sphi 0, %s397
    %s412 = sphi 0, %s398
    %s418 = sphi 0, %s420
    %s421 = sphi 0, %s418
    %s422 = sphi 0, %s421
    %s438 = sphi 0, %s422
  $region4: #{graph_conv_block_forward.1} parent=0 // loop_header_branch
    %28 = sbr.rel (%p26) target = $region8
  $region5: #{graph_conv_block_forward.1} parent=0 // loop_body
    %s30 = ssub.s32 %s25, 1
    %s31 = ssub.s32 %s25, 2
    %s32 = sadd.s32 %s25, 1
    %s33 = ssub.s32 %s25, %s32
    %p34 = scmp.eq.s32.totalorder %s33, 0
    %s36 = sadd.s32 %s35, 1
    %s37 = scalar_select %p34, %s35, %s36
    %p40 = pneg %p34
    %p41 = scmp.eq.s32.totalorder %s25, 1
    %p42 = por %p40, %p41
    %p43 = scmp.ne.s32.totalorder %s35, %s38
    %p44 = scmp.eq.s32.totalorder %s25, 0
    %p45 = por %p43, %p44
    %p46 = scmp.ne.s32.totalorder %s35, %s38
    %p47 = scmp.eq.s32.totalorder %s30, 1
    %p48 = por %p46, %p47
    %p49 = scmp.ne.s32.totalorder %s38, %s39
    %p50 = scmp.eq.s32.totalorder %s30, 0
    %p51 = por %p49, %p50
    %p52 = scmp.ne.s32.totalorder %s38, %s39
    %p53 = scmp.eq.s32.totalorder %s31, 1
    %p54 = por %p52, %p53
    %p56 = scmp.ne.s32.totalorder %s39, %s55
    %p57 = scmp.eq.s32.totalorder %s31, 0
    %p58 = por %p56, %p57
    %s60 = sadd.s32 %s59, 1
    %p63 = scmp.eq.s32.totalorder %s25, 1
    %p64 = scmp.ne.s32.totalorder %s59, %s61
    %p65 = scmp.eq.s32.totalorder %s25, 0
    %p66 = por %p64, %p65
    %p67 = scmp.ne.s32.totalorder %s59, %s61
    %p68 = scmp.eq.s32.totalorder %s30, 1
    %p69 = por %p67, %p68
    %p70 = scmp.ne.s32.totalorder %s61, %s62
    %p71 = scmp.eq.s32.totalorder %s30, 0
    %p72 = por %p70, %p71
    %p73 = scmp.ne.s32.totalorder %s61, %s62
    %p74 = scmp.eq.s32.totalorder %s31, 1
    %p75 = por %p73, %p74
    %p77 = scmp.ne.s32.totalorder %s62, %s76
    %p78 = scmp.eq.s32.totalorder %s31, 0
    %p79 = por %p77, %p78
    %s81 = sadd.s32 %s80, 1
    %p84 = scmp.eq.s32.totalorder %s25, 1
    %p85 = scmp.ne.s32.totalorder %s80, %s82
    %p86 = scmp.eq.s32.totalorder %s25, 0
    %p87 = por %p85, %p86
    %p88 = scmp.ne.s32.totalorder %s80, %s82
    %p89 = scmp.eq.s32.totalorder %s30, 1
    %p90 = por %p88, %p89
    %p91 = scmp.ne.s32.totalorder %s82, %s83
    %p92 = scmp.eq.s32.totalorder %s30, 0
    %p93 = por %p91, %p92
    %p94 = scmp.ne.s32.totalorder %s82, %s83
    %p95 = scmp.eq.s32.totalorder %s31, 1
    %p96 = por %p94, %p95
    %p98 = scmp.ne.s32.totalorder %s83, %s97
    %p99 = scmp.eq.s32.totalorder %s31, 0
    %p100 = por %p98, %p99
    %s102 = sadd.s32 %s101, 1
    %p105 = scmp.eq.s32.totalorder %s25, 1
    %p106 = scmp.ne.s32.totalorder %s101, %s103
    %p107 = scmp.eq.s32.totalorder %s25, 0
    %p108 = por %p106, %p107
    %p109 = scmp.ne.s32.totalorder %s101, %s103
    %p110 = scmp.eq.s32.totalorder %s30, 1
    %p111 = por %p109, %p110
    %p112 = scmp.ne.s32.totalorder %s103, %s104
    %p113 = scmp.eq.s32.totalorder %s30, 0
    %p114 = por %p112, %p113
    %p115 = scmp.ne.s32.totalorder %s103, %s104
    %p116 = scmp.eq.s32.totalorder %s31, 1
    %p117 = por %p115, %p116
    %p119 = scmp.ne.s32.totalorder %s104, %s118
    %p120 = scmp.eq.s32.totalorder %s31, 0
    %p121 = por %p119, %p120
    %s123 = sadd.s32 %s122, 1
    %p126 = scmp.eq.s32.totalorder %s25, 1
    %p127 = scmp.ne.s32.totalorder %s122, %s124
    %p128 = scmp.eq.s32.totalorder %s25, 0
    %p129 = por %p127, %p128
    %p130 = scmp.ne.s32.totalorder %s122, %s124
    %p131 = scmp.eq.s32.totalorder %s30, 1
    %p132 = por %p130, %p131
    %p133 = scmp.ne.s32.totalorder %s124, %s125
    %p134 = scmp.eq.s32.totalorder %s30, 0
    %p135 = por %p133, %p134
    %p136 = scmp.ne.s32.totalorder %s124, %s125
    %p137 = scmp.eq.s32.totalorder %s31, 1
    %p138 = por %p136, %p137
    %p140 = scmp.ne.s32.totalorder %s125, %s139
    %p141 = scmp.eq.s32.totalorder %s31, 0
    %p142 = por %p140, %p141
    %s144 = sadd.s32 %s143, 1
    %p147 = scmp.eq.s32.totalorder %s25, 1
    %p148 = scmp.ne.s32.totalorder %s143, %s145
    %p149 = scmp.eq.s32.totalorder %s25, 0
    %p150 = por %p148, %p149
    %p151 = scmp.ne.s32.totalorder %s143, %s145
    %p152 = scmp.eq.s32.totalorder %s30, 1
    %p153 = por %p151, %p152
    %p154 = scmp.ne.s32.totalorder %s145, %s146
    %p155 = scmp.eq.s32.totalorder %s30, 0
    %p156 = por %p154, %p155
    %p157 = scmp.ne.s32.totalorder %s145, %s146
    %p158 = scmp.eq.s32.totalorder %s31, 1
    %p159 = por %p157, %p158
    %p161 = scmp.ne.s32.totalorder %s146, %s160
    %p162 = scmp.eq.s32.totalorder %s31, 0
    %p163 = por %p161, %p162
    %s165 = sadd.s32 %s164, 1
    %p168 = scmp.eq.s32.totalorder %s25, 1
    %p169 = scmp.ne.s32.totalorder %s164, %s166
    %p170 = scmp.eq.s32.totalorder %s25, 0
    %p171 = por %p169, %p170
    %p172 = scmp.ne.s32.totalorder %s164, %s166
    %p173 = scmp.eq.s32.totalorder %s30, 1
    %p174 = por %p172, %p173
    %p175 = scmp.ne.s32.totalorder %s166, %s167
    %p176 = scmp.eq.s32.totalorder %s30, 0
    %p177 = por %p175, %p176
    %p178 = scmp.ne.s32.totalorder %s166, %s167
    %p179 = scmp.eq.s32.totalorder %s31, 1
    %p180 = por %p178, %p179
    %p182 = scmp.ne.s32.totalorder %s167, %s181
    %p183 = scmp.eq.s32.totalorder %s31, 0
    %p184 = por %p182, %p183
    %s186 = sadd.s32 %s185, 1
    %p189 = scmp.eq.s32.totalorder %s25, 1
    %p190 = scmp.ne.s32.totalorder %s185, %s187
    %p191 = scmp.eq.s32.totalorder %s25, 0
    %p192 = por %p190, %p191
    %p193 = scmp.ne.s32.totalorder %s185, %s187
    %p194 = scmp.eq.s32.totalorder %s30, 1
    %p195 = por %p193, %p194
    %p196 = scmp.ne.s32.totalorder %s187, %s188
    %p197 = scmp.eq.s32.totalorder %s30, 0
    %p198 = por %p196, %p197
    %p199 = scmp.ne.s32.totalorder %s187, %s188
    %p200 = scmp.eq.s32.totalorder %s31, 1
    %p201 = por %p199, %p200
    %p203 = scmp.ne.s32.totalorder %s188, %s202
    %p204 = scmp.eq.s32.totalorder %s31, 0
    %p205 = por %p203, %p204
    %s207 = sadd.s32 %s206, 1
    %p210 = scmp.eq.s32.totalorder %s25, 1
    %p211 = scmp.ne.s32.totalorder %s206, %s208
    %p212 = scmp.eq.s32.totalorder %s25, 0
    %p213 = por %p211, %p212
    %p214 = scmp.ne.s32.totalorder %s206, %s208
    %p215 = scmp.eq.s32.totalorder %s30, 1
    %p216 = por %p214, %p215
    %p217 = scmp.ne.s32.totalorder %s208, %s209
    %p218 = scmp.eq.s32.totalorder %s30, 0
    %p219 = por %p217, %p218
    %p220 = scmp.ne.s32.totalorder %s208, %s209
    %p221 = scmp.eq.s32.totalorder %s31, 1
    %p222 = por %p220, %p221
    %p224 = scmp.ne.s32.totalorder %s209, %s223
    %p225 = scmp.eq.s32.totalorder %s31, 0
    %p226 = por %p224, %p225
    %s228 = sadd.s32 %s227, 1
    %p231 = scmp.eq.s32.totalorder %s25, 1
    %p232 = scmp.ne.s32.totalorder %s227, %s229
    %p233 = scmp.eq.s32.totalorder %s25, 0
    %p234 = por %p232, %p233
    %p235 = scmp.ne.s32.totalorder %s227, %s229
    %p236 = scmp.eq.s32.totalorder %s30, 1
    %p237 = por %p235, %p236
    %p238 = scmp.ne.s32.totalorder %s229, %s230
    %p239 = scmp.eq.s32.totalorder %s30, 0
    %p240 = por %p238, %p239
    %p241 = scmp.ne.s32.totalorder %s229, %s230
    %p242 = scmp.eq.s32.totalorder %s31, 1
    %p243 = por %p241, %p242
    %p245 = scmp.ne.s32.totalorder %s230, %s244
    %p246 = scmp.eq.s32.totalorder %s31, 0
    %p247 = por %p245, %p246
    %s249 = sadd.s32 %s248, 1
    %p252 = scmp.eq.s32.totalorder %s25, 1
    %p253 = scmp.ne.s32.totalorder %s248, %s250
    %p254 = scmp.eq.s32.totalorder %s25, 0
    %p255 = por %p253, %p254
    %p256 = scmp.ne.s32.totalorder %s248, %s250
    %p257 = scmp.eq.s32.totalorder %s30, 1
    %p258 = por %p256, %p257
    %p259 = scmp.ne.s32.totalorder %s250, %s251
    %p260 = scmp.eq.s32.totalorder %s30, 0
    %p261 = por %p259, %p260
    %p262 = scmp.ne.s32.totalorder %s250, %s251
    %p263 = scmp.eq.s32.totalorder %s31, 1
    %p264 = por %p262, %p263
    %p266 = scmp.ne.s32.totalorder %s251, %s265
    %p267 = scmp.eq.s32.totalorder %s31, 0
    %p268 = por %p266, %p267
    %s270 = sadd.s32 %s269, 1
    %p273 = scmp.eq.s32.totalorder %s25, 1
    %p274 = scmp.ne.s32.totalorder %s269, %s271
    %p275 = scmp.eq.s32.totalorder %s25, 0
    %p276 = por %p274, %p275
    %p277 = scmp.ne.s32.totalorder %s269, %s271
    %p278 = scmp.eq.s32.totalorder %s30, 1
    %p279 = por %p277, %p278
    %p280 = scmp.ne.s32.totalorder %s271, %s272
    %p281 = scmp.eq.s32.totalorder %s30, 0
    %p282 = por %p280, %p281
    %p283 = scmp.ne.s32.totalorder %s271, %s272
    %p284 = scmp.eq.s32.totalorder %s31, 1
    %p285 = por %p283, %p284
    %p287 = scmp.ne.s32.totalorder %s272, %s286
    %p288 = scmp.eq.s32.totalorder %s31, 0
    %p289 = por %p287, %p288
    %s291 = sadd.s32 %s290, 1
    %p294 = scmp.eq.s32.totalorder %s25, 1
    %p295 = scmp.ne.s32.totalorder %s290, %s292
    %p296 = scmp.eq.s32.totalorder %s25, 0
    %p297 = por %p295, %p296
    %p298 = scmp.ne.s32.totalorder %s290, %s292
    %p299 = scmp.eq.s32.totalorder %s30, 1
    %p300 = por %p298, %p299
    %p301 = scmp.ne.s32.totalorder %s292, %s293
    %p302 = scmp.eq.s32.totalorder %s30, 0
    %p303 = por %p301, %p302
    %p304 = scmp.ne.s32.totalorder %s292, %s293
    %p305 = scmp.eq.s32.totalorder %s31, 1
    %p306 = por %p304, %p305
    %p308 = scmp.ne.s32.totalorder %s293, %s307
    %p309 = scmp.eq.s32.totalorder %s31, 0
    %p310 = por %p308, %p309
    %s312 = sadd.s32 %s311, 1
    %p315 = scmp.eq.s32.totalorder %s25, 1
    %p316 = scmp.ne.s32.totalorder %s311, %s313
    %p317 = scmp.eq.s32.totalorder %s25, 0
    %p318 = por %p316, %p317
    %p319 = scmp.ne.s32.totalorder %s311, %s313
    %p320 = scmp.eq.s32.totalorder %s30, 1
    %p321 = por %p319, %p320
    %p322 = scmp.ne.s32.totalorder %s313, %s314
    %p323 = scmp.eq.s32.totalorder %s30, 0
    %p324 = por %p322, %p323
    %p325 = scmp.ne.s32.totalorder %s313, %s314
    %p326 = scmp.eq.s32.totalorder %s31, 1
    %p327 = por %p325, %p326
    %p329 = scmp.ne.s32.totalorder %s314, %s328
    %p330 = scmp.eq.s32.totalorder %s31, 0
    %p331 = por %p329, %p330
    %s333 = sadd.s32 %s332, 1
    %p336 = scmp.eq.s32.totalorder %s25, 1
    %p337 = scmp.ne.s32.totalorder %s332, %s334
    %p338 = scmp.eq.s32.totalorder %s25, 0
    %p339 = por %p337, %p338
    %p340 = scmp.ne.s32.totalorder %s332, %s334
    %p341 = scmp.eq.s32.totalorder %s30, 1
    %p342 = por %p340, %p341
    %p343 = scmp.ne.s32.totalorder %s334, %s335
    %p344 = scmp.eq.s32.totalorder %s30, 0
    %p345 = por %p343, %p344
    %p346 = scmp.ne.s32.totalorder %s334, %s335
    %p347 = scmp.eq.s32.totalorder %s31, 1
    %p348 = por %p346, %p347
    %p350 = scmp.ne.s32.totalorder %s335, %s349
    %p351 = scmp.eq.s32.totalorder %s31, 0
    %p352 = por %p350, %p351
    %s354 = sadd.s32 %s353, 1
    %p357 = scmp.eq.s32.totalorder %s25, 1
    %p358 = scmp.ne.s32.totalorder %s353, %s355
    %p359 = scmp.eq.s32.totalorder %s25, 0
    %p360 = por %p358, %p359
    %p361 = scmp.ne.s32.totalorder %s353, %s355
    %p362 = scmp.eq.s32.totalorder %s30, 1
    %p363 = por %p361, %p362
    %p364 = scmp.ne.s32.totalorder %s355, %s356
    %p365 = scmp.eq.s32.totalorder %s30, 0
    %p366 = por %p364, %p365
    %p367 = scmp.ne.s32.totalorder %s355, %s356
    %p368 = scmp.eq.s32.totalorder %s31, 1
    %p369 = por %p367, %p368
    %p371 = scmp.ne.s32.totalorder %s356, %s370
    %p372 = scmp.eq.s32.totalorder %s31, 0
    %p373 = por %p371, %p372
    %s375 = sadd.s32 %s374, 1
    %p378 = scmp.eq.s32.totalorder %s25, 1
    %p379 = scmp.ne.s32.totalorder %s374, %s376
    %p380 = scmp.eq.s32.totalorder %s25, 0
    %p381 = por %p379, %p380
    %p382 = scmp.ne.s32.totalorder %s374, %s376
    %p383 = scmp.eq.s32.totalorder %s30, 1
    %p384 = por %p382, %p383
    %p385 = scmp.ne.s32.totalorder %s376, %s377
    %p386 = scmp.eq.s32.totalorder %s30, 0
    %p387 = por %p385, %p386
    %p388 = scmp.ne.s32.totalorder %s376, %s377
    %p389 = scmp.eq.s32.totalorder %s31, 1
    %p390 = por %p388, %p389
    %p392 = scmp.ne.s32.totalorder %s377, %s391
    %p393 = scmp.eq.s32.totalorder %s31, 0
    %p394 = por %p392, %p393
    %s396 = sadd.s32 %s395, 1
    %p399 = scmp.eq.s32.totalorder %s25, 1
    %p400 = scmp.ne.s32.totalorder %s395, %s397
    %p401 = scmp.eq.s32.totalorder %s25, 0
    %p402 = por %p400, %p401
    %p403 = scmp.ne.s32.totalorder %s395, %s397
    %p404 = scmp.eq.s32.totalorder %s30, 1
    %p405 = por %p403, %p404
    %p406 = scmp.ne.s32.totalorder %s397, %s398
    %p407 = scmp.eq.s32.totalorder %s30, 0
    %p408 = por %p406, %p407
    %p409 = scmp.ne.s32.totalorder %s397, %s398
    %p410 = scmp.eq.s32.totalorder %s31, 1
    %p411 = por %p409, %p410
    %p413 = scmp.ne.s32.totalorder %s398, %s412
    %p414 = scmp.eq.s32.totalorder %s31, 0
    %p415 = por %p413, %p414
    %s416 = ssub.s32 %s25, %s32
    %p417 = scmp.eq.s32.totalorder %s416, 0
    %s419 = sadd.s32 %s418, 1
    %s420 = scalar_select %p417, %s418, %s419
    %p423 = pneg %p417
    %p424 = scmp.eq.s32.totalorder %s25, 1
    %p425 = por %p423, %p424
    %p426 = scmp.ne.s32.totalorder %s418, %s421
    %p427 = scmp.eq.s32.totalorder %s25, 0
    %p428 = por %p426, %p427
    %p429 = scmp.ne.s32.totalorder %s418, %s421
    %p430 = scmp.eq.s32.totalorder %s30, 1
    %p431 = por %p429, %p430
    %p432 = scmp.ne.s32.totalorder %s421, %s422
    %p433 = scmp.eq.s32.totalorder %s30, 0
    %p434 = por %p432, %p433
    %p435 = scmp.ne.s32.totalorder %s421, %s422
    %p436 = scmp.eq.s32.totalorder %s31, 1
    %p437 = por %p435, %p436
    %p439 = scmp.ne.s32.totalorder %s422, %s438
    %p440 = scmp.eq.s32.totalorder %s31, 0
    %p441 = por %p439, %p440
    %p442 = scmp.le.s32.totalorder 1, %s25
    %p443 = scmp.lt.s32.totalorder %s25, 3
    %p444 = pnand %p442, %p443
    %p445 = pneg %p444
    // Predicated region
    $region9: #{graph_conv_block_forward.1} parent=5 // pred_check
      _
    $region10: #{graph_conv_block_forward.1} parent=5 // pred_check_branch
      %447 = sbr.rel (%p444) target = $region12
    $region11: #{graph_conv_block_forward.1} parent=5 // pred_region
      %s448 = ssub.s32 %s25, 1
      // Predicated region
      $region13: #{graph_conv_block_forward.1} parent=11 // pred_check
        %p449 = pneg %p72
      $region14: #{graph_conv_block_forward.1} parent=11 // pred_check_branch
        %451 = sbr.rel (%p449) target = $region16
      $region15: #{graph_conv_block_forward.1} parent=11 // pred_region
        _
      $region16: #{graph_conv_block_forward.1} parent=11 // pred_fallthru
        _
      // Predicated region
      $region17: #{graph_conv_block_forward.1} parent=11 // pred_check
        %p452 = pneg %p93
      $region18: #{graph_conv_block_forward.1} parent=11 // pred_check_branch
        %454 = sbr.rel (%p452) target = $region20
      $region19: #{graph_conv_block_forward.1} parent=11 // pred_region
        _
      $region20: #{graph_conv_block_forward.1} parent=11 // pred_fallthru
        _
      // Predicated region
      $region21: #{graph_conv_block_forward.1} parent=11 // pred_check
        %p455 = pneg %p114
      $region22: #{graph_conv_block_forward.1} parent=11 // pred_check_branch
        %457 = sbr.rel (%p455) target = $region24
      $region23: #{graph_conv_block_forward.1} parent=11 // pred_region
        _
      $region24: #{graph_conv_block_forward.1} parent=11 // pred_fallthru
        _
      // Predicated region
      $region25: #{graph_conv_block_forward.1} parent=11 // pred_check
        %p458 = pneg %p135
      $region26: #{graph_conv_block_forward.1} parent=11 // pred_check_branch
        %460 = sbr.rel (%p458) target = $region28
      $region27: #{graph_conv_block_forward.1} parent=11 // pred_region
        _
      $region28: #{graph_conv_block_forward.1} parent=11 // pred_fallthru
        _
      // Predicated region
      $region29: #{graph_conv_block_forward.1} parent=11 // pred_check
        %p461 = pneg %p156
      $region30: #{graph_conv_block_forward.1} parent=11 // pred_check_branch
        %463 = sbr.rel (%p461) target = $region32
      $region31: #{graph_conv_block_forward.1} parent=11 // pred_region
        _
      $region32: #{graph_conv_block_forward.1} parent=11 // pred_fallthru
        _
      // Predicated region
      $region33: #{graph_conv_block_forward.1} parent=11 // pred_check
        %p464 = pneg %p177
      $region34: #{graph_conv_block_forward.1} parent=11 // pred_check_branch
        %466 = sbr.rel (%p464) target = $region36
      $region35: #{graph_conv_block_forward.1} parent=11 // pred_region
        _
      $region36: #{graph_conv_block_forward.1} parent=11 // pred_fallthru
        _
      // Predicated region
      $region37: #{graph_conv_block_forward.1} parent=11 // pred_check
        %p467 = pneg %p198
      $region38: #{graph_conv_block_forward.1} parent=11 // pred_check_branch
        %469 = sbr.rel (%p467) target = $region40
      $region39: #{graph_conv_block_forward.1} parent=11 // pred_region
        _
      $region40: #{graph_conv_block_forward.1} parent=11 // pred_fallthru
        _
      // Predicated region
      $region41: #{graph_conv_block_forward.1} parent=11 // pred_check
        %p470 = pneg %p219
      $region42: #{graph_conv_block_forward.1} parent=11 // pred_check_branch
        %472 = sbr.rel (%p470) target = $region44
      $region43: #{graph_conv_block_forward.1} parent=11 // pred_region
        _
      $region44: #{graph_conv_block_forward.1} parent=11 // pred_fallthru
        _
      // Predicated region
      $region45: #{graph_conv_block_forward.1} parent=11 // pred_check
        %p473 = pneg %p240
      $region46: #{graph_conv_block_forward.1} parent=11 // pred_check_branch
        %475 = sbr.rel (%p473) target = $region48
      $region47: #{graph_conv_block_forward.1} parent=11 // pred_region
        _
      $region48: #{graph_conv_block_forward.1} parent=11 // pred_fallthru
        _
      // Predicated region
      $region49: #{graph_conv_block_forward.1} parent=11 // pred_check
        %p476 = pneg %p261
      $region50: #{graph_conv_block_forward.1} parent=11 // pred_check_branch
        %478 = sbr.rel (%p476) target = $region52
      $region51: #{graph_conv_block_forward.1} parent=11 // pred_region
        _
      $region52: #{graph_conv_block_forward.1} parent=11 // pred_fallthru
        _
      // Predicated region
      $region53: #{graph_conv_block_forward.1} parent=11 // pred_check
        %p479 = pneg %p282
      $region54: #{graph_conv_block_forward.1} parent=11 // pred_check_branch
        %481 = sbr.rel (%p479) target = $region56
      $region55: #{graph_conv_block_forward.1} parent=11 // pred_region
        _
      $region56: #{graph_conv_block_forward.1} parent=11 // pred_fallthru
        _
      // Predicated region
      $region57: #{graph_conv_block_forward.1} parent=11 // pred_check
        %p482 = pneg %p303
      $region58: #{graph_conv_block_forward.1} parent=11 // pred_check_branch
        %484 = sbr.rel (%p482) target = $region60
      $region59: #{graph_conv_block_forward.1} parent=11 // pred_region
        _
      $region60: #{graph_conv_block_forward.1} parent=11 // pred_fallthru
        _
      // Predicated region
      $region61: #{graph_conv_block_forward.1} parent=11 // pred_check
        %p485 = pneg %p324
      $region62: #{graph_conv_block_forward.1} parent=11 // pred_check_branch
        %487 = sbr.rel (%p485) target = $region64
      $region63: #{graph_conv_block_forward.1} parent=11 // pred_region
        _
      $region64: #{graph_conv_block_forward.1} parent=11 // pred_fallthru
        _
      // Predicated region
      $region65: #{graph_conv_block_forward.1} parent=11 // pred_check
        %p488 = pneg %p345
      $region66: #{graph_conv_block_forward.1} parent=11 // pred_check_branch
        %490 = sbr.rel (%p488) target = $region68
      $region67: #{graph_conv_block_forward.1} parent=11 // pred_region
        _
      $region68: #{graph_conv_block_forward.1} parent=11 // pred_fallthru
        _
      // Predicated region
      $region69: #{graph_conv_block_forward.1} parent=11 // pred_check
        %p491 = pneg %p366
      $region70: #{graph_conv_block_forward.1} parent=11 // pred_check_branch
        %493 = sbr.rel (%p491) target = $region72
      $region71: #{graph_conv_block_forward.1} parent=11 // pred_region
        _
      $region72: #{graph_conv_block_forward.1} parent=11 // pred_fallthru
        _
      // Predicated region
      $region73: #{graph_conv_block_forward.1} parent=11 // pred_check
        %p494 = pneg %p387
      $region74: #{graph_conv_block_forward.1} parent=11 // pred_check_branch
        %496 = sbr.rel (%p494) target = $region76
      $region75: #{graph_conv_block_forward.1} parent=11 // pred_region
        _
      $region76: #{graph_conv_block_forward.1} parent=11 // pred_fallthru
        _
      // Predicated region
      $region77: #{graph_conv_block_forward.1} parent=11 // pred_check
        %p497 = pneg %p408
      $region78: #{graph_conv_block_forward.1} parent=11 // pred_check_branch
        %499 = sbr.rel (%p497) target = $region80
      $region79: #{graph_conv_block_forward.1} parent=11 // pred_region
        _
      $region80: #{graph_conv_block_forward.1} parent=11 // pred_fallthru
        _
    $region12: #{graph_conv_block_forward.1} parent=5 // pred_fallthru
      _
    %p500 = scmp.lt.s32.totalorder %s25, 2
    // Predicated region
    $region81: #{graph_conv_block_forward.1} parent=5 // pred_check
      %p501 = pneg %p500
    $region82: #{graph_conv_block_forward.1} parent=5 // pred_check_branch
      %503 = sbr.rel (%p501) target = $region84
    $region83: #{graph_conv_block_forward.1} parent=5 // pred_region
      // Predicated region
      $region85: #{graph_conv_block_forward.1} parent=83 // pred_check
        %p504 = pneg %p45
      $region86: #{graph_conv_block_forward.1} parent=83 // pred_check_branch
        %506 = sbr.rel (%p504) target = $region88
      $region87: #{graph_conv_block_forward.1} parent=83 // pred_region
        %p507 = scmp.lt.s32.totalorder %s25, 1
        %s508 = scalar_select %p507, %s25, 1
        %s509 = smul.addr %s508, 16
        %s510 = smul.addr %s509, 8
        %s511 = scalar_lea.vmem %s0, %s510
      $region88: #{graph_conv_block_forward.1} parent=83 // pred_fallthru
        _
    $region84: #{graph_conv_block_forward.1} parent=5 // pred_fallthru
      _
    %p512 = scmp.le.s32.totalorder 1, %s25
    %p513 = scmp.lt.s32.totalorder %s25, 3
    %p514 = pnand %p512, %p513
    %p515 = pneg %p514
    // Predicated region
    $region89: #{graph_conv_block_forward.1} parent=5 // pred_check
      _
    $region90: #{graph_conv_block_forward.1} parent=5 // pred_check_branch
      %517 = sbr.rel (%p514) target = $region92
    $region91: #{graph_conv_block_forward.1} parent=5 // pred_region
      %s518 = ssub.s32 %s25, 1
      %p519 = scmp.lt.s32.totalorder %s30, 1
      %s520 = scalar_select %p519, %s30, 1
      %s521 = smul.addr %s520, 16
      %s522 = smul.addr %s521, 8
      %s523 = scalar_lea.vmem %s0, %s522
      %p524 = pneg %p51
      %p525 = pneg %p48
      %p526 = pneg %p72
      %p527 = pneg %p69
      %p528 = pneg %p93
      %p529 = pneg %p90
      %p530 = pneg %p114
      %p531 = pneg %p111
      %p532 = pneg %p135
      %p533 = pneg %p132
      %p534 = pneg %p156
      %p535 = pneg %p153
      %p536 = pneg %p177
      %p537 = pneg %p174
      %p538 = pneg %p198
      %p539 = pneg %p195
      %p540 = pneg %p219
      %p541 = pneg %p216
      %p542 = pneg %p240
      %p543 = pneg %p237
      %p544 = pneg %p261
      %p545 = pneg %p258
      %p546 = pneg %p282
      %p547 = pneg %p279
      %p548 = pneg %p303
      %p549 = pneg %p300
      %p550 = pneg %p324
      %p551 = pneg %p321
      %p552 = pneg %p345
      %p553 = pneg %p342
      %p554 = pneg %p366
      %p555 = pneg %p363
      %p556 = pneg %p387
      %p557 = pneg %p384
      %p558 = pneg %p408
      %p559 = pneg %p405
      %p560 = pneg %p434
      %p561 = pneg %p431
      %p562 = scmp.lt.s32.totalorder %s30, 1
      %s563 = scalar_select %p562, %s30, 1
      %s564 = smul.addr %s563, 16
      %s565 = smul.addr %s564, 8
      %s566 = scalar_lea.vmem %s18, %s565
      %p567 = scmp.lt.s32.totalorder %s30, 1
      %s568 = scalar_select %p567, %s30, 1
      %s569 = smul.addr %s568, 16
      %s570 = smul.addr %s569, 8
      %s571 = scalar_lea.vmem %s0, %s570
      %p572 = scmp.lt.s32.totalorder %s30, 1
      %s573 = scalar_select %p572, %s30, 1
      %s574 = smul.addr %s573, 16
      %s575 = smul.addr %s574, 8
      %s576 = scalar_lea.vmem %s18, %s575
      %v578 = vld [vmem:[%s571] sm:$0xff]
      %v579 = vld [vmem:[%s571 + $0x8] sm:$0xff]
      %v580 = vld [vmem:[%s571 + $0x10] sm:$0xff]
      %v581 = vld [vmem:[%s571 + $0x18] sm:$0xff]
      %v582 = vld [vmem:[%s571 + $0x20] sm:$0xff]
      %v583 = vld [vmem:[%s571 + $0x28] sm:$0xff]
      %v584 = vld [vmem:[%s571 + $0x30] sm:$0xff]
      %v585 = vld [vmem:[%s571 + $0x38] sm:$0xff]
      %v586 = vld [vmem:[%s571 + $0x40] sm:$0xff]
      %v587 = vld [vmem:[%s571 + $0x48] sm:$0xff]
      %v588 = vld [vmem:[%s571 + $0x50] sm:$0xff]
      %v589 = vld [vmem:[%s571 + $0x58] sm:$0xff]
      %v590 = vld [vmem:[%s571 + $0x60] sm:$0xff]
      %v591 = vld [vmem:[%s571 + $0x68] sm:$0xff]
      %v592 = vld [vmem:[%s571 + $0x70] sm:$0xff]
      %v593 = vld [vmem:[%s571 + $0x78] sm:$0xff]
      %v594 = vld [vmem:[%s3] sm:$0x1]
      %v596 = vlaneseq
      %v597 = vshrl.u32 %v596, 7
      %v598 = vsub.s32 0, %v597
      %v599 = vrot.slane %v594, %v598
      %v601 = vmul.f32 %v578, %v599
      %v602 = vmul.f32 %v579, %v599
      %v603 = vmul.f32 %v580, %v599
      %v604 = vmul.f32 %v581, %v599
      %v605 = vmul.f32 %v582, %v599
      %v606 = vmul.f32 %v583, %v599
      %v607 = vmul.f32 %v584, %v599
      %v608 = vmul.f32 %v585, %v599
      %v609 = vmul.f32 %v586, %v599
      %v610 = vmul.f32 %v587, %v599
      %v611 = vmul.f32 %v588, %v599
      %v612 = vmul.f32 %v589, %v599
      %v613 = vmul.f32 %v590, %v599
      %v614 = vmul.f32 %v591, %v599
      %v615 = vmul.f32 %v592, %v599
      %v616 = vmul.f32 %v593, %v599
      %v617 = vld [vmem:[%s4] sm:$0x1]
      %v619 = vlaneseq
      %v620 = vshrl.u32 %v619, 7
      %v621 = vsub.s32 0, %v620
      %v622 = vrot.slane %v617, %v621
      %v624 = vadd.f32 %v601, %v622
      %v625 = vadd.f32 %v602, %v622
      %v626 = vadd.f32 %v603, %v622
      %v627 = vadd.f32 %v604, %v622
      %v628 = vadd.f32 %v605, %v622
      %v629 = vadd.f32 %v606, %v622
      %v630 = vadd.f32 %v607, %v622
      %v631 = vadd.f32 %v608, %v622
      %v632 = vadd.f32 %v609, %v622
      %v633 = vadd.f32 %v610, %v622
      %v634 = vadd.f32 %v611, %v622
      %v635 = vadd.f32 %v612, %v622
      %v636 = vadd.f32 %v613, %v622
      %v637 = vadd.f32 %v614, %v622
      %v638 = vadd.f32 %v615, %v622
      %v639 = vadd.f32 %v616, %v622
      %v640 = vld [vmem:[%s6] sm:$0xf]
      %v641 = vld [vmem:[%s6 + $0x4] sm:$0xf]
      %v642 = vpack.c.bf16 %v625, %v624
      %v643 = vpack.c.bf16 %v627, %v626
      %v644 = vpack.c.bf16 %v629, %v628
      %v645 = vpack.c.bf16 %v631, %v630
      %v646 = vpack.c.bf16 %v633, %v632
      %v647 = vpack.c.bf16 %v635, %v634
      %v648 = vpack.c.bf16 %v637, %v636
      %v649 = vpack.c.bf16 %v639, %v638
      %v652 = vunpack.c.l.b16 %v640
      %v653 = vunpack.c.l.b16 %v641
      %v654 = vpack.c.b16 %v653, %v652
      %vm656 = vcmask 130048
      %v658 = vsel %vm656, %v642, 0
      %v661 = vsel %vm656, %v643, 0
      %v664 = vsel %vm656, %v644, 0
      %v667 = vsel %vm656, %v645, 0
      %v670 = vsel %vm656, %v646, 0
      %v673 = vsel %vm656, %v647, 0
      %v676 = vsel %vm656, %v648, 0
      %v679 = vsel %vm656, %v649, 0
      %681 = vmatprep.subr.bf16.mxu0 0
      %682 = vmatpush1.bf16.msra.mxu0 %v654
      %683 = vmatprep.subr.bf16.mxu0 0
      %684 = vmatpush1.bf16.msra.mxu0 0
      %685 = vmatprep.subr.bf16.mxu0 0
      %686 = vmatpush1.bf16.msra.mxu0 0
      %687 = vmatprep.subr.bf16.mxu0 0
      %688 = vmatpush1.bf16.msra.mxu0 0
      %689 = vmatprep.subr.bf16.mxu0 0
      %690 = vmatpush1.bf16.msra.mxu0 0
      %691 = vmatprep.subr.bf16.mxu0 0
      %692 = vmatpush1.bf16.msra.mxu0 0
      %693 = vmatprep.subr.bf16.mxu0 0
      %694 = vmatpush1.bf16.msra.mxu0 0
      %695 = vmatprep.subr.bf16.mxu0 0
      %696 = vmatpush1.bf16.msra.mxu0 0
      %697 = vmatprep.subr.bf16.mxu0 0
      %698 = vmatpush1.bf16.msra.mxu0 0
      %699 = vmatprep.subr.bf16.mxu0 0
      %700 = vmatpush1.bf16.msra.mxu0 0
      %701 = vmatprep.subr.bf16.mxu0 0
      %702 = vmatpush1.bf16.msra.mxu0 0
      %703 = vmatprep.subr.bf16.mxu0 0
      %704 = vmatpush1.bf16.msra.mxu0 0
      %705 = vmatprep.subr.bf16.mxu0 0
      %706 = vmatpush1.bf16.msra.mxu0 0
      %707 = vmatprep.subr.bf16.mxu0 0
      %708 = vmatpush1.bf16.msra.mxu0 0
      %709 = vmatprep.subr.bf16.mxu0 0
      %710 = vmatpush1.bf16.msra.mxu0 0
      %711 = vmatprep.subr.bf16.mxu0 0
      %712 = vmatpush1.bf16.msra.mxu0 0
      %713 = vmatprep.mubr.bf16.mxu0 0
      %714 = vmatmul.mubr.bf16.gmra.mrb[0].mxu0 %v658
      %v715 = vpop.f32.mrb[0].mxu0
      %v716 = vadd.f32 0.0, %v715
      %v717 = vpop.f32.mrb[0].mxu0
      %v718 = vpop.f32.mrb[0].mxu0
      %v719 = vadd.f32 0.0, %v718
      %v720 = vpop.f32.mrb[0].mxu0
      %721 = vmatprep.mubr.bf16.mxu0 0
      %722 = vmatmul.mubr.bf16.gmra.mrb[0].mxu0 %v661
      %v723 = vpop.f32.mrb[0].mxu0
      %v724 = vadd.f32 0.0, %v723
      %v725 = vpop.f32.mrb[0].mxu0
      %v726 = vpop.f32.mrb[0].mxu0
      %v727 = vadd.f32 0.0, %v726
      %v728 = vpop.f32.mrb[0].mxu0
      %729 = vmatprep.mubr.bf16.mxu0 0
      %730 = vmatmul.mubr.bf16.gmra.mrb[0].mxu0 %v664
      %v731 = vpop.f32.mrb[0].mxu0
      %v732 = vadd.f32 0.0, %v731
      %v733 = vpop.f32.mrb[0].mxu0
      %v734 = vpop.f32.mrb[0].mxu0
      %v735 = vadd.f32 0.0, %v734
      %v736 = vpop.f32.mrb[0].mxu0
      %737 = vmatprep.mubr.bf16.mxu0 0
      %738 = vmatmul.mubr.bf16.gmra.mrb[0].mxu0 %v667
      %v739 = vpop.f32.mrb[0].mxu0
      %v740 = vadd.f32 0.0, %v739
      %v741 = vpop.f32.mrb[0].mxu0
      %v742 = vpop.f32.mrb[0].mxu0
      %v743 = vadd.f32 0.0, %v742
      %v744 = vpop.f32.mrb[0].mxu0
      %745 = vmatprep.mubr.bf16.mxu0 0
      %746 = vmatmul.mubr.bf16.gmra.mrb[0].mxu0 %v670
      %v747 = vpop.f32.mrb[0].mxu0
      %v748 = vadd.f32 0.0, %v747
      %v749 = vpop.f32.mrb[0].mxu0
      %v750 = vpop.f32.mrb[0].mxu0
      %v751 = vadd.f32 0.0, %v750
      %v752 = vpop.f32.mrb[0].mxu0
      %753 = vmatprep.mubr.bf16.mxu0 0
      %754 = vmatmul.mubr.bf16.gmra.mrb[0].mxu0 %v673
      %v755 = vpop.f32.mrb[0].mxu0
      %v756 = vadd.f32 0.0, %v755
      %v757 = vpop.f32.mrb[0].mxu0
      %v758 = vpop.f32.mrb[0].mxu0
      %v759 = vadd.f32 0.0, %v758
      %v760 = vpop.f32.mrb[0].mxu0
      %761 = vmatprep.mubr.bf16.mxu0 0
      %762 = vmatmul.mubr.bf16.gmra.mrb[0].mxu0 %v676
      %v763 = vpop.f32.mrb[0].mxu0
      %v764 = vadd.f32 0.0, %v763
      %v765 = vpop.f32.mrb[0].mxu0
      %v766 = vpop.f32.mrb[0].mxu0
      %v767 = vadd.f32 0.0, %v766
      %v768 = vpop.f32.mrb[0].mxu0
      %769 = vmatprep.mubr.bf16.mxu0 0
      %770 = vmatmul.mubr.bf16.gmra.mrb[0].mxu0 %v679
      %v771 = vpop.f32.mrb[0].mxu0
      %v772 = vadd.f32 0.0, %v771
      %v773 = vpop.f32.mrb[0].mxu0
      %v774 = vpop.f32.mrb[0].mxu0
      %v775 = vadd.f32 0.0, %v774
      %v776 = vpop.f32.mrb[0].mxu0
      %777 = vdwg.mxu0
      %v778 = vld [vmem:[%s7] sm:$0x1]
      %v780 = vlaneseq
      %v781 = vshrl.u32 %v780, 7
      %v782 = vsub.s32 0, %v781
      %v783 = vrot.slane %v778, %v782
      %784 = vrot.lane.b32.xlu0 %v783, 32
      %v785 = vpop.permute.xlu0 %784
      %v787 = vadd.f32 %v716, %v785
      %v788 = vadd.f32 %v719, %v785
      %v789 = vadd.f32 %v724, %v785
      %v790 = vadd.f32 %v727, %v785
      %v791 = vadd.f32 %v732, %v785
      %v792 = vadd.f32 %v735, %v785
      %v793 = vadd.f32 %v740, %v785
      %v794 = vadd.f32 %v743, %v785
      %v795 = vadd.f32 %v748, %v785
      %v796 = vadd.f32 %v751, %v785
      %v797 = vadd.f32 %v756, %v785
      %v798 = vadd.f32 %v759, %v785
      %v799 = vadd.f32 %v764, %v785
      %v800 = vadd.f32 %v767, %v785
      %v801 = vadd.f32 %v772, %v785
      %v802 = vadd.f32 %v775, %v785
      %v803 = vld [vmem:[%s1] sm:$0xf]
      %v804 = vld [vmem:[%s1 + $0x4] sm:$0xf]
      %v805 = vld [vmem:[%s1 + $0x8] sm:$0xf]
      %v806 = vld [vmem:[%s1 + $0xc] sm:$0xf]
      %v807 = vld [vmem:[%s1 + $0x10] sm:$0xf]
      %v808 = vld [vmem:[%s1 + $0x14] sm:$0xf]
      %v809 = vld [vmem:[%s1 + $0x18] sm:$0xf]
      %v810 = vld [vmem:[%s1 + $0x1c] sm:$0xf]
      %v811 = vld [vmem:[%s1 + $0x20] sm:$0xf]
      %v812 = vld [vmem:[%s1 + $0x24] sm:$0xf]
      %v813 = vld [vmem:[%s1 + $0x28] sm:$0xf]
      %v814 = vld [vmem:[%s1 + $0x2c] sm:$0xf]
      %v815 = vld [vmem:[%s1 + $0x30] sm:$0xf]
      %v816 = vld [vmem:[%s1 + $0x34] sm:$0xf]
      %v817 = vld [vmem:[%s1 + $0x38] sm:$0xf]
      %v818 = vld [vmem:[%s1 + $0x3c] sm:$0xf]
      %v819 = vpack.c.bf16 %v788, %v787
      %v820 = vpack.c.bf16 %v790, %v789
      %v821 = vpack.c.bf16 %v792, %v791
      %v822 = vpack.c.bf16 %v794, %v793
      %v823 = vpack.c.bf16 %v796, %v795
      %v824 = vpack.c.bf16 %v798, %v797
      %v825 = vpack.c.bf16 %v800, %v799
      %v826 = vpack.c.bf16 %v802, %v801
      %s827 = scalar_lea.vmem %s1, 64
      %v828 = vld [vmem:[%s827] sm:$0xf]
      %v829 = vld [vmem:[%s827 + $0x4] sm:$0xf]
      %v830 = vld [vmem:[%s827 + $0x8] sm:$0xf]
      %v831 = vld [vmem:[%s827 + $0xc] sm:$0xf]
      %v832 = vld [vmem:[%s827 + $0x10] sm:$0xf]
      %v833 = vld [vmem:[%s827 + $0x14] sm:$0xf]
      %v834 = vld [vmem:[%s827 + $0x18] sm:$0xf]
      %v835 = vld [vmem:[%s827 + $0x1c] sm:$0xf]
      %v836 = vld [vmem:[%s827 + $0x20] sm:$0xf]
      %v837 = vld [vmem:[%s827 + $0x24] sm:$0xf]
      %v838 = vld [vmem:[%s827 + $0x28] sm:$0xf]
      %v839 = vld [vmem:[%s827 + $0x2c] sm:$0xf]
      %v840 = vld [vmem:[%s827 + $0x30] sm:$0xf]
      %v841 = vld [vmem:[%s827 + $0x34] sm:$0xf]
      %v842 = vld [vmem:[%s827 + $0x38] sm:$0xf]
      %v843 = vld [vmem:[%s827 + $0x3c] sm:$0xf]
      %v860 = vunpack.c.l.b16 %v828
      %v861 = vunpack.c.l.b16 %v829
      %v862 = vunpack.c.l.b16 %v830
      %v863 = vunpack.c.l.b16 %v831
      %v864 = vunpack.c.l.b16 %v832
      %v865 = vunpack.c.l.b16 %v833
      %v866 = vunpack.c.l.b16 %v834
      %v867 = vunpack.c.l.b16 %v835
      %v868 = vunpack.c.l.b16 %v836
      %v869 = vunpack.c.l.b16 %v837
      %v870 = vunpack.c.l.b16 %v838
      %v871 = vunpack.c.l.b16 %v839
      %v872 = vunpack.c.l.b16 %v840
      %v873 = vunpack.c.l.b16 %v841
      %v874 = vunpack.c.l.b16 %v842
      %v875 = vunpack.c.l.b16 %v843
      %v876 = vpack.c.b16 %v861, %v860
      %v877 = vpack.c.b16 %v863, %v862
      %v878 = vpack.c.b16 %v865, %v864
      %v879 = vpack.c.b16 %v867, %v866
      %v880 = vpack.c.b16 %v869, %v868
      %v881 = vpack.c.b16 %v871, %v870
      %v882 = vpack.c.b16 %v873, %v872
      %v883 = vpack.c.b16 %v875, %v874
      %900 = vrot.lane.b32.xlu0 %v819, 80
      %v901 = vpop.permute.xlu0 %900
      %902 = vrot.lane.b32.xlu0 %v820, 80
      %v903 = vpop.permute.xlu0 %902
      %904 = vrot.lane.b32.xlu0 %v821, 80
      %v905 = vpop.permute.xlu0 %904
      %906 = vrot.lane.b32.xlu0 %v822, 80
      %v907 = vpop.permute.xlu0 %906
      %908 = vrot.lane.b32.xlu0 %v823, 80
      %v909 = vpop.permute.xlu0 %908
      %910 = vrot.lane.b32.xlu0 %v824, 80
      %v911 = vpop.permute.xlu0 %910
      %912 = vrot.lane.b32.xlu0 %v825, 80
      %v913 = vpop.permute.xlu0 %912
      %914 = vrot.lane.b32.xlu0 %v826, 80
      %v915 = vpop.permute.xlu0 %914
      %924 = vmatprep.subr.bf16.mxu0 0
      %925 = vmatpush1.bf16.msra.mxu0 %v901
      %926 = vmatprep.subr.bf16.mxu0 0
      %927 = vmatpush1.bf16.msra.mxu0 %v903
      %928 = vmatprep.subr.bf16.mxu0 0
      %929 = vmatpush1.bf16.msra.mxu0 %v905
      %930 = vmatprep.subr.bf16.mxu0 0
      %931 = vmatpush1.bf16.msra.mxu0 %v907
      %932 = vmatprep.subr.bf16.mxu0 0
      %933 = vmatpush1.bf16.msra.mxu0 %v909
      %934 = vmatprep.subr.bf16.mxu0 0
      %935 = vmatpush1.bf16.msra.mxu0 %v911
      %936 = vmatprep.subr.bf16.mxu0 0
      %937 = vmatpush1.bf16.msra.mxu0 %v913
      %938 = vmatprep.subr.bf16.mxu0 0
      %939 = vmatpush1.bf16.msra.mxu0 %v915
      %940 = vmatprep.subr.bf16.mxu0 0
      %941 = vmatpush1.bf16.msra.mxu0 0
      %942 = vmatprep.subr.bf16.mxu0 0
      %943 = vmatpush1.bf16.msra.mxu0 0
      %944 = vmatprep.subr.bf16.mxu0 0
      %945 = vmatpush1.bf16.msra.mxu0 0
      %946 = vmatprep.subr.bf16.mxu0 0
      %947 = vmatpush1.bf16.msra.mxu0 0
      %948 = vmatprep.subr.bf16.mxu0 0
      %949 = vmatpush1.bf16.msra.mxu0 0
      %950 = vmatprep.subr.bf16.mxu0 0
      %951 = vmatpush1.bf16.msra.mxu0 0
      %952 = vmatprep.subr.bf16.mxu0 0
      %953 = vmatpush1.bf16.msra.mxu0 0
      %954 = vmatprep.subr.bf16.mxu0 0
      %955 = vmatpush1.bf16.msra.mxu0 0
      %956 = vmatprep.mubr.bf16.mxu0 0
      %957 = vmatmul.mubr.bf16.gmra.mrb[0].mxu0 %v876
      %v958 = vpop.f32.mrb[0].mxu0
      %v959 = vadd.f32 0.0, %v958
      %v960 = vpop.f32.mrb[0].mxu0
      %v961 = vpop.f32.mrb[0].mxu0
      %v962 = vadd.f32 0.0, %v961
      %v963 = vpop.f32.mrb[0].mxu0
      %964 = vmatprep.mubr.bf16.mxu0 0
      %965 = vmatmul.mubr.bf16.gmra.mrb[0].mxu0 %v877
      %v966 = vpop.f32.mrb[0].mxu0
      %v967 = vadd.f32 0.0, %v966
      %v968 = vpop.f32.mrb[0].mxu0
      %v969 = vpop.f32.mrb[0].mxu0
      %v970 = vadd.f32 0.0, %v969
      %v971 = vpop.f32.mrb[0].mxu0
      %972 = vmatprep.mubr.bf16.mxu0 0
      %973 = vmatmul.mubr.bf16.gmra.mrb[0].mxu0 %v878
      %v974 = vpop.f32.mrb[0].mxu0
      %v975 = vadd.f32 0.0, %v974
      %v976 = vpop.f32.mrb[0].mxu0
      %v977 = vpop.f32.mrb[0].mxu0
      %v978 = vadd.f32 0.0, %v977
      %v979 = vpop.f32.mrb[0].mxu0
      %980 = vmatprep.mubr.bf16.mxu0 0
      %981 = vmatmul.mubr.bf16.gmra.mrb[0].mxu0 %v879
      %v982 = vpop.f32.mrb[0].mxu0
      %v983 = vadd.f32 0.0, %v982
      %v984 = vpop.f32.mrb[0].mxu0
      %v985 = vpop.f32.mrb[0].mxu0
      %v986 = vadd.f32 0.0, %v985
      %v987 = vpop.f32.mrb[0].mxu0
      %988 = vmatprep.mubr.bf16.mxu0 0
      %989 = vmatmul.mubr.bf16.gmra.mrb[0].mxu0 %v880
      %v990 = vpop.f32.mrb[0].mxu0
      %v991 = vadd.f32 0.0, %v990
      %v992 = vpop.f32.mrb[0].mxu0
      %v993 = vpop.f32.mrb[0].mxu0
      %v994 = vadd.f32 0.0, %v993
      %v995 = vpop.f32.mrb[0].mxu0
      %996 = vmatprep.mubr.bf16.mxu0 0
      %997 = vmatmul.mubr.bf16.gmra.mrb[0].mxu0 %v881
      %v998 = vpop.f32.mrb[0].mxu0
      %v999 = vadd.f32 0.0, %v998
      %v1000 = vpop.f32.mrb[0].mxu0
      %v1001 = vpop.f32.mrb[0].mxu0
      %v1002 = vadd.f32 0.0, %v1001
      %v1003 = vpop.f32.mrb[0].mxu0
      %1004 = vmatprep.mubr.bf16.mxu0 0
      %1005 = vmatmul.mubr.bf16.gmra.mrb[0].mxu0 %v882
      %v1006 = vpop.f32.mrb[0].mxu0
      %v1007 = vadd.f32 0.0, %v1006
      %v1008 = vpop.f32.mrb[0].mxu0
      %v1009 = vpop.f32.mrb[0].mxu0
      %v1010 = vadd.f32 0.0, %v1009
      %v1011 = vpop.f32.mrb[0].mxu0
      %1012 = vmatprep.mubr.bf16.mxu0 0
      %1013 = vmatmul.mubr.bf16.gmra.mrb[0].mxu0 %v883
      %v1014 = vpop.f32.mrb[0].mxu0
      %v1015 = vadd.f32 0.0, %v1014
      %v1016 = vpop.f32.mrb[0].mxu0
      %v1017 = vpop.f32.mrb[0].mxu0
      %v1018 = vadd.f32 0.0, %v1017
      %v1019 = vpop.f32.mrb[0].mxu0
      %1020 = vdwg.mxu0
      %v1037 = vunpack.c.l.b16 %v803
      %v1038 = vunpack.c.l.b16 %v804
      %v1039 = vunpack.c.l.b16 %v805
      %v1040 = vunpack.c.l.b16 %v806
      %v1041 = vunpack.c.l.b16 %v807
      %v1042 = vunpack.c.l.b16 %v808
      %v1043 = vunpack.c.l.b16 %v809
      %v1044 = vunpack.c.l.b16 %v810
      %v1045 = vunpack.c.l.b16 %v811
      %v1046 = vunpack.c.l.b16 %v812
      %v1047 = vunpack.c.l.b16 %v813
      %v1048 = vunpack.c.l.b16 %v814
      %v1049 = vunpack.c.l.b16 %v815
      %v1050 = vunpack.c.l.b16 %v816
      %v1051 = vunpack.c.l.b16 %v817
      %v1052 = vunpack.c.l.b16 %v818
      %v1053 = vpack.c.b16 %v1038, %v1037
      %v1054 = vpack.c.b16 %v1040, %v1039
      %v1055 = vpack.c.b16 %v1042, %v1041
      %v1056 = vpack.c.b16 %v1044, %v1043
      %v1057 = vpack.c.b16 %v1046, %v1045
      %v1058 = vpack.c.b16 %v1048, %v1047
      %v1059 = vpack.c.b16 %v1050, %v1049
      %v1060 = vpack.c.b16 %v1052, %v1051
      %1069 = vrot.lane.b32.xlu0 %v819, 96
      %v1070 = vpop.permute.xlu0 %1069
      %1071 = vrot.lane.b32.xlu0 %v820, 96
      %v1072 = vpop.permute.xlu0 %1071
      %1073 = vrot.lane.b32.xlu0 %v821, 96
      %v1074 = vpop.permute.xlu0 %1073
      %1075 = vrot.lane.b32.xlu0 %v822, 96
      %v1076 = vpop.permute.xlu0 %1075
      %1077 = vrot.lane.b32.xlu0 %v823, 96
      %v1078 = vpop.permute.xlu0 %1077
      %1079 = vrot.lane.b32.xlu0 %v824, 96
      %v1080 = vpop.permute.xlu0 %1079
      %1081 = vrot.lane.b32.xlu0 %v825, 96
      %v1082 = vpop.permute.xlu0 %1081
      %1083 = vrot.lane.b32.xlu0 %v826, 96
      %v1084 = vpop.permute.xlu0 %1083
      %1093 = vmatprep.subr.bf16.mxu0 0
      %1094 = vmatpush1.bf16.msra.mxu0 %v1070
      %1095 = vmatprep.subr.bf16.mxu0 0
      %1096 = vmatpush1.bf16.msra.mxu0 %v1072
      %1097 = vmatprep.subr.bf16.mxu0 0
      %1098 = vmatpush1.bf16.msra.mxu0 %v1074
      %1099 = vmatprep.subr.bf16.mxu0 0
      %1100 = vmatpush1.bf16.msra.mxu0 %v1076
      %1101 = vmatprep.subr.bf16.mxu0 0
      %1102 = vmatpush1.bf16.msra.mxu0 %v1078
      %1103 = vmatprep.subr.bf16.mxu0 0
      %1104 = vmatpush1.bf16.msra.mxu0 %v1080
      %1105 = vmatprep.subr.bf16.mxu0 0
      %1106 = vmatpush1.bf16.msra.mxu0 %v1082
      %1107 = vmatprep.subr.bf16.mxu0 0
      %1108 = vmatpush1.bf16.msra.mxu0 %v1084
      %1109 = vmatprep.subr.bf16.mxu0 0
      %1110 = vmatpush1.bf16.msra.mxu0 0
      %1111 = vmatprep.subr.bf16.mxu0 0
      %1112 = vmatpush1.bf16.msra.mxu0 0
      %1113 = vmatprep.subr.bf16.mxu0 0
      %1114 = vmatpush1.bf16.msra.mxu0 0
      %1115 = vmatprep.subr.bf16.mxu0 0
      %1116 = vmatpush1.bf16.msra.mxu0 0
      %1117 = vmatprep.subr.bf16.mxu0 0
      %1118 = vmatpush1.bf16.msra.mxu0 0
      %1119 = vmatprep.subr.bf16.mxu0 0
      %1120 = vmatpush1.bf16.msra.mxu0 0
      %1121 = vmatprep.subr.bf16.mxu0 0
      %1122 = vmatpush1.bf16.msra.mxu0 0
      %1123 = vmatprep.subr.bf16.mxu0 0
      %1124 = vmatpush1.bf16.msra.mxu0 0
      %1125 = vmatprep.mubr.bf16.mxu0 0
      %1126 = vmatmul.mubr.bf16.gmra.mrb[0].mxu0 %v1053
      %v1127 = vpop.f32.mrb[0].mxu0
      %v1128 = vadd.f32 %v959, %v1127
      %v1129 = vpop.f32.mrb[0].mxu0
      %v1130 = vpop.f32.mrb[0].mxu0
      %v1131 = vadd.f32 %v962, %v1130
      %v1132 = vpop.f32.mrb[0].mxu0
      %1133 = vmatprep.mubr.bf16.mxu0 0
      %1134 = vmatmul.mubr.bf16.gmra.mrb[0].mxu0 %v1054
      %v1135 = vpop.f32.mrb[0].mxu0
      %v1136 = vadd.f32 %v967, %v1135
      %v1137 = vpop.f32.mrb[0].mxu0
      %v1138 = vpop.f32.mrb[0].mxu0
      %v1139 = vadd.f32 %v970, %v1138
      %v1140 = vpop.f32.mrb[0].mxu0
      %1141 = vmatprep.mubr.bf16.mxu0 0
      %1142 = vmatmul.mubr.bf16.gmra.mrb[0].mxu0 %v1055
      %v1143 = vpop.f32.mrb[0].mxu0
      %v1144 = vadd.f32 %v975, %v1143
      %v1145 = vpop.f32.mrb[0].mxu0
      %v1146 = vpop.f32.mrb[0].mxu0
      %v1147 = vadd.f32 %v978, %v1146
      %v1148 = vpop.f32.mrb[0].mxu0
      %1149 = vmatprep.mubr.bf16.mxu0 0
      %1150 = vmatmul.mubr.bf16.gmra.mrb[0].mxu0 %v1056
      %v1151 = vpop.f32.mrb[0].mxu0
      %v1152 = vadd.f32 %v983, %v1151
      %v1153 = vpop.f32.mrb[0].mxu0
      %v1154 = vpop.f32.mrb[0].mxu0
      %v1155 = vadd.f32 %v986, %v1154
      %v1156 = vpop.f32.mrb[0].mxu0
      %1157 = vmatprep.mubr.bf16.mxu0 0
      %1158 = vmatmul.mubr.bf16.gmra.mrb[0].mxu0 %v1057
      %v1159 = vpop.f32.mrb[0].mxu0
      %v1160 = vadd.f32 %v991, %v1159
      %v1161 = vpop.f32.mrb[0].mxu0
      %v1162 = vpop.f32.mrb[0].mxu0
      %v1163 = vadd.f32 %v994, %v1162
      %v1164 = vpop.f32.mrb[0].mxu0
      %1165 = vmatprep.mubr.bf16.mxu0 0
      %1166 = vmatmul.mubr.bf16.gmra.mrb[0].mxu0 %v1058
      %v1167 = vpop.f32.mrb[0].mxu0
      %v1168 = vadd.f32 %v999, %v1167
      %v1169 = vpop.f32.mrb[0].mxu0
      %v1170 = vpop.f32.mrb[0].mxu0
      %v1171 = vadd.f32 %v1002, %v1170
      %v1172 = vpop.f32.mrb[0].mxu0
      %1173 = vmatprep.mubr.bf16.mxu0 0
      %1174 = vmatmul.mubr.bf16.gmra.mrb[0].mxu0 %v1059
      %v1175 = vpop.f32.mrb[0].mxu0
      %v1176 = vadd.f32 %v1007, %v1175
      %v1177 = vpop.f32.mrb[0].mxu0
      %v1178 = vpop.f32.mrb[0].mxu0
      %v1179 = vadd.f32 %v1010, %v1178
      %v1180 = vpop.f32.mrb[0].mxu0
      %1181 = vmatprep.mubr.bf16.mxu0 0
      %1182 = vmatmul.mubr.bf16.gmra.mrb[0].mxu0 %v1060
      %v1183 = vpop.f32.mrb[0].mxu0
      %v1184 = vadd.f32 %v1015, %v1183
      %v1185 = vpop.f32.mrb[0].mxu0
      %v1186 = vpop.f32.mrb[0].mxu0
      %v1187 = vadd.f32 %v1018, %v1186
      %v1188 = vpop.f32.mrb[0].mxu0
      %1189 = vdwg.mxu0
      %s1190 = scalar_lea.vmem %s1, 128
      %v1191 = vld [vmem:[%s1190] sm:$0xf]
      %v1192 = vld [vmem:[%s1190 + $0x4] sm:$0xf]
      %v1193 = vld [vmem:[%s1190 + $0x8] sm:$0xf]
      %v1194 = vld [vmem:[%s1190 + $0xc] sm:$0xf]
      %v1195 = vld [vmem:[%s1190 + $0x10] sm:$0xf]
      %v1196 = vld [vmem:[%s1190 + $0x14] sm:$0xf]
      %v1197 = vld [vmem:[%s1190 + $0x18] sm:$0xf]
      %v1198 = vld [vmem:[%s1190 + $0x1c] sm:$0xf]
      %v1199 = vld [vmem:[%s1190 + $0x20] sm:$0xf]
      %v1200 = vld [vmem:[%s1190 + $0x24] sm:$0xf]
      %v1201 = vld [vmem:[%s1190 + $0x28] sm:$0xf]
      %v1202 = vld [vmem:[%s1190 + $0x2c] sm:$0xf]
      %v1203 = vld [vmem:[%s1190 + $0x30] sm:$0xf]
      %v1204 = vld [vmem:[%s1190 + $0x34] sm:$0xf]
      %v1205 = vld [vmem:[%s1190 + $0x38] sm:$0xf]
      %v1206 = vld [vmem:[%s1190 + $0x3c] sm:$0xf]
      %v1223 = vunpack.c.l.b16 %v1191
      %v1224 = vunpack.c.l.b16 %v1192
      %v1225 = vunpack.c.l.b16 %v1193
      %v1226 = vunpack.c.l.b16 %v1194
      %v1227 = vunpack.c.l.b16 %v1195
      %v1228 = vunpack.c.l.b16 %v1196
      %v1229 = vunpack.c.l.b16 %v1197
      %v1230 = vunpack.c.l.b16 %v1198
      %v1231 = vunpack.c.l.b16 %v1199
      %v1232 = vunpack.c.l.b16 %v1200
      %v1233 = vunpack.c.l.b16 %v1201
      %v1234 = vunpack.c.l.b16 %v1202
      %v1235 = vunpack.c.l.b16 %v1203
      %v1236 = vunpack.c.l.b16 %v1204
      %v1237 = vunpack.c.l.b16 %v1205
      %v1238 = vunpack.c.l.b16 %v1206
      %v1239 = vpack.c.b16 %v1224, %v1223
      %v1240 = vpack.c.b16 %v1226, %v1225
      %v1241 = vpack.c.b16 %v1228, %v1227
      %v1242 = vpack.c.b16 %v1230, %v1229
      %v1243 = vpack.c.b16 %v1232, %v1231
      %v1244 = vpack.c.b16 %v1234, %v1233
      %v1245 = vpack.c.b16 %v1236, %v1235
      %v1246 = vpack.c.b16 %v1238, %v1237
      %1255 = vrot.lane.b32.xlu0 %v819, 64
      %v1256 = vpop.permute.xlu0 %1255
      %1257 = vrot.lane.b32.xlu0 %v820, 64
      %v1258 = vpop.permute.xlu0 %1257
      %1259 = vrot.lane.b32.xlu0 %v821, 64
      %v1260 = vpop.permute.xlu0 %1259
      %1261 = vrot.lane.b32.xlu0 %v822, 64
      %v1262 = vpop.permute.xlu0 %1261
      %1263 = vrot.lane.b32.xlu0 %v823, 64
      %v1264 = vpop.permute.xlu0 %1263
      %1265 = vrot.lane.b32.xlu0 %v824, 64
      %v1266 = vpop.permute.xlu0 %1265
      %1267 = vrot.lane.b32.xlu0 %v825, 64
      %v1268 = vpop.permute.xlu0 %1267
      %1269 = vrot.lane.b32.xlu0 %v826, 64
      %v1270 = vpop.permute.xlu0 %1269
      %1279 = vmatprep.subr.bf16.mxu0 0
      %1280 = vmatpush1.bf16.msra.mxu0 %v1256
      %1281 = vmatprep.subr.bf16.mxu0 0
      %1282 = vmatpush1.bf16.msra.mxu0 %v1258
      %1283 = vmatprep.subr.bf16.mxu0 0
      %1284 = vmatpush1.bf16.msra.mxu0 %v1260
      %1285 = vmatprep.subr.bf16.mxu0 0
      %1286 = vmatpush1.bf16.msra.mxu0 %v1262
      %1287 = vmatprep.subr.bf16.mxu0 0
      %1288 = vmatpush1.bf16.msra.mxu0 %v1264
      %1289 = vmatprep.subr.bf16.mxu0 0
      %1290 = vmatpush1.bf16.msra.mxu0 %v1266
      %1291 = vmatprep.subr.bf16.mxu0 0
      %1292 = vmatpush1.bf16.msra.mxu0 %v1268
      %1293 = vmatprep.subr.bf16.mxu0 0
      %1294 = vmatpush1.bf16.msra.mxu0 %v1270
      %1295 = vmatprep.subr.bf16.mxu0 0
      %1296 = vmatpush1.bf16.msra.mxu0 0
      %1297 = vmatprep.subr.bf16.mxu0 0
      %1298 = vmatpush1.bf16.msra.mxu0 0
      %1299 = vmatprep.subr.bf16.mxu0 0
      %1300 = vmatpush1.bf16.msra.mxu0 0
      %1301 = vmatprep.subr.bf16.mxu0 0
      %1302 = vmatpush1.bf16.msra.mxu0 0
      %1303 = vmatprep.subr.bf16.mxu0 0
      %1304 = vmatpush1.bf16.msra.mxu0 0
      %1305 = vmatprep.subr.bf16.mxu0 0
      %1306 = vmatpush1.bf16.msra.mxu0 0
      %1307 = vmatprep.subr.bf16.mxu0 0
      %1308 = vmatpush1.bf16.msra.mxu0 0
      %1309 = vmatprep.subr.bf16.mxu0 0
      %1310 = vmatpush1.bf16.msra.mxu0 0
      %1311 = vmatprep.mubr.bf16.mxu0 0
      %1312 = vmatmul.mubr.bf16.gmra.mrb[0].mxu0 %v1239
      %v1313 = vpop.f32.mrb[0].mxu0
      %v1314 = vadd.f32 0.0, %v1313
      %v1315 = vpop.f32.mrb[0].mxu0
      %v1316 = vpop.f32.mrb[0].mxu0
      %v1317 = vadd.f32 0.0, %v1316
      %v1318 = vpop.f32.mrb[0].mxu0
      %1319 = vmatprep.mubr.bf16.mxu0 0
      %1320 = vmatmul.mubr.bf16.gmra.mrb[0].mxu0 %v1240
      %v1321 = vpop.f32.mrb[0].mxu0
      %v1322 = vadd.f32 0.0, %v1321
      %v1323 = vpop.f32.mrb[0].mxu0
      %v1324 = vpop.f32.mrb[0].mxu0
      %v1325 = vadd.f32 0.0, %v1324
      %v1326 = vpop.f32.mrb[0].mxu0
      %1327 = vmatprep.mubr.bf16.mxu0 0
      %1328 = vmatmul.mubr.bf16.gmra.mrb[0].mxu0 %v1241
      %v1329 = vpop.f32.mrb[0].mxu0
      %v1330 = vadd.f32 0.0, %v1329
      %v1331 = vpop.f32.mrb[0].mxu0
      %v1332 = vpop.f32.mrb[0].mxu0
      %v1333 = vadd.f32 0.0, %v1332
      %v1334 = vpop.f32.mrb[0].mxu0
      %1335 = vmatprep.mubr.bf16.mxu0 0
      %1336 = vmatmul.mubr.bf16.gmra.mrb[0].mxu0 %v1242
      %v1337 = vpop.f32.mrb[0].mxu0
      %v1338 = vadd.f32 0.0, %v1337
      %v1339 = vpop.f32.mrb[0].mxu0
      %v1340 = vpop.f32.mrb[0].mxu0
      %v1341 = vadd.f32 0.0, %v1340
      %v1342 = vpop.f32.mrb[0].mxu0
      %1343 = vmatprep.mubr.bf16.mxu0 0
      %1344 = vmatmul.mubr.bf16.gmra.mrb[0].mxu0 %v1243
      %v1345 = vpop.f32.mrb[0].mxu0
      %v1346 = vadd.f32 0.0, %v1345
      %v1347 = vpop.f32.mrb[0].mxu0
      %v1348 = vpop.f32.mrb[0].mxu0
      %v1349 = vadd.f32 0.0, %v1348
      %v1350 = vpop.f32.mrb[0].mxu0
      %1351 = vmatprep.mubr.bf16.mxu0 0
      %1352 = vmatmul.mubr.bf16.gmra.mrb[0].mxu0 %v1244
      %v1353 = vpop.f32.mrb[0].mxu0
      %v1354 = vadd.f32 0.0, %v1353
      %v1355 = vpop.f32.mrb[0].mxu0
      %v1356 = vpop.f32.mrb[0].mxu0
      %v1357 = vadd.f32 0.0, %v1356
      %v1358 = vpop.f32.mrb[0].mxu0
      %1359 = vmatprep.mubr.bf16.mxu0 0
      %1360 = vmatmul.mubr.bf16.gmra.mrb[0].mxu0 %v1245
      %v1361 = vpop.f32.mrb[0].mxu0
      %v1362 = vadd.f32 0.0, %v1361
      %v1363 = vpop.f32.mrb[0].mxu0
      %v1364 = vpop.f32.mrb[0].mxu0
      %v1365 = vadd.f32 0.0, %v1364
      %v1366 = vpop.f32.mrb[0].mxu0
      %1367 = vmatprep.mubr.bf16.mxu0 0
      %1368 = vmatmul.mubr.bf16.gmra.mrb[0].mxu0 %v1246
      %v1369 = vpop.f32.mrb[0].mxu0
      %v1370 = vadd.f32 0.0, %v1369
      %v1371 = vpop.f32.mrb[0].mxu0
      %v1372 = vpop.f32.mrb[0].mxu0
      %v1373 = vadd.f32 0.0, %v1372
      %v1374 = vpop.f32.mrb[0].mxu0
      %1375 = vdwg.mxu0
      %v1376 = vadd.f32 %v1128, %v1314
      %v1377 = vadd.f32 %v1131, %v1317
      %v1378 = vadd.f32 %v1136, %v1322
      %v1379 = vadd.f32 %v1139, %v1325
      %v1380 = vadd.f32 %v1144, %v1330
      %v1381 = vadd.f32 %v1147, %v1333
      %v1382 = vadd.f32 %v1152, %v1338
      %v1383 = vadd.f32 %v1155, %v1341
      %v1384 = vadd.f32 %v1160, %v1346
      %v1385 = vadd.f32 %v1163, %v1349
      %v1386 = vadd.f32 %v1168, %v1354
      %v1387 = vadd.f32 %v1171, %v1357
      %v1388 = vadd.f32 %v1176, %v1362
      %v1389 = vadd.f32 %v1179, %v1365
      %v1390 = vadd.f32 %v1184, %v1370
      %v1391 = vadd.f32 %v1187, %v1373
      %v1392 = vsel %vm656, %v624, 0.0
      %1393 = vadd.xlane.f32.xlu0 %v1392
      %v1394 = vpop.xlane.xlu0 %1393
      %v1395 = vsel %vm656, %v625, 0.0
      %1396 = vadd.xlane.f32.xlu0 %v1395
      %v1397 = vpop.xlane.xlu0 %1396
      %v1398 = vsel %vm656, %v626, 0.0
      %1399 = vadd.xlane.f32.xlu0 %v1398
      %v1400 = vpop.xlane.xlu0 %1399
      %v1401 = vsel %vm656, %v627, 0.0
      %1402 = vadd.xlane.f32.xlu0 %v1401
      %v1403 = vpop.xlane.xlu0 %1402
      %v1404 = vsel %vm656, %v628, 0.0
      %1405 = vadd.xlane.f32.xlu0 %v1404
      %v1406 = vpop.xlane.xlu0 %1405
      %v1407 = vsel %vm656, %v629, 0.0
      %1408 = vadd.xlane.f32.xlu0 %v1407
      %v1409 = vpop.xlane.xlu0 %1408
      %v1410 = vsel %vm656, %v630, 0.0
      %1411 = vadd.xlane.f32.xlu0 %v1410
      %v1412 = vpop.xlane.xlu0 %1411
      %v1413 = vsel %vm656, %v631, 0.0
      %1414 = vadd.xlane.f32.xlu0 %v1413
      %v1415 = vpop.xlane.xlu0 %1414
      %v1416 = vsel %vm656, %v632, 0.0
      %1417 = vadd.xlane.f32.xlu0 %v1416
      %v1418 = vpop.xlane.xlu0 %1417
      %v1419 = vsel %vm656, %v633, 0.0
      %1420 = vadd.xlane.f32.xlu0 %v1419
      %v1421 = vpop.xlane.xlu0 %1420
      %v1422 = vsel %vm656, %v634, 0.0
      %1423 = vadd.xlane.f32.xlu0 %v1422
      %v1424 = vpop.xlane.xlu0 %1423
      %v1425 = vsel %vm656, %v635, 0.0
      %1426 = vadd.xlane.f32.xlu0 %v1425
      %v1427 = vpop.xlane.xlu0 %1426
      %v1428 = vsel %vm656, %v636, 0.0
      %1429 = vadd.xlane.f32.xlu0 %v1428
      %v1430 = vpop.xlane.xlu0 %1429
      %v1431 = vsel %vm656, %v637, 0.0
      %1432 = vadd.xlane.f32.xlu0 %v1431
      %v1433 = vpop.xlane.xlu0 %1432
      %v1434 = vsel %vm656, %v638, 0.0
      %1435 = vadd.xlane.f32.xlu0 %v1434
      %v1436 = vpop.xlane.xlu0 %1435
      %v1437 = vsel %vm656, %v639, 0.0
      %1438 = vadd.xlane.f32.xlu0 %v1437
      %v1439 = vpop.xlane.xlu0 %1438
      %v1440 = vrcp.pop 16.0
      %v1441 = vmul.f32 %v1394, %v1440
      %v1442 = vmul.f32 %v1397, %v1440
      %v1443 = vmul.f32 %v1400, %v1440
      %v1444 = vmul.f32 %v1403, %v1440
      %v1445 = vmul.f32 %v1406, %v1440
      %v1446 = vmul.f32 %v1409, %v1440
      %v1447 = vmul.f32 %v1412, %v1440
      %v1448 = vmul.f32 %v1415, %v1440
      %v1449 = vmul.f32 %v1418, %v1440
      %v1450 = vmul.f32 %v1421, %v1440
      %v1451 = vmul.f32 %v1424, %v1440
      %v1452 = vmul.f32 %v1427, %v1440
      %v1453 = vmul.f32 %v1430, %v1440
      %v1454 = vmul.f32 %v1433, %v1440
      %v1455 = vmul.f32 %v1436, %v1440
      %v1456 = vmul.f32 %v1439, %v1440
      %v1457 = vsub.f32 %v624, %v1441
      %v1458 = vsub.f32 %v625, %v1442
      %v1459 = vsub.f32 %v626, %v1443
      %v1460 = vsub.f32 %v627, %v1444
      %v1461 = vsub.f32 %v628, %v1445
      %v1462 = vsub.f32 %v629, %v1446
      %v1463 = vsub.f32 %v630, %v1447
      %v1464 = vsub.f32 %v631, %v1448
      %v1465 = vsub.f32 %v632, %v1449
      %v1466 = vsub.f32 %v633, %v1450
      %v1467 = vsub.f32 %v634, %v1451
      %v1468 = vsub.f32 %v635, %v1452
      %v1469 = vsub.f32 %v636, %v1453
      %v1470 = vsub.f32 %v637, %v1454
      %v1471 = vsub.f32 %v638, %v1455
      %v1472 = vsub.f32 %v639, %v1456
      %v1473 = vmul.f32 %v1457, %v1457
      %v1474 = vmul.f32 %v1458, %v1458
      %v1475 = vmul.f32 %v1459, %v1459
      %v1476 = vmul.f32 %v1460, %v1460
      %v1477 = vmul.f32 %v1461, %v1461
      %v1478 = vmul.f32 %v1462, %v1462
      %v1479 = vmul.f32 %v1463, %v1463
      %v1480 = vmul.f32 %v1464, %v1464
      %v1481 = vmul.f32 %v1465, %v1465
      %v1482 = vmul.f32 %v1466, %v1466
      %v1483 = vmul.f32 %v1467, %v1467
      %v1484 = vmul.f32 %v1468, %v1468
      %v1485 = vmul.f32 %v1469, %v1469
      %v1486 = vmul.f32 %v1470, %v1470
      %v1487 = vmul.f32 %v1471, %v1471
      %v1488 = vmul.f32 %v1472, %v1472
      %v1489 = vsel %vm656, %v1473, 0.0
      %1490 = vadd.xlane.f32.xlu0 %v1489
      %v1491 = vpop.xlane.xlu0 %1490
      %v1492 = vsel %vm656, %v1474, 0.0
      %1493 = vadd.xlane.f32.xlu0 %v1492
      %v1494 = vpop.xlane.xlu0 %1493
      %v1495 = vsel %vm656, %v1475, 0.0
      %1496 = vadd.xlane.f32.xlu0 %v1495
      %v1497 = vpop.xlane.xlu0 %1496
      %v1498 = vsel %vm656, %v1476, 0.0
      %1499 = vadd.xlane.f32.xlu0 %v1498
      %v1500 = vpop.xlane.xlu0 %1499
      %v1501 = vsel %vm656, %v1477, 0.0
      %1502 = vadd.xlane.f32.xlu0 %v1501
      %v1503 = vpop.xlane.xlu0 %1502
      %v1504 = vsel %vm656, %v1478, 0.0
      %1505 = vadd.xlane.f32.xlu0 %v1504
      %v1506 = vpop.xlane.xlu0 %1505
      %v1507 = vsel %vm656, %v1479, 0.0
      %1508 = vadd.xlane.f32.xlu0 %v1507
      %v1509 = vpop.xlane.xlu0 %1508
      %v1510 = vsel %vm656, %v1480, 0.0
      %1511 = vadd.xlane.f32.xlu0 %v1510
      %v1512 = vpop.xlane.xlu0 %1511
      %v1513 = vsel %vm656, %v1481, 0.0
      %1514 = vadd.xlane.f32.xlu0 %v1513
      %v1515 = vpop.xlane.xlu0 %1514
      %v1516 = vsel %vm656, %v1482, 0.0
      %1517 = vadd.xlane.f32.xlu0 %v1516
      %v1518 = vpop.xlane.xlu0 %1517
      %v1519 = vsel %vm656, %v1483, 0.0
      %1520 = vadd.xlane.f32.xlu0 %v1519
      %v1521 = vpop.xlane.xlu0 %1520
      %v1522 = vsel %vm656, %v1484, 0.0
      %1523 = vadd.xlane.f32.xlu0 %v1522
      %v1524 = vpop.xlane.xlu0 %1523
      %v1525 = vsel %vm656, %v1485, 0.0
      %1526 = vadd.xlane.f32.xlu0 %v1525
      %v1527 = vpop.xlane.xlu0 %1526
      %v1528 = vsel %vm656, %v1486, 0.0
      %1529 = vadd.xlane.f32.xlu0 %v1528
      %v1530 = vpop.xlane.xlu0 %1529
      %v1531 = vsel %vm656, %v1487, 0.0
      %1532 = vadd.xlane.f32.xlu0 %v1531
      %v1533 = vpop.xlane.xlu0 %1532
      %v1534 = vsel %vm656, %v1488, 0.0
      %1535 = vadd.xlane.f32.xlu0 %v1534
      %v1536 = vpop.xlane.xlu0 %1535
      %v1537 = vmul.f32 %v1491, %v1440
      %v1538 = vmul.f32 %v1494, %v1440
      %v1539 = vmul.f32 %v1497, %v1440
      %v1540 = vmul.f32 %v1500, %v1440
      %v1541 = vmul.f32 %v1503, %v1440
      %v1542 = vmul.f32 %v1506, %v1440
      %v1543 = vmul.f32 %v1509, %v1440
      %v1544 = vmul.f32 %v1512, %v1440
      %v1545 = vmul.f32 %v1515, %v1440
      %v1546 = vmul.f32 %v1518, %v1440
      %v1547 = vmul.f32 %v1521, %v1440
      %v1548 = vmul.f32 %v1524, %v1440
      %v1549 = vmul.f32 %v1527, %v1440
      %v1550 = vmul.f32 %v1530, %v1440
      %v1551 = vmul.f32 %v1533, %v1440
      %v1552 = vmul.f32 %v1536, %v1440
      %v1553 = vadd.f32 %v1537, 1e-06
      %v1554 = vadd.f32 %v1538, 1e-06
      %v1555 = vadd.f32 %v1539, 1e-06
      %v1556 = vadd.f32 %v1540, 1e-06
      %v1557 = vadd.f32 %v1541, 1e-06
      %v1558 = vadd.f32 %v1542, 1e-06
      %v1559 = vadd.f32 %v1543, 1e-06
      %v1560 = vadd.f32 %v1544, 1e-06
      %v1561 = vadd.f32 %v1545, 1e-06
      %v1562 = vadd.f32 %v1546, 1e-06
      %v1563 = vadd.f32 %v1547, 1e-06
      %v1564 = vadd.f32 %v1548, 1e-06
      %v1565 = vadd.f32 %v1549, 1e-06
      %v1566 = vadd.f32 %v1550, 1e-06
      %v1567 = vadd.f32 %v1551, 1e-06
      %v1568 = vadd.f32 %v1552, 1e-06
      %v1569 = vrsqrt.pop %v1553
      %v1570 = vrsqrt.pop %v1554
      %v1571 = vrsqrt.pop %v1555
      %v1572 = vrsqrt.pop %v1556
      %v1573 = vrsqrt.pop %v1557
      %v1574 = vrsqrt.pop %v1558
      %v1575 = vrsqrt.pop %v1559
      %v1576 = vrsqrt.pop %v1560
      %v1577 = vrsqrt.pop %v1561
      %v1578 = vrsqrt.pop %v1562
      %v1579 = vrsqrt.pop %v1563
      %v1580 = vrsqrt.pop %v1564
      %v1581 = vrsqrt.pop %v1565
      %v1582 = vrsqrt.pop %v1566
      %v1583 = vrsqrt.pop %v1567
      %v1584 = vrsqrt.pop %v1568
      %v1585 = vmul.f32 %v1457, %v1569
      %v1586 = vmul.f32 %v1458, %v1570
      %v1587 = vmul.f32 %v1459, %v1571
      %v1588 = vmul.f32 %v1460, %v1572
      %v1589 = vmul.f32 %v1461, %v1573
      %v1590 = vmul.f32 %v1462, %v1574
      %v1591 = vmul.f32 %v1463, %v1575
      %v1592 = vmul.f32 %v1464, %v1576
      %v1593 = vmul.f32 %v1465, %v1577
      %v1594 = vmul.f32 %v1466, %v1578
      %v1595 = vmul.f32 %v1467, %v1579
      %v1596 = vmul.f32 %v1468, %v1580
      %v1597 = vmul.f32 %v1469, %v1581
      %v1598 = vmul.f32 %v1470, %v1582
      %v1599 = vmul.f32 %v1471, %v1583
      %v1600 = vmul.f32 %v1472, %v1584
      %v1601 = vld [vmem:[%s8] sm:$0x1]
      %v1603 = vlaneseq
      %v1604 = vshrl.u32 %v1603, 7
      %v1605 = vsub.s32 0, %v1604
      %v1606 = vrot.slane %v1601, %v1605
      %v1608 = vmul.f32 %v1585, %v1606
      %v1609 = vmul.f32 %v1586, %v1606
      %v1610 = vmul.f32 %v1587, %v1606
      %v1611 = vmul.f32 %v1588, %v1606
      %v1612 = vmul.f32 %v1589, %v1606
      %v1613 = vmul.f32 %v1590, %v1606
      %v1614 = vmul.f32 %v1591, %v1606
      %v1615 = vmul.f32 %v1592, %v1606
      %v1616 = vmul.f32 %v1593, %v1606
      %v1617 = vmul.f32 %v1594, %v1606
      %v1618 = vmul.f32 %v1595, %v1606
      %v1619 = vmul.f32 %v1596, %v1606
      %v1620 = vmul.f32 %v1597, %v1606
      %v1621 = vmul.f32 %v1598, %v1606
      %v1622 = vmul.f32 %v1599, %v1606
      %v1623 = vmul.f32 %v1600, %v1606
      %v1624 = vld [vmem:[%s9] sm:$0x1]
      %v1626 = vlaneseq
      %v1627 = vshrl.u32 %v1626, 7
      %v1628 = vsub.s32 0, %v1627
      %v1629 = vrot.slane %v1624, %v1628
      %v1631 = vadd.f32 %v1608, %v1629
      %v1632 = vadd.f32 %v1609, %v1629
      %v1633 = vadd.f32 %v1610, %v1629
      %v1634 = vadd.f32 %v1611, %v1629
      %v1635 = vadd.f32 %v1612, %v1629
      %v1636 = vadd.f32 %v1613, %v1629
      %v1637 = vadd.f32 %v1614, %v1629
      %v1638 = vadd.f32 %v1615, %v1629
      %v1639 = vadd.f32 %v1616, %v1629
      %v1640 = vadd.f32 %v1617, %v1629
      %v1641 = vadd.f32 %v1618, %v1629
      %v1642 = vadd.f32 %v1619, %v1629
      %v1643 = vadd.f32 %v1620, %v1629
      %v1644 = vadd.f32 %v1621, %v1629
      %v1645 = vadd.f32 %v1622, %v1629
      %v1646 = vadd.f32 %v1623, %v1629
      %v1647 = vld [vmem:[%s5] sm:$0xf]
      %v1648 = vld [vmem:[%s5 + $0x4] sm:$0xf]
      %v1649 = vpack.c.bf16 %v1632, %v1631
      %v1650 = vpack.c.bf16 %v1634, %v1633
      %v1651 = vpack.c.bf16 %v1636, %v1635
      %v1652 = vpack.c.bf16 %v1638, %v1637
      %v1653 = vpack.c.bf16 %v1640, %v1639
      %v1654 = vpack.c.bf16 %v1642, %v1641
      %v1655 = vpack.c.bf16 %v1644, %v1643
      %v1656 = vpack.c.bf16 %v1646, %v1645
      %v1659 = vunpack.c.l.b16 %v1647
      %v1660 = vunpack.c.l.b16 %v1648
      %v1661 = vpack.c.b16 %v1660, %v1659
      %v1664 = vsel %vm656, %v1649, 0
      %v1667 = vsel %vm656, %v1650, 0
      %v1670 = vsel %vm656, %v1651, 0
      %v1673 = vsel %vm656, %v1652, 0
      %v1676 = vsel %vm656, %v1653, 0
      %v1679 = vsel %vm656, %v1654, 0
      %v1682 = vsel %vm656, %v1655, 0
      %v1685 = vsel %vm656, %v1656, 0
      %1687 = vmatprep.subr.bf16.mxu0 0
      %1688 = vmatpush1.bf16.msra.mxu0 %v1661
      %1689 = vmatprep.subr.bf16.mxu0 0
      %1690 = vmatpush1.bf16.msra.mxu0 0
      %1691 = vmatprep.subr.bf16.mxu0 0
      %1692 = vmatpush1.bf16.msra.mxu0 0
      %1693 = vmatprep.subr.bf16.mxu0 0
      %1694 = vmatpush1.bf16.msra.mxu0 0
      %1695 = vmatprep.subr.bf16.mxu0 0
      %1696 = vmatpush1.bf16.msra.mxu0 0
      %1697 = vmatprep.subr.bf16.mxu0 0
      %1698 = vmatpush1.bf16.msra.mxu0 0
      %1699 = vmatprep.subr.bf16.mxu0 0
      %1700 = vmatpush1.bf16.msra.mxu0 0
      %1701 = vmatprep.subr.bf16.mxu0 0
      %1702 = vmatpush1.bf16.msra.mxu0 0
      %1703 = vmatprep.subr.bf16.mxu0 0
      %1704 = vmatpush1.bf16.msra.mxu0 0
      %1705 = vmatprep.subr.bf16.mxu0 0
      %1706 = vmatpush1.bf16.msra.mxu0 0
      %1707 = vmatprep.subr.bf16.mxu0 0
      %1708 = vmatpush1.bf16.msra.mxu0 0
      %1709 = vmatprep.subr.bf16.mxu0 0
      %1710 = vmatpush1.bf16.msra.mxu0 0
      %1711 = vmatprep.subr.bf16.mxu0 0
      %1712 = vmatpush1.bf16.msra.mxu0 0
      %1713 = vmatprep.subr.bf16.mxu0 0
      %1714 = vmatpush1.bf16.msra.mxu0 0
      %1715 = vmatprep.subr.bf16.mxu0 0
      %1716 = vmatpush1.bf16.msra.mxu0 0
      %1717 = vmatprep.subr.bf16.mxu0 0
      %1718 = vmatpush1.bf16.msra.mxu0 0
      %1719 = vmatprep.mubr.bf16.mxu0 0
      %1720 = vmatmul.mubr.bf16.gmra.mrb[0].mxu0 %v1664
      %v1721 = vpop.f32.mrb[0].mxu0
      %v1722 = vadd.f32 0.0, %v1721
      %v1723 = vpop.f32.mrb[0].mxu0
      %v1724 = vpop.f32.mrb[0].mxu0
      %v1725 = vadd.f32 0.0, %v1724
      %v1726 = vpop.f32.mrb[0].mxu0
      %1727 = vmatprep.mubr.bf16.mxu0 0
      %1728 = vmatmul.mubr.bf16.gmra.mrb[0].mxu0 %v1667
      %v1729 = vpop.f32.mrb[0].mxu0
      %v1730 = vadd.f32 0.0, %v1729
      %v1731 = vpop.f32.mrb[0].mxu0
      %v1732 = vpop.f32.mrb[0].mxu0
      %v1733 = vadd.f32 0.0, %v1732
      %v1734 = vpop.f32.mrb[0].mxu0
      %1735 = vmatprep.mubr.bf16.mxu0 0
      %1736 = vmatmul.mubr.bf16.gmra.mrb[0].mxu0 %v1670
      %v1737 = vpop.f32.mrb[0].mxu0
      %v1738 = vadd.f32 0.0, %v1737
      %v1739 = vpop.f32.mrb[0].mxu0
      %v1740 = vpop.f32.mrb[0].mxu0
      %v1741 = vadd.f32 0.0, %v1740
      %v1742 = vpop.f32.mrb[0].mxu0
      %1743 = vmatprep.mubr.bf16.mxu0 0
      %1744 = vmatmul.mubr.bf16.gmra.mrb[0].mxu0 %v1673
      %v1745 = vpop.f32.mrb[0].mxu0
      %v1746 = vadd.f32 0.0, %v1745
      %v1747 = vpop.f32.mrb[0].mxu0
      %v1748 = vpop.f32.mrb[0].mxu0
      %v1749 = vadd.f32 0.0, %v1748
      %v1750 = vpop.f32.mrb[0].mxu0
      %1751 = vmatprep.mubr.bf16.mxu0 0
      %1752 = vmatmul.mubr.bf16.gmra.mrb[0].mxu0 %v1676
      %v1753 = vpop.f32.mrb[0].mxu0
      %v1754 = vadd.f32 0.0, %v1753
      %v1755 = vpop.f32.mrb[0].mxu0
      %v1756 = vpop.f32.mrb[0].mxu0
      %v1757 = vadd.f32 0.0, %v1756
      %v1758 = vpop.f32.mrb[0].mxu0
      %1759 = vmatprep.mubr.bf16.mxu0 0
      %1760 = vmatmul.mubr.bf16.gmra.mrb[0].mxu0 %v1679
      %v1761 = vpop.f32.mrb[0].mxu0
      %v1762 = vadd.f32 0.0, %v1761
      %v1763 = vpop.f32.mrb[0].mxu0
      %v1764 = vpop.f32.mrb[0].mxu0
      %v1765 = vadd.f32 0.0, %v1764
      %v1766 = vpop.f32.mrb[0].mxu0
      %1767 = vmatprep.mubr.bf16.mxu0 0
      %1768 = vmatmul.mubr.bf16.gmra.mrb[0].mxu0 %v1682
      %v1769 = vpop.f32.mrb[0].mxu0
      %v1770 = vadd.f32 0.0, %v1769
      %v1771 = vpop.f32.mrb[0].mxu0
      %v1772 = vpop.f32.mrb[0].mxu0
      %v1773 = vadd.f32 0.0, %v1772
      %v1774 = vpop.f32.mrb[0].mxu0
      %1775 = vmatprep.mubr.bf16.mxu0 0
      %1776 = vmatmul.mubr.bf16.gmra.mrb[0].mxu0 %v1685
      %v1777 = vpop.f32.mrb[0].mxu0
      %v1778 = vadd.f32 0.0, %v1777
      %v1779 = vpop.f32.mrb[0].mxu0
      %v1780 = vpop.f32.mrb[0].mxu0
      %v1781 = vadd.f32 0.0, %v1780
      %v1782 = vpop.f32.mrb[0].mxu0
      %1783 = vdwg.mxu0
      %v1784 = vpack.c.bf16 %v1725, %v1722
      %v1785 = vpack.c.bf16 %v1733, %v1730
      %v1786 = vpack.c.bf16 %v1741, %v1738
      %v1787 = vpack.c.bf16 %v1749, %v1746
      %v1788 = vpack.c.bf16 %v1757, %v1754
      %v1789 = vpack.c.bf16 %v1765, %v1762
      %v1790 = vpack.c.bf16 %v1773, %v1770
      %v1791 = vpack.c.bf16 %v1781, %v1778
      %v1792 = vpack.c.bf16 %v719, %v716
      %v1793 = vpack.c.bf16 %v727, %v724
      %v1794 = vpack.c.bf16 %v735, %v732
      %v1795 = vpack.c.bf16 %v743, %v740
      %v1796 = vpack.c.bf16 %v751, %v748
      %v1797 = vpack.c.bf16 %v759, %v756
      %v1798 = vpack.c.bf16 %v767, %v764
      %v1799 = vpack.c.bf16 %v775, %v772
      %vm1800 = vcmask 31744
      %v1802 = vsel %vm1800, %v1784, 0
      %v1805 = vsel %vm1800, %v1785, 0
      %v1808 = vsel %vm1800, %v1786, 0
      %v1811 = vsel %vm1800, %v1787, 0
      %v1814 = vsel %vm1800, %v1788, 0
      %v1817 = vsel %vm1800, %v1789, 0
      %v1820 = vsel %vm1800, %v1790, 0
      %v1823 = vsel %vm1800, %v1791, 0
      %v1826 = vsel %vm1800, %v1792, 0
      %v1829 = vsel %vm1800, %v1793, 0
      %v1832 = vsel %vm1800, %v1794, 0
      %v1835 = vsel %vm1800, %v1795, 0
      %v1838 = vsel %vm1800, %v1796, 0
      %v1841 = vsel %vm1800, %v1797, 0
      %v1844 = vsel %vm1800, %v1798, 0
      %v1847 = vsel %vm1800, %v1799, 0
      %1849 = vmatprep.subr.bf16.mxu0 0
      %1850 = vmatpush1.bf16.xpose.msra.mxu0 %v1826
      %1851 = vmatprep.subr.bf16.mxu0 0
      %1852 = vmatpush1.bf16.xpose.msra.mxu0 %v1829
      %1853 = vmatprep.subr.bf16.mxu0 0
      %1854 = vmatpush1.bf16.xpose.msra.mxu0 %v1832
      %1855 = vmatprep.subr.bf16.mxu0 0
      %1856 = vmatpush1.bf16.xpose.msra.mxu0 %v1835
      %1857 = vmatprep.subr.bf16.mxu0 0
      %1858 = vmatpush1.bf16.xpose.msra.mxu0 %v1838
      %1859 = vmatprep.subr.bf16.mxu0 0
      %1860 = vmatpush1.bf16.xpose.msra.mxu0 %v1841
      %1861 = vmatprep.subr.bf16.mxu0 0
      %1862 = vmatpush1.bf16.xpose.msra.mxu0 %v1844
      %1863 = vmatprep.subr.bf16.mxu0 0
      %1864 = vmatpush1.bf16.xpose.msra.mxu0 %v1847
      %1865 = vmatprep.subr.bf16.mxu0 0
      %1866 = vmatpush1.bf16.xpose.msra.mxu0 0
      %1867 = vmatprep.subr.bf16.mxu0 0
      %1868 = vmatpush1.bf16.xpose.msra.mxu0 0
      %1869 = vmatprep.subr.bf16.mxu0 0
      %1870 = vmatpush1.bf16.xpose.msra.mxu0 0
      %1871 = vmatprep.subr.bf16.mxu0 0
      %1872 = vmatpush1.bf16.xpose.msra.mxu0 0
      %1873 = vmatprep.subr.bf16.mxu0 0
      %1874 = vmatpush1.bf16.xpose.msra.mxu0 0
      %1875 = vmatprep.subr.bf16.mxu0 0
      %1876 = vmatpush1.bf16.xpose.msra.mxu0 0
      %1877 = vmatprep.subr.bf16.mxu0 0
      %1878 = vmatpush1.bf16.xpose.msra.mxu0 0
      %1879 = vmatprep.subr.bf16.mxu0 0
      %1880 = vmatpush1.bf16.xpose.msra.mxu0 0
      %1881 = vmatprep.mubr.bf16.mxu0 0
      %1882 = vmatmul.mubr.bf16.gmra.mrb[0].mxu0 %v1802
      %v1883 = vpop.f32.mrb[0].mxu0
      %v1884 = vadd.f32 0.0, %v1883
      %v1885 = vpop.f32.mrb[0].mxu0
      %v1886 = vpop.f32.mrb[0].mxu0
      %v1887 = vadd.f32 0.0, %v1886
      %v1888 = vpop.f32.mrb[0].mxu0
      %1889 = vmatprep.mubr.bf16.mxu0 0
      %1890 = vmatmul.mubr.bf16.gmra.mrb[0].mxu0 %v1805
      %v1891 = vpop.f32.mrb[0].mxu0
      %v1892 = vadd.f32 0.0, %v1891
      %v1893 = vpop.f32.mrb[0].mxu0
      %v1894 = vpop.f32.mrb[0].mxu0
      %v1895 = vadd.f32 0.0, %v1894
      %v1896 = vpop.f32.mrb[0].mxu0
      %1897 = vmatprep.mubr.bf16.mxu0 0
      %1898 = vmatmul.mubr.bf16.gmra.mrb[0].mxu0 %v1808
      %v1899 = vpop.f32.mrb[0].mxu0
      %v1900 = vadd.f32 0.0, %v1899
      %v1901 = vpop.f32.mrb[0].mxu0
      %v1902 = vpop.f32.mrb[0].mxu0
      %v1903 = vadd.f32 0.0, %v1902
      %v1904 = vpop.f32.mrb[0].mxu0
      %1905 = vmatprep.mubr.bf16.mxu0 0
      %1906 = vmatmul.mubr.bf16.gmra.mrb[0].mxu0 %v1811
      %v1907 = vpop.f32.mrb[0].mxu0
      %v1908 = vadd.f32 0.0, %v1907
      %v1909 = vpop.f32.mrb[0].mxu0
      %v1910 = vpop.f32.mrb[0].mxu0
      %v1911 = vadd.f32 0.0, %v1910
      %v1912 = vpop.f32.mrb[0].mxu0
      %1913 = vmatprep.mubr.bf16.mxu0 0
      %1914 = vmatmul.mubr.bf16.gmra.mrb[0].mxu0 %v1814
      %v1915 = vpop.f32.mrb[0].mxu0
      %v1916 = vadd.f32 0.0, %v1915
      %v1917 = vpop.f32.mrb[0].mxu0
      %v1918 = vpop.f32.mrb[0].mxu0
      %v1919 = vadd.f32 0.0, %v1918
      %v1920 = vpop.f32.mrb[0].mxu0
      %1921 = vmatprep.mubr.bf16.mxu0 0
      %1922 = vmatmul.mubr.bf16.gmra.mrb[0].mxu0 %v1817
      %v1923 = vpop.f32.mrb[0].mxu0
      %v1924 = vadd.f32 0.0, %v1923
      %v1925 = vpop.f32.mrb[0].mxu0
      %v1926 = vpop.f32.mrb[0].mxu0
      %v1927 = vadd.f32 0.0, %v1926
      %v1928 = vpop.f32.mrb[0].mxu0
      %1929 = vmatprep.mubr.bf16.mxu0 0
      %1930 = vmatmul.mubr.bf16.gmra.mrb[0].mxu0 %v1820
      %v1931 = vpop.f32.mrb[0].mxu0
      %v1932 = vadd.f32 0.0, %v1931
      %v1933 = vpop.f32.mrb[0].mxu0
      %v1934 = vpop.f32.mrb[0].mxu0
      %v1935 = vadd.f32 0.0, %v1934
      %v1936 = vpop.f32.mrb[0].mxu0
      %1937 = vmatprep.mubr.bf16.mxu0 0
      %1938 = vmatmul.mubr.bf16.gmra.mrb[0].mxu0 %v1823
      %v1939 = vpop.f32.mrb[0].mxu0
      %v1940 = vadd.f32 0.0, %v1939
      %v1941 = vpop.f32.mrb[0].mxu0
      %v1942 = vpop.f32.mrb[0].mxu0
      %v1943 = vadd.f32 0.0, %v1942
      %v1944 = vpop.f32.mrb[0].mxu0
      %1945 = vdwg.mxu0
      %v1946 = vmul.f32 %v1884, 0.5
      %v1947 = vmul.f32 %v1887, 0.5
      %v1948 = vmul.f32 %v1892, 0.5
      %v1949 = vmul.f32 %v1895, 0.5
      %v1950 = vmul.f32 %v1900, 0.5
      %v1951 = vmul.f32 %v1903, 0.5
      %v1952 = vmul.f32 %v1908, 0.5
      %v1953 = vmul.f32 %v1911, 0.5
      %v1954 = vmul.f32 %v1916, 0.5
      %v1955 = vmul.f32 %v1919, 0.5
      %v1956 = vmul.f32 %v1924, 0.5
      %v1957 = vmul.f32 %v1927, 0.5
      %v1958 = vmul.f32 %v1932, 0.5
      %v1959 = vmul.f32 %v1935, 0.5
      %v1960 = vmul.f32 %v1940, 0.5
      %v1961 = vmul.f32 %v1943, 0.5
      %v1962 = vld [vmem:[%s2] sm:$0xff]
      %v1963 = vld [vmem:[%s2 + $0x8] sm:$0xff]
      %v1964 = vld [vmem:[%s2 + $0x10] sm:$0xff]
      %v1965 = vld [vmem:[%s2 + $0x18] sm:$0xff]
      %v1966 = vld [vmem:[%s2 + $0x20] sm:$0xff]
      %v1967 = vld [vmem:[%s2 + $0x28] sm:$0xff]
      %v1968 = vld [vmem:[%s2 + $0x30] sm:$0xff]
      %v1969 = vld [vmem:[%s2 + $0x38] sm:$0xff]
      %v1970 = vld [vmem:[%s2 + $0x40] sm:$0xff]
      %v1971 = vld [vmem:[%s2 + $0x48] sm:$0xff]
      %v1972 = vld [vmem:[%s2 + $0x50] sm:$0xff]
      %v1973 = vld [vmem:[%s2 + $0x58] sm:$0xff]
      %v1974 = vld [vmem:[%s2 + $0x60] sm:$0xff]
      %v1975 = vld [vmem:[%s2 + $0x68] sm:$0xff]
      %v1976 = vld [vmem:[%s2 + $0x70] sm:$0xff]
      %v1977 = vld [vmem:[%s2 + $0x78] sm:$0xff]
      %v1978 = vadd.f32 %v1946, %v1962
      %v1979 = vadd.f32 %v1947, %v1963
      %v1980 = vadd.f32 %v1948, %v1964
      %v1981 = vadd.f32 %v1949, %v1965
      %v1982 = vadd.f32 %v1950, %v1966
      %v1983 = vadd.f32 %v1951, %v1967
      %v1984 = vadd.f32 %v1952, %v1968
      %v1985 = vadd.f32 %v1953, %v1969
      %v1986 = vadd.f32 %v1954, %v1970
      %v1987 = vadd.f32 %v1955, %v1971
      %v1988 = vadd.f32 %v1956, %v1972
      %v1989 = vadd.f32 %v1957, %v1973
      %v1990 = vadd.f32 %v1958, %v1974
      %v1991 = vadd.f32 %v1959, %v1975
      %v1992 = vadd.f32 %v1960, %v1976
      %v1993 = vadd.f32 %v1961, %v1977
      %1994 = vmax.xlane.f32.xlu0 %v1978
      %v1995 = vpop.xlane.xlu0 %1994
      %1996 = vmax.xlane.f32.xlu0 %v1979
      %v1997 = vpop.xlane.xlu0 %1996
      %1998 = vmax.xlane.f32.xlu0 %v1980
      %v1999 = vpop.xlane.xlu0 %1998
      %2000 = vmax.xlane.f32.xlu0 %v1981
      %v2001 = vpop.xlane.xlu0 %2000
      %2002 = vmax.xlane.f32.xlu0 %v1982
      %v2003 = vpop.xlane.xlu0 %2002
      %2004 = vmax.xlane.f32.xlu0 %v1983
      %v2005 = vpop.xlane.xlu0 %2004
      %2006 = vmax.xlane.f32.xlu0 %v1984
      %v2007 = vpop.xlane.xlu0 %2006
      %2008 = vmax.xlane.f32.xlu0 %v1985
      %v2009 = vpop.xlane.xlu0 %2008
      %2010 = vmax.xlane.f32.xlu0 %v1986
      %v2011 = vpop.xlane.xlu0 %2010
      %2012 = vmax.xlane.f32.xlu0 %v1987
      %v2013 = vpop.xlane.xlu0 %2012
      %2014 = vmax.xlane.f32.xlu0 %v1988
      %v2015 = vpop.xlane.xlu0 %2014
      %2016 = vmax.xlane.f32.xlu0 %v1989
      %v2017 = vpop.xlane.xlu0 %2016
      %2018 = vmax.xlane.f32.xlu0 %v1990
      %v2019 = vpop.xlane.xlu0 %2018
      %2020 = vmax.xlane.f32.xlu0 %v1991
      %v2021 = vpop.xlane.xlu0 %2020
      %2022 = vmax.xlane.f32.xlu0 %v1992
      %v2023 = vpop.xlane.xlu0 %2022
      %2024 = vmax.xlane.f32.xlu0 %v1993
      %v2025 = vpop.xlane.xlu0 %2024
      %v2026 = vsub.f32 %v1978, %v1995
      %v2027 = vsub.f32 %v1979, %v1997
      %v2028 = vsub.f32 %v1980, %v1999
      %v2029 = vsub.f32 %v1981, %v2001
      %v2030 = vsub.f32 %v1982, %v2003
      %v2031 = vsub.f32 %v1983, %v2005
      %v2032 = vsub.f32 %v1984, %v2007
      %v2033 = vsub.f32 %v1985, %v2009
      %v2034 = vsub.f32 %v1986, %v2011
      %v2035 = vsub.f32 %v1987, %v2013
      %v2036 = vsub.f32 %v1988, %v2015
      %v2037 = vsub.f32 %v1989, %v2017
      %v2038 = vsub.f32 %v1990, %v2019
      %v2039 = vsub.f32 %v1991, %v2021
      %v2040 = vsub.f32 %v1992, %v2023
      %v2041 = vsub.f32 %v1993, %v2025
      %v2042 = vmul.f32 %v2026, 1.442695
      %v2043 = vpow.pop %v2042
      %v2044 = vmul.f32 %v2027, 1.442695
      %v2045 = vpow.pop %v2044
      %v2046 = vmul.f32 %v2028, 1.442695
      %v2047 = vpow.pop %v2046
      %v2048 = vmul.f32 %v2029, 1.442695
      %v2049 = vpow.pop %v2048
      %v2050 = vmul.f32 %v2030, 1.442695
      %v2051 = vpow.pop %v2050
      %v2052 = vmul.f32 %v2031, 1.442695
      %v2053 = vpow.pop %v2052
      %v2054 = vmul.f32 %v2032, 1.442695
      %v2055 = vpow.pop %v2054
      %v2056 = vmul.f32 %v2033, 1.442695
      %v2057 = vpow.pop %v2056
      %v2058 = vmul.f32 %v2034, 1.442695
      %v2059 = vpow.pop %v2058
      %v2060 = vmul.f32 %v2035, 1.442695
      %v2061 = vpow.pop %v2060
      %v2062 = vmul.f32 %v2036, 1.442695
      %v2063 = vpow.pop %v2062
      %v2064 = vmul.f32 %v2037, 1.442695
      %v2065 = vpow.pop %v2064
      %v2066 = vmul.f32 %v2038, 1.442695
      %v2067 = vpow.pop %v2066
      %v2068 = vmul.f32 %v2039, 1.442695
      %v2069 = vpow.pop %v2068
      %v2070 = vmul.f32 %v2040, 1.442695
      %v2071 = vpow.pop %v2070
      %v2072 = vmul.f32 %v2041, 1.442695
      %v2073 = vpow.pop %v2072
      %2074 = vadd.xlane.f32.xlu0 %v2043
      %v2075 = vpop.xlane.xlu0 %2074
      %2076 = vadd.xlane.f32.xlu0 %v2045
      %v2077 = vpop.xlane.xlu0 %2076
      %2078 = vadd.xlane.f32.xlu0 %v2047
      %v2079 = vpop.xlane.xlu0 %2078
      %2080 = vadd.xlane.f32.xlu0 %v2049
      %v2081 = vpop.xlane.xlu0 %2080
      %2082 = vadd.xlane.f32.xlu0 %v2051
      %v2083 = vpop.xlane.xlu0 %2082
      %2084 = vadd.xlane.f32.xlu0 %v2053
      %v2085 = vpop.xlane.xlu0 %2084
      %2086 = vadd.xlane.f32.xlu0 %v2055
      %v2087 = vpop.xlane.xlu0 %2086
      %2088 = vadd.xlane.f32.xlu0 %v2057
      %v2089 = vpop.xlane.xlu0 %2088
      %2090 = vadd.xlane.f32.xlu0 %v2059
      %v2091 = vpop.xlane.xlu0 %2090
      %2092 = vadd.xlane.f32.xlu0 %v2061
      %v2093 = vpop.xlane.xlu0 %2092
      %2094 = vadd.xlane.f32.xlu0 %v2063
      %v2095 = vpop.xlane.xlu0 %2094
      %2096 = vadd.xlane.f32.xlu0 %v2065
      %v2097 = vpop.xlane.xlu0 %2096
      %2098 = vadd.xlane.f32.xlu0 %v2067
      %v2099 = vpop.xlane.xlu0 %2098
      %2100 = vadd.xlane.f32.xlu0 %v2069
      %v2101 = vpop.xlane.xlu0 %2100
      %2102 = vadd.xlane.f32.xlu0 %v2071
      %v2103 = vpop.xlane.xlu0 %2102
      %2104 = vadd.xlane.f32.xlu0 %v2073
      %v2105 = vpop.xlane.xlu0 %2104
      %v2106 = vrcp.pop %v2075
      %v2107 = vrcp.pop %v2077
      %v2108 = vrcp.pop %v2079
      %v2109 = vrcp.pop %v2081
      %v2110 = vrcp.pop %v2083
      %v2111 = vrcp.pop %v2085
      %v2112 = vrcp.pop %v2087
      %v2113 = vrcp.pop %v2089
      %v2114 = vrcp.pop %v2091
      %v2115 = vrcp.pop %v2093
      %v2116 = vrcp.pop %v2095
      %v2117 = vrcp.pop %v2097
      %v2118 = vrcp.pop %v2099
      %v2119 = vrcp.pop %v2101
      %v2120 = vrcp.pop %v2103
      %v2121 = vrcp.pop %v2105
      %v2122 = vmul.f32 %v2043, %v2106
      %v2123 = vmul.f32 %v2045, %v2107
      %v2124 = vmul.f32 %v2047, %v2108
      %v2125 = vmul.f32 %v2049, %v2109
      %v2126 = vmul.f32 %v2051, %v2110
      %v2127 = vmul.f32 %v2053, %v2111
      %v2128 = vmul.f32 %v2055, %v2112
      %v2129 = vmul.f32 %v2057, %v2113
      %v2130 = vmul.f32 %v2059, %v2114
      %v2131 = vmul.f32 %v2061, %v2115
      %v2132 = vmul.f32 %v2063, %v2116
      %v2133 = vmul.f32 %v2065, %v2117
      %v2134 = vmul.f32 %v2067, %v2118
      %v2135 = vmul.f32 %v2069, %v2119
      %v2136 = vmul.f32 %v2071, %v2120
      %v2137 = vmul.f32 %v2073, %v2121
      %v2138 = vpack.c.bf16 %v2123, %v2122
      %v2139 = vpack.c.bf16 %v2125, %v2124
      %v2140 = vpack.c.bf16 %v2127, %v2126
      %v2141 = vpack.c.bf16 %v2129, %v2128
      %v2142 = vpack.c.bf16 %v2131, %v2130
      %v2143 = vpack.c.bf16 %v2133, %v2132
      %v2144 = vpack.c.bf16 %v2135, %v2134
      %v2145 = vpack.c.bf16 %v2137, %v2136
      %2154 = vrot.lane.b32.xlu0 %v1792, 112
      %v2155 = vpop.permute.xlu0 %2154
      %2156 = vrot.lane.b32.xlu0 %v1793, 112
      %v2157 = vpop.permute.xlu0 %2156
      %2158 = vrot.lane.b32.xlu0 %v1794, 112
      %v2159 = vpop.permute.xlu0 %2158
      %2160 = vrot.lane.b32.xlu0 %v1795, 112
      %v2161 = vpop.permute.xlu0 %2160
      %2162 = vrot.lane.b32.xlu0 %v1796, 112
      %v2163 = vpop.permute.xlu0 %2162
      %2164 = vrot.lane.b32.xlu0 %v1797, 112
      %v2165 = vpop.permute.xlu0 %2164
      %2166 = vrot.lane.b32.xlu0 %v1798, 112
      %v2167 = vpop.permute.xlu0 %2166
      %2168 = vrot.lane.b32.xlu0 %v1799, 112
      %v2169 = vpop.permute.xlu0 %2168
      %2178 = vmatprep.subr.bf16.mxu0 0
      %2179 = vmatpush1.bf16.msra.mxu0 %v2155
      %2180 = vmatprep.subr.bf16.mxu0 0
      %2181 = vmatpush1.bf16.msra.mxu0 %v2157
      %2182 = vmatprep.subr.bf16.mxu0 0
      %2183 = vmatpush1.bf16.msra.mxu0 %v2159
      %2184 = vmatprep.subr.bf16.mxu0 0
      %2185 = vmatpush1.bf16.msra.mxu0 %v2161
      %2186 = vmatprep.subr.bf16.mxu0 0
      %2187 = vmatpush1.bf16.msra.mxu0 %v2163
      %2188 = vmatprep.subr.bf16.mxu0 0
      %2189 = vmatpush1.bf16.msra.mxu0 %v2165
      %2190 = vmatprep.subr.bf16.mxu0 0
      %2191 = vmatpush1.bf16.msra.mxu0 %v2167
      %2192 = vmatprep.subr.bf16.mxu0 0
      %2193 = vmatpush1.bf16.msra.mxu0 %v2169
      %2194 = vmatprep.subr.bf16.mxu0 0
      %2195 = vmatpush1.bf16.msra.mxu0 0
      %2196 = vmatprep.subr.bf16.mxu0 0
      %2197 = vmatpush1.bf16.msra.mxu0 0
      %2198 = vmatprep.subr.bf16.mxu0 0
      %2199 = vmatpush1.bf16.msra.mxu0 0
      %2200 = vmatprep.subr.bf16.mxu0 0
      %2201 = vmatpush1.bf16.msra.mxu0 0
      %2202 = vmatprep.subr.bf16.mxu0 0
      %2203 = vmatpush1.bf16.msra.mxu0 0
      %2204 = vmatprep.subr.bf16.mxu0 0
      %2205 = vmatpush1.bf16.msra.mxu0 0
      %2206 = vmatprep.subr.bf16.mxu0 0
      %2207 = vmatpush1.bf16.msra.mxu0 0
      %2208 = vmatprep.subr.bf16.mxu0 0
      %2209 = vmatpush1.bf16.msra.mxu0 0
      %2210 = vmatprep.mubr.bf16.mxu0 0
      %2211 = vmatmul.mubr.bf16.gmra.mrb[0].mxu0 %v2138
      %v2212 = vpop.f32.mrb[0].mxu0
      %v2213 = vadd.f32 0.0, %v2212
      %v2214 = vpop.f32.mrb[0].mxu0
      %v2215 = vpop.f32.mrb[0].mxu0
      %v2216 = vadd.f32 0.0, %v2215
      %v2217 = vpop.f32.mrb[0].mxu0
      %2218 = vmatprep.mubr.bf16.mxu0 0
      %2219 = vmatmul.mubr.bf16.gmra.mrb[0].mxu0 %v2139
      %v2220 = vpop.f32.mrb[0].mxu0
      %v2221 = vadd.f32 0.0, %v2220
      %v2222 = vpop.f32.mrb[0].mxu0
      %v2223 = vpop.f32.mrb[0].mxu0
      %v2224 = vadd.f32 0.0, %v2223
      %v2225 = vpop.f32.mrb[0].mxu0
      %2226 = vmatprep.mubr.bf16.mxu0 0
      %2227 = vmatmul.mubr.bf16.gmra.mrb[0].mxu0 %v2140
      %v2228 = vpop.f32.mrb[0].mxu0
      %v2229 = vadd.f32 0.0, %v2228
      %v2230 = vpop.f32.mrb[0].mxu0
      %v2231 = vpop.f32.mrb[0].mxu0
      %v2232 = vadd.f32 0.0, %v2231
      %v2233 = vpop.f32.mrb[0].mxu0
      %2234 = vmatprep.mubr.bf16.mxu0 0
      %2235 = vmatmul.mubr.bf16.gmra.mrb[0].mxu0 %v2141
      %v2236 = vpop.f32.mrb[0].mxu0
      %v2237 = vadd.f32 0.0, %v2236
      %v2238 = vpop.f32.mrb[0].mxu0
      %v2239 = vpop.f32.mrb[0].mxu0
      %v2240 = vadd.f32 0.0, %v2239
      %v2241 = vpop.f32.mrb[0].mxu0
      %2242 = vmatprep.mubr.bf16.mxu0 0
      %2243 = vmatmul.mubr.bf16.gmra.mrb[0].mxu0 %v2142
      %v2244 = vpop.f32.mrb[0].mxu0
      %v2245 = vadd.f32 0.0, %v2244
      %v2246 = vpop.f32.mrb[0].mxu0
      %v2247 = vpop.f32.mrb[0].mxu0
      %v2248 = vadd.f32 0.0, %v2247
      %v2249 = vpop.f32.mrb[0].mxu0
      %2250 = vmatprep.mubr.bf16.mxu0 0
      %2251 = vmatmul.mubr.bf16.gmra.mrb[0].mxu0 %v2143
      %v2252 = vpop.f32.mrb[0].mxu0
      %v2253 = vadd.f32 0.0, %v2252
      %v2254 = vpop.f32.mrb[0].mxu0
      %v2255 = vpop.f32.mrb[0].mxu0
      %v2256 = vadd.f32 0.0, %v2255
      %v2257 = vpop.f32.mrb[0].mxu0
      %2258 = vmatprep.mubr.bf16.mxu0 0
      %2259 = vmatmul.mubr.bf16.gmra.mrb[0].mxu0 %v2144
      %v2260 = vpop.f32.mrb[0].mxu0
      %v2261 = vadd.f32 0.0, %v2260
      %v2262 = vpop.f32.mrb[0].mxu0
      %v2263 = vpop.f32.mrb[0].mxu0
      %v2264 = vadd.f32 0.0, %v2263
      %v2265 = vpop.f32.mrb[0].mxu0
      %2266 = vmatprep.mubr.bf16.mxu0 0
      %2267 = vmatmul.mubr.bf16.gmra.mrb[0].mxu0 %v2145
      %v2268 = vpop.f32.mrb[0].mxu0
      %v2269 = vadd.f32 0.0, %v2268
      %v2270 = vpop.f32.mrb[0].mxu0
      %v2271 = vpop.f32.mrb[0].mxu0
      %v2272 = vadd.f32 0.0, %v2271
      %v2273 = vpop.f32.mrb[0].mxu0
      %2274 = vdwg.mxu0
      %v2275 = vld [vmem:[%s10] sm:$0x3]
      %v2276 = vpack.c.bf16 %v2216, %v2213
      %v2277 = vpack.c.bf16 %v2224, %v2221
      %v2278 = vpack.c.bf16 %v2232, %v2229
      %v2279 = vpack.c.bf16 %v2240, %v2237
      %v2280 = vpack.c.bf16 %v2248, %v2245
      %v2281 = vpack.c.bf16 %v2256, %v2253
      %v2282 = vpack.c.bf16 %v2264, %v2261
      %v2283 = vpack.c.bf16 %v2272, %v2269
      %2292 = vrot.lane.b32.xlu0 %v1784, 124
      %v2293 = vpop.permute.xlu0 %2292
      %2294 = vrot.lane.b32.xlu0 %v1785, 124
      %v2295 = vpop.permute.xlu0 %2294
      %2296 = vrot.lane.b32.xlu0 %v1786, 124
      %v2297 = vpop.permute.xlu0 %2296
      %2298 = vrot.lane.b32.xlu0 %v1787, 124
      %v2299 = vpop.permute.xlu0 %2298
      %2300 = vrot.lane.b32.xlu0 %v1788, 124
      %v2301 = vpop.permute.xlu0 %2300
      %2302 = vrot.lane.b32.xlu0 %v1789, 124
      %v2303 = vpop.permute.xlu0 %2302
      %2304 = vrot.lane.b32.xlu0 %v1790, 124
      %v2305 = vpop.permute.xlu0 %2304
      %2306 = vrot.lane.b32.xlu0 %v1791, 124
      %v2307 = vpop.permute.xlu0 %2306
      %2308 = vrot.lane.b32.xlu0 %v1792, 124
      %v2309 = vpop.permute.xlu0 %2308
      %2310 = vrot.lane.b32.xlu0 %v1793, 124
      %v2311 = vpop.permute.xlu0 %2310
      %2312 = vrot.lane.b32.xlu0 %v1794, 124
      %v2313 = vpop.permute.xlu0 %2312
      %2314 = vrot.lane.b32.xlu0 %v1795, 124
      %v2315 = vpop.permute.xlu0 %2314
      %2316 = vrot.lane.b32.xlu0 %v1796, 124
      %v2317 = vpop.permute.xlu0 %2316
      %2318 = vrot.lane.b32.xlu0 %v1797, 124
      %v2319 = vpop.permute.xlu0 %2318
      %2320 = vrot.lane.b32.xlu0 %v1798, 124
      %v2321 = vpop.permute.xlu0 %2320
      %2322 = vrot.lane.b32.xlu0 %v1799, 124
      %v2323 = vpop.permute.xlu0 %2322
      %v2325 = vsel %vm1800, %v2293, 0
      %v2328 = vsel %vm1800, %v2295, 0
      %v2331 = vsel %vm1800, %v2297, 0
      %v2334 = vsel %vm1800, %v2299, 0
      %v2337 = vsel %vm1800, %v2301, 0
      %v2340 = vsel %vm1800, %v2303, 0
      %v2343 = vsel %vm1800, %v2305, 0
      %v2346 = vsel %vm1800, %v2307, 0
      %v2349 = vsel %vm1800, %v2309, 0
      %v2352 = vsel %vm1800, %v2311, 0
      %v2355 = vsel %vm1800, %v2313, 0
      %v2358 = vsel %vm1800, %v2315, 0
      %v2361 = vsel %vm1800, %v2317, 0
      %v2364 = vsel %vm1800, %v2319, 0
      %v2367 = vsel %vm1800, %v2321, 0
      %v2370 = vsel %vm1800, %v2323, 0
      %2372 = vmatprep.subr.bf16.mxu0 0
      %2373 = vmatpush1.bf16.xpose.msra.mxu0 %v2349
      %2374 = vmatprep.subr.bf16.mxu0 0
      %2375 = vmatpush1.bf16.xpose.msra.mxu0 %v2352
      %2376 = vmatprep.subr.bf16.mxu0 0
      %2377 = vmatpush1.bf16.xpose.msra.mxu0 %v2355
      %2378 = vmatprep.subr.bf16.mxu0 0
      %2379 = vmatpush1.bf16.xpose.msra.mxu0 %v2358
      %2380 = vmatprep.subr.bf16.mxu0 0
      %2381 = vmatpush1.bf16.xpose.msra.mxu0 %v2361
      %2382 = vmatprep.subr.bf16.mxu0 0
      %2383 = vmatpush1.bf16.xpose.msra.mxu0 %v2364
      %2384 = vmatprep.subr.bf16.mxu0 0
      %2385 = vmatpush1.bf16.xpose.msra.mxu0 %v2367
      %2386 = vmatprep.subr.bf16.mxu0 0
      %2387 = vmatpush1.bf16.xpose.msra.mxu0 %v2370
      %2388 = vmatprep.subr.bf16.mxu0 0
      %2389 = vmatpush1.bf16.xpose.msra.mxu0 0
      %2390 = vmatprep.subr.bf16.mxu0 0
      %2391 = vmatpush1.bf16.xpose.msra.mxu0 0
      %2392 = vmatprep.subr.bf16.mxu0 0
      %2393 = vmatpush1.bf16.xpose.msra.mxu0 0
      %2394 = vmatprep.subr.bf16.mxu0 0
      %2395 = vmatpush1.bf16.xpose.msra.mxu0 0
      %2396 = vmatprep.subr.bf16.mxu0 0
      %2397 = vmatpush1.bf16.xpose.msra.mxu0 0
      %2398 = vmatprep.subr.bf16.mxu0 0
      %2399 = vmatpush1.bf16.xpose.msra.mxu0 0
      %2400 = vmatprep.subr.bf16.mxu0 0
      %2401 = vmatpush1.bf16.xpose.msra.mxu0 0
      %2402 = vmatprep.subr.bf16.mxu0 0
      %2403 = vmatpush1.bf16.xpose.msra.mxu0 0
      %2404 = vmatprep.mubr.bf16.mxu0 0
      %2405 = vmatmul.mubr.bf16.gmra.mrb[0].mxu0 %v2325
      %v2406 = vpop.f32.mrb[0].mxu0
      %v2407 = vadd.f32 0.0, %v2406
      %v2408 = vpop.f32.mrb[0].mxu0
      %v2409 = vpop.f32.mrb[0].mxu0
      %v2410 = vadd.f32 0.0, %v2409
      %v2411 = vpop.f32.mrb[0].mxu0
      %2412 = vmatprep.mubr.bf16.mxu0 0
      %2413 = vmatmul.mubr.bf16.gmra.mrb[0].mxu0 %v2328
      %v2414 = vpop.f32.mrb[0].mxu0
      %v2415 = vadd.f32 0.0, %v2414
      %v2416 = vpop.f32.mrb[0].mxu0
      %v2417 = vpop.f32.mrb[0].mxu0
      %v2418 = vadd.f32 0.0, %v2417
      %v2419 = vpop.f32.mrb[0].mxu0
      %2420 = vmatprep.mubr.bf16.mxu0 0
      %2421 = vmatmul.mubr.bf16.gmra.mrb[0].mxu0 %v2331
      %v2422 = vpop.f32.mrb[0].mxu0
      %v2423 = vadd.f32 0.0, %v2422
      %v2424 = vpop.f32.mrb[0].mxu0
      %v2425 = vpop.f32.mrb[0].mxu0
      %v2426 = vadd.f32 0.0, %v2425
      %v2427 = vpop.f32.mrb[0].mxu0
      %2428 = vmatprep.mubr.bf16.mxu0 0
      %2429 = vmatmul.mubr.bf16.gmra.mrb[0].mxu0 %v2334
      %v2430 = vpop.f32.mrb[0].mxu0
      %v2431 = vadd.f32 0.0, %v2430
      %v2432 = vpop.f32.mrb[0].mxu0
      %v2433 = vpop.f32.mrb[0].mxu0
      %v2434 = vadd.f32 0.0, %v2433
      %v2435 = vpop.f32.mrb[0].mxu0
      %2436 = vmatprep.mubr.bf16.mxu0 0
      %2437 = vmatmul.mubr.bf16.gmra.mrb[0].mxu0 %v2337
      %v2438 = vpop.f32.mrb[0].mxu0
      %v2439 = vadd.f32 0.0, %v2438
      %v2440 = vpop.f32.mrb[0].mxu0
      %v2441 = vpop.f32.mrb[0].mxu0
      %v2442 = vadd.f32 0.0, %v2441
      %v2443 = vpop.f32.mrb[0].mxu0
      %2444 = vmatprep.mubr.bf16.mxu0 0
      %2445 = vmatmul.mubr.bf16.gmra.mrb[0].mxu0 %v2340
      %v2446 = vpop.f32.mrb[0].mxu0
      %v2447 = vadd.f32 0.0, %v2446
      %v2448 = vpop.f32.mrb[0].mxu0
      %v2449 = vpop.f32.mrb[0].mxu0
      %v2450 = vadd.f32 0.0, %v2449
      %v2451 = vpop.f32.mrb[0].mxu0
      %2452 = vmatprep.mubr.bf16.mxu0 0
      %2453 = vmatmul.mubr.bf16.gmra.mrb[0].mxu0 %v2343
      %v2454 = vpop.f32.mrb[0].mxu0
      %v2455 = vadd.f32 0.0, %v2454
      %v2456 = vpop.f32.mrb[0].mxu0
      %v2457 = vpop.f32.mrb[0].mxu0
      %v2458 = vadd.f32 0.0, %v2457
      %v2459 = vpop.f32.mrb[0].mxu0
      %2460 = vmatprep.mubr.bf16.mxu0 0
      %2461 = vmatmul.mubr.bf16.gmra.mrb[0].mxu0 %v2346
      %v2462 = vpop.f32.mrb[0].mxu0
      %v2463 = vadd.f32 0.0, %v2462
      %v2464 = vpop.f32.mrb[0].mxu0
      %v2465 = vpop.f32.mrb[0].mxu0
      %v2466 = vadd.f32 0.0, %v2465
      %v2467 = vpop.f32.mrb[0].mxu0
      %2468 = vdwg.mxu0
      %v2469 = vmul.f32 %v2407, 0.5
      %v2470 = vmul.f32 %v2410, 0.5
      %v2471 = vmul.f32 %v2415, 0.5
      %v2472 = vmul.f32 %v2418, 0.5
      %v2473 = vmul.f32 %v2423, 0.5
      %v2474 = vmul.f32 %v2426, 0.5
      %v2475 = vmul.f32 %v2431, 0.5
      %v2476 = vmul.f32 %v2434, 0.5
      %v2477 = vmul.f32 %v2439, 0.5
      %v2478 = vmul.f32 %v2442, 0.5
      %v2479 = vmul.f32 %v2447, 0.5
      %v2480 = vmul.f32 %v2450, 0.5
      %v2481 = vmul.f32 %v2455, 0.5
      %v2482 = vmul.f32 %v2458, 0.5
      %v2483 = vmul.f32 %v2463, 0.5
      %v2484 = vmul.f32 %v2466, 0.5
      %v2485 = vadd.f32 %v2469, %v1962
      %v2486 = vadd.f32 %v2470, %v1963
      %v2487 = vadd.f32 %v2471, %v1964
      %v2488 = vadd.f32 %v2472, %v1965
      %v2489 = vadd.f32 %v2473, %v1966
      %v2490 = vadd.f32 %v2474, %v1967
      %v2491 = vadd.f32 %v2475, %v1968
      %v2492 = vadd.f32 %v2476, %v1969
      %v2493 = vadd.f32 %v2477, %v1970
      %v2494 = vadd.f32 %v2478, %v1971
      %v2495 = vadd.f32 %v2479, %v1972
      %v2496 = vadd.f32 %v2480, %v1973
      %v2497 = vadd.f32 %v2481, %v1974
      %v2498 = vadd.f32 %v2482, %v1975
      %v2499 = vadd.f32 %v2483, %v1976
      %v2500 = vadd.f32 %v2484, %v1977
      %2501 = vmax.xlane.f32.xlu0 %v2485
      %v2502 = vpop.xlane.xlu0 %2501
      %2503 = vmax.xlane.f32.xlu0 %v2486
      %v2504 = vpop.xlane.xlu0 %2503
      %2505 = vmax.xlane.f32.xlu0 %v2487
      %v2506 = vpop.xlane.xlu0 %2505
      %2507 = vmax.xlane.f32.xlu0 %v2488
      %v2508 = vpop.xlane.xlu0 %2507
      %2509 = vmax.xlane.f32.xlu0 %v2489
      %v2510 = vpop.xlane.xlu0 %2509
      %2511 = vmax.xlane.f32.xlu0 %v2490
      %v2512 = vpop.xlane.xlu0 %2511
      %2513 = vmax.xlane.f32.xlu0 %v2491
      %v2514 = vpop.xlane.xlu0 %2513
      %2515 = vmax.xlane.f32.xlu0 %v2492
      %v2516 = vpop.xlane.xlu0 %2515
      %2517 = vmax.xlane.f32.xlu0 %v2493
      %v2518 = vpop.xlane.xlu0 %2517
      %2519 = vmax.xlane.f32.xlu0 %v2494
      %v2520 = vpop.xlane.xlu0 %2519
      %2521 = vmax.xlane.f32.xlu0 %v2495
      %v2522 = vpop.xlane.xlu0 %2521
      %2523 = vmax.xlane.f32.xlu0 %v2496
      %v2524 = vpop.xlane.xlu0 %2523
      %2525 = vmax.xlane.f32.xlu0 %v2497
      %v2526 = vpop.xlane.xlu0 %2525
      %2527 = vmax.xlane.f32.xlu0 %v2498
      %v2528 = vpop.xlane.xlu0 %2527
      %2529 = vmax.xlane.f32.xlu0 %v2499
      %v2530 = vpop.xlane.xlu0 %2529
      %2531 = vmax.xlane.f32.xlu0 %v2500
      %v2532 = vpop.xlane.xlu0 %2531
      %v2533 = vsub.f32 %v2485, %v2502
      %v2534 = vsub.f32 %v2486, %v2504
      %v2535 = vsub.f32 %v2487, %v2506
      %v2536 = vsub.f32 %v2488, %v2508
      %v2537 = vsub.f32 %v2489, %v2510
      %v2538 = vsub.f32 %v2490, %v2512
      %v2539 = vsub.f32 %v2491, %v2514
      %v2540 = vsub.f32 %v2492, %v2516
      %v2541 = vsub.f32 %v2493, %v2518
      %v2542 = vsub.f32 %v2494, %v2520
      %v2543 = vsub.f32 %v2495, %v2522
      %v2544 = vsub.f32 %v2496, %v2524
      %v2545 = vsub.f32 %v2497, %v2526
      %v2546 = vsub.f32 %v2498, %v2528
      %v2547 = vsub.f32 %v2499, %v2530
      %v2548 = vsub.f32 %v2500, %v2532
      %v2549 = vmul.f32 %v2533, 1.442695
      %v2550 = vpow.pop %v2549
      %v2551 = vmul.f32 %v2534, 1.442695
      %v2552 = vpow.pop %v2551
      %v2553 = vmul.f32 %v2535, 1.442695
      %v2554 = vpow.pop %v2553
      %v2555 = vmul.f32 %v2536, 1.442695
      %v2556 = vpow.pop %v2555
      %v2557 = vmul.f32 %v2537, 1.442695
      %v2558 = vpow.pop %v2557
      %v2559 = vmul.f32 %v2538, 1.442695
      %v2560 = vpow.pop %v2559
      %v2561 = vmul.f32 %v2539, 1.442695
      %v2562 = vpow.pop %v2561
      %v2563 = vmul.f32 %v2540, 1.442695
      %v2564 = vpow.pop %v2563
      %v2565 = vmul.f32 %v2541, 1.442695
      %v2566 = vpow.pop %v2565
      %v2567 = vmul.f32 %v2542, 1.442695
      %v2568 = vpow.pop %v2567
      %v2569 = vmul.f32 %v2543, 1.442695
      %v2570 = vpow.pop %v2569
      %v2571 = vmul.f32 %v2544, 1.442695
      %v2572 = vpow.pop %v2571
      %v2573 = vmul.f32 %v2545, 1.442695
      %v2574 = vpow.pop %v2573
      %v2575 = vmul.f32 %v2546, 1.442695
      %v2576 = vpow.pop %v2575
      %v2577 = vmul.f32 %v2547, 1.442695
      %v2578 = vpow.pop %v2577
      %v2579 = vmul.f32 %v2548, 1.442695
      %v2580 = vpow.pop %v2579
      %2581 = vadd.xlane.f32.xlu0 %v2550
      %v2582 = vpop.xlane.xlu0 %2581
      %2583 = vadd.xlane.f32.xlu0 %v2552
      %v2584 = vpop.xlane.xlu0 %2583
      %2585 = vadd.xlane.f32.xlu0 %v2554
      %v2586 = vpop.xlane.xlu0 %2585
      %2587 = vadd.xlane.f32.xlu0 %v2556
      %v2588 = vpop.xlane.xlu0 %2587
      %2589 = vadd.xlane.f32.xlu0 %v2558
      %v2590 = vpop.xlane.xlu0 %2589
      %2591 = vadd.xlane.f32.xlu0 %v2560
      %v2592 = vpop.xlane.xlu0 %2591
      %2593 = vadd.xlane.f32.xlu0 %v2562
      %v2594 = vpop.xlane.xlu0 %2593
      %2595 = vadd.xlane.f32.xlu0 %v2564
      %v2596 = vpop.xlane.xlu0 %2595
      %2597 = vadd.xlane.f32.xlu0 %v2566
      %v2598 = vpop.xlane.xlu0 %2597
      %2599 = vadd.xlane.f32.xlu0 %v2568
      %v2600 = vpop.xlane.xlu0 %2599
      %2601 = vadd.xlane.f32.xlu0 %v2570
      %v2602 = vpop.xlane.xlu0 %2601
      %2603 = vadd.xlane.f32.xlu0 %v2572
      %v2604 = vpop.xlane.xlu0 %2603
      %2605 = vadd.xlane.f32.xlu0 %v2574
      %v2606 = vpop.xlane.xlu0 %2605
      %2607 = vadd.xlane.f32.xlu0 %v2576
      %v2608 = vpop.xlane.xlu0 %2607
      %2609 = vadd.xlane.f32.xlu0 %v2578
      %v2610 = vpop.xlane.xlu0 %2609
      %2611 = vadd.xlane.f32.xlu0 %v2580
      %v2612 = vpop.xlane.xlu0 %2611
      %v2613 = vrcp.pop %v2582
      %v2614 = vrcp.pop %v2584
      %v2615 = vrcp.pop %v2586
      %v2616 = vrcp.pop %v2588
      %v2617 = vrcp.pop %v2590
      %v2618 = vrcp.pop %v2592
      %v2619 = vrcp.pop %v2594
      %v2620 = vrcp.pop %v2596
      %v2621 = vrcp.pop %v2598
      %v2622 = vrcp.pop %v2600
      %v2623 = vrcp.pop %v2602
      %v2624 = vrcp.pop %v2604
      %v2625 = vrcp.pop %v2606
      %v2626 = vrcp.pop %v2608
      %v2627 = vrcp.pop %v2610
      %v2628 = vrcp.pop %v2612
      %v2629 = vmul.f32 %v2550, %v2613
      %v2630 = vmul.f32 %v2552, %v2614
      %v2631 = vmul.f32 %v2554, %v2615
      %v2632 = vmul.f32 %v2556, %v2616
      %v2633 = vmul.f32 %v2558, %v2617
      %v2634 = vmul.f32 %v2560, %v2618
      %v2635 = vmul.f32 %v2562, %v2619
      %v2636 = vmul.f32 %v2564, %v2620
      %v2637 = vmul.f32 %v2566, %v2621
      %v2638 = vmul.f32 %v2568, %v2622
      %v2639 = vmul.f32 %v2570, %v2623
      %v2640 = vmul.f32 %v2572, %v2624
      %v2641 = vmul.f32 %v2574, %v2625
      %v2642 = vmul.f32 %v2576, %v2626
      %v2643 = vmul.f32 %v2578, %v2627
      %v2644 = vmul.f32 %v2580, %v2628
      %v2645 = vpack.c.bf16 %v2630, %v2629
      %v2646 = vpack.c.bf16 %v2632, %v2631
      %v2647 = vpack.c.bf16 %v2634, %v2633
      %v2648 = vpack.c.bf16 %v2636, %v2635
      %v2649 = vpack.c.bf16 %v2638, %v2637
      %v2650 = vpack.c.bf16 %v2640, %v2639
      %v2651 = vpack.c.bf16 %v2642, %v2641
      %v2652 = vpack.c.bf16 %v2644, %v2643
      %2653 = vrot.lane.b32.xlu0 %v1792, 108
      %v2654 = vpop.permute.xlu0 %2653
      %2655 = vrot.lane.b32.xlu0 %v1793, 108
      %v2656 = vpop.permute.xlu0 %2655
      %2657 = vrot.lane.b32.xlu0 %v1794, 108
      %v2658 = vpop.permute.xlu0 %2657
      %2659 = vrot.lane.b32.xlu0 %v1795, 108
      %v2660 = vpop.permute.xlu0 %2659
      %2661 = vrot.lane.b32.xlu0 %v1796, 108
      %v2662 = vpop.permute.xlu0 %2661
      %2663 = vrot.lane.b32.xlu0 %v1797, 108
      %v2664 = vpop.permute.xlu0 %2663
      %2665 = vrot.lane.b32.xlu0 %v1798, 108
      %v2666 = vpop.permute.xlu0 %2665
      %2667 = vrot.lane.b32.xlu0 %v1799, 108
      %v2668 = vpop.permute.xlu0 %2667
      %2677 = vmatprep.subr.bf16.mxu0 0
      %2678 = vmatpush1.bf16.msra.mxu0 %v2654
      %2679 = vmatprep.subr.bf16.mxu0 0
      %2680 = vmatpush1.bf16.msra.mxu0 %v2656
      %2681 = vmatprep.subr.bf16.mxu0 0
      %2682 = vmatpush1.bf16.msra.mxu0 %v2658
      %2683 = vmatprep.subr.bf16.mxu0 0
      %2684 = vmatpush1.bf16.msra.mxu0 %v2660
      %2685 = vmatprep.subr.bf16.mxu0 0
      %2686 = vmatpush1.bf16.msra.mxu0 %v2662
      %2687 = vmatprep.subr.bf16.mxu0 0
      %2688 = vmatpush1.bf16.msra.mxu0 %v2664
      %2689 = vmatprep.subr.bf16.mxu0 0
      %2690 = vmatpush1.bf16.msra.mxu0 %v2666
      %2691 = vmatprep.subr.bf16.mxu0 0
      %2692 = vmatpush1.bf16.msra.mxu0 %v2668
      %2693 = vmatprep.subr.bf16.mxu0 0
      %2694 = vmatpush1.bf16.msra.mxu0 0
      %2695 = vmatprep.subr.bf16.mxu0 0
      %2696 = vmatpush1.bf16.msra.mxu0 0
      %2697 = vmatprep.subr.bf16.mxu0 0
      %2698 = vmatpush1.bf16.msra.mxu0 0
      %2699 = vmatprep.subr.bf16.mxu0 0
      %2700 = vmatpush1.bf16.msra.mxu0 0
      %2701 = vmatprep.subr.bf16.mxu0 0
      %2702 = vmatpush1.bf16.msra.mxu0 0
      %2703 = vmatprep.subr.bf16.mxu0 0
      %2704 = vmatpush1.bf16.msra.mxu0 0
      %2705 = vmatprep.subr.bf16.mxu0 0
      %2706 = vmatpush1.bf16.msra.mxu0 0
      %2707 = vmatprep.subr.bf16.mxu0 0
      %2708 = vmatpush1.bf16.msra.mxu0 0
      %2709 = vmatprep.mubr.bf16.mxu0 0
      %2710 = vmatmul.mubr.bf16.gmra.mrb[0].mxu0 %v2645
      %v2711 = vpop.f32.mrb[0].mxu0
      %v2712 = vadd.f32 0.0, %v2711
      %v2713 = vpop.f32.mrb[0].mxu0
      %v2714 = vpop.f32.mrb[0].mxu0
      %v2715 = vadd.f32 0.0, %v2714
      %v2716 = vpop.f32.mrb[0].mxu0
      %2717 = vmatprep.mubr.bf16.mxu0 0
      %2718 = vmatmul.mubr.bf16.gmra.mrb[0].mxu0 %v2646
      %v2719 = vpop.f32.mrb[0].mxu0
      %v2720 = vadd.f32 0.0, %v2719
      %v2721 = vpop.f32.mrb[0].mxu0
      %v2722 = vpop.f32.mrb[0].mxu0
      %v2723 = vadd.f32 0.0, %v2722
      %v2724 = vpop.f32.mrb[0].mxu0
      %2725 = vmatprep.mubr.bf16.mxu0 0
      %2726 = vmatmul.mubr.bf16.gmra.mrb[0].mxu0 %v2647
      %v2727 = vpop.f32.mrb[0].mxu0
      %v2728 = vadd.f32 0.0, %v2727
      %v2729 = vpop.f32.mrb[0].mxu0
      %v2730 = vpop.f32.mrb[0].mxu0
      %v2731 = vadd.f32 0.0, %v2730
      %v2732 = vpop.f32.mrb[0].mxu0
      %2733 = vmatprep.mubr.bf16.mxu0 0
      %2734 = vmatmul.mubr.bf16.gmra.mrb[0].mxu0 %v2648
      %v2735 = vpop.f32.mrb[0].mxu0
      %v2736 = vadd.f32 0.0, %v2735
      %v2737 = vpop.f32.mrb[0].mxu0
      %v2738 = vpop.f32.mrb[0].mxu0
      %v2739 = vadd.f32 0.0, %v2738
      %v2740 = vpop.f32.mrb[0].mxu0
      %2741 = vmatprep.mubr.bf16.mxu0 0
      %2742 = vmatmul.mubr.bf16.gmra.mrb[0].mxu0 %v2649
      %v2743 = vpop.f32.mrb[0].mxu0
      %v2744 = vadd.f32 0.0, %v2743
      %v2745 = vpop.f32.mrb[0].mxu0
      %v2746 = vpop.f32.mrb[0].mxu0
      %v2747 = vadd.f32 0.0, %v2746
      %v2748 = vpop.f32.mrb[0].mxu0
      %2749 = vmatprep.mubr.bf16.mxu0 0
      %2750 = vmatmul.mubr.bf16.gmra.mrb[0].mxu0 %v2650
      %v2751 = vpop.f32.mrb[0].mxu0
      %v2752 = vadd.f32 0.0, %v2751
      %v2753 = vpop.f32.mrb[0].mxu0
      %v2754 = vpop.f32.mrb[0].mxu0
      %v2755 = vadd.f32 0.0, %v2754
      %v2756 = vpop.f32.mrb[0].mxu0
      %2757 = vmatprep.mubr.bf16.mxu0 0
      %2758 = vmatmul.mubr.bf16.gmra.mrb[0].mxu0 %v2651
      %v2759 = vpop.f32.mrb[0].mxu0
      %v2760 = vadd.f32 0.0, %v2759
      %v2761 = vpop.f32.mrb[0].mxu0
      %v2762 = vpop.f32.mrb[0].mxu0
      %v2763 = vadd.f32 0.0, %v2762
      %v2764 = vpop.f32.mrb[0].mxu0
      %2765 = vmatprep.mubr.bf16.mxu0 0
      %2766 = vmatmul.mubr.bf16.gmra.mrb[0].mxu0 %v2652
      %v2767 = vpop.f32.mrb[0].mxu0
      %v2768 = vadd.f32 0.0, %v2767
      %v2769 = vpop.f32.mrb[0].mxu0
      %v2770 = vpop.f32.mrb[0].mxu0
      %v2771 = vadd.f32 0.0, %v2770
      %v2772 = vpop.f32.mrb[0].mxu0
      %2773 = vdwg.mxu0
      %s2774 = scalar_lea.vmem %s10, 2
      %v2775 = vld [vmem:[%s2774] sm:$0x3]
      %v2776 = vpack.c.bf16 %v2715, %v2712
      %v2777 = vpack.c.bf16 %v2723, %v2720
      %v2778 = vpack.c.bf16 %v2731, %v2728
      %v2779 = vpack.c.bf16 %v2739, %v2736
      %v2780 = vpack.c.bf16 %v2747, %v2744
      %v2781 = vpack.c.bf16 %v2755, %v2752
      %v2782 = vpack.c.bf16 %v2763, %v2760
      %v2783 = vpack.c.bf16 %v2771, %v2768
      %v2785 = vsel %vm1800, %v2776, 0
      %v2788 = vsel %vm1800, %v2777, 0
      %v2791 = vsel %vm1800, %v2778, 0
      %v2794 = vsel %vm1800, %v2779, 0
      %v2797 = vsel %vm1800, %v2780, 0
      %v2800 = vsel %vm1800, %v2781, 0
      %v2803 = vsel %vm1800, %v2782, 0
      %v2806 = vsel %vm1800, %v2783, 0
      %vm2808 = vcmask 1041408
      %v2810 = vsel %vm2808, %v2775, 0
      %2812 = vmatprep.subr.bf16.mxu0 0
      %2813 = vmatpush1.bf16.msra.mxu0 %v2810
      %2814 = vmatprep.subr.bf16.mxu0 0
      %2815 = vmatpush1.bf16.msra.mxu0 0
      %2816 = vmatprep.subr.bf16.mxu0 0
      %2817 = vmatpush1.bf16.msra.mxu0 0
      %2818 = vmatprep.subr.bf16.mxu0 0
      %2819 = vmatpush1.bf16.msra.mxu0 0
      %2820 = vmatprep.subr.bf16.mxu0 0
      %2821 = vmatpush1.bf16.msra.mxu0 0
      %2822 = vmatprep.subr.bf16.mxu0 0
      %2823 = vmatpush1.bf16.msra.mxu0 0
      %2824 = vmatprep.subr.bf16.mxu0 0
      %2825 = vmatpush1.bf16.msra.mxu0 0
      %2826 = vmatprep.subr.bf16.mxu0 0
      %2827 = vmatpush1.bf16.msra.mxu0 0
      %2828 = vmatprep.subr.bf16.mxu0 0
      %2829 = vmatpush1.bf16.msra.mxu0 0
      %2830 = vmatprep.subr.bf16.mxu0 0
      %2831 = vmatpush1.bf16.msra.mxu0 0
      %2832 = vmatprep.subr.bf16.mxu0 0
      %2833 = vmatpush1.bf16.msra.mxu0 0
      %2834 = vmatprep.subr.bf16.mxu0 0
      %2835 = vmatpush1.bf16.msra.mxu0 0
      %2836 = vmatprep.subr.bf16.mxu0 0
      %2837 = vmatpush1.bf16.msra.mxu0 0
      %2838 = vmatprep.subr.bf16.mxu0 0
      %2839 = vmatpush1.bf16.msra.mxu0 0
      %2840 = vmatprep.subr.bf16.mxu0 0
      %2841 = vmatpush1.bf16.msra.mxu0 0
      %2842 = vmatprep.subr.bf16.mxu0 0
      %2843 = vmatpush1.bf16.msra.mxu0 0
      %2844 = vmatprep.mubr.bf16.mxu0 0
      %2845 = vmatmul.mubr.bf16.gmra.mrb[0].mxu0 %v2785
      %v2846 = vpop.f32.mrb[0].mxu0
      %v2847 = vadd.f32 0.0, %v2846
      %v2848 = vpop.f32.mrb[0].mxu0
      %v2849 = vpop.f32.mrb[0].mxu0
      %v2850 = vadd.f32 0.0, %v2849
      %v2851 = vpop.f32.mrb[0].mxu0
      %2852 = vmatprep.mubr.bf16.mxu0 0
      %2853 = vmatmul.mubr.bf16.gmra.mrb[0].mxu0 %v2788
      %v2854 = vpop.f32.mrb[0].mxu0
      %v2855 = vadd.f32 0.0, %v2854
      %v2856 = vpop.f32.mrb[0].mxu0
      %v2857 = vpop.f32.mrb[0].mxu0
      %v2858 = vadd.f32 0.0, %v2857
      %v2859 = vpop.f32.mrb[0].mxu0
      %2860 = vmatprep.mubr.bf16.mxu0 0
      %2861 = vmatmul.mubr.bf16.gmra.mrb[0].mxu0 %v2791
      %v2862 = vpop.f32.mrb[0].mxu0
      %v2863 = vadd.f32 0.0, %v2862
      %v2864 = vpop.f32.mrb[0].mxu0
      %v2865 = vpop.f32.mrb[0].mxu0
      %v2866 = vadd.f32 0.0, %v2865
      %v2867 = vpop.f32.mrb[0].mxu0
      %2868 = vmatprep.mubr.bf16.mxu0 0
      %2869 = vmatmul.mubr.bf16.gmra.mrb[0].mxu0 %v2794
      %v2870 = vpop.f32.mrb[0].mxu0
      %v2871 = vadd.f32 0.0, %v2870
      %v2872 = vpop.f32.mrb[0].mxu0
      %v2873 = vpop.f32.mrb[0].mxu0
      %v2874 = vadd.f32 0.0, %v2873
      %v2875 = vpop.f32.mrb[0].mxu0
      %2876 = vmatprep.mubr.bf16.mxu0 0
      %2877 = vmatmul.mubr.bf16.gmra.mrb[0].mxu0 %v2797
      %v2878 = vpop.f32.mrb[0].mxu0
      %v2879 = vadd.f32 0.0, %v2878
      %v2880 = vpop.f32.mrb[0].mxu0
      %v2881 = vpop.f32.mrb[0].mxu0
      %v2882 = vadd.f32 0.0, %v2881
      %v2883 = vpop.f32.mrb[0].mxu0
      %2884 = vmatprep.mubr.bf16.mxu0 0
      %2885 = vmatmul.mubr.bf16.gmra.mrb[0].mxu0 %v2800
      %v2886 = vpop.f32.mrb[0].mxu0
      %v2887 = vadd.f32 0.0, %v2886
      %v2888 = vpop.f32.mrb[0].mxu0
      %v2889 = vpop.f32.mrb[0].mxu0
      %v2890 = vadd.f32 0.0, %v2889
      %v2891 = vpop.f32.mrb[0].mxu0
      %2892 = vmatprep.mubr.bf16.mxu0 0
      %2893 = vmatmul.mubr.bf16.gmra.mrb[0].mxu0 %v2803
      %v2894 = vpop.f32.mrb[0].mxu0
      %v2895 = vadd.f32 0.0, %v2894
      %v2896 = vpop.f32.mrb[0].mxu0
      %v2897 = vpop.f32.mrb[0].mxu0
      %v2898 = vadd.f32 0.0, %v2897
      %v2899 = vpop.f32.mrb[0].mxu0
      %2900 = vmatprep.mubr.bf16.mxu0 0
      %2901 = vmatmul.mubr.bf16.gmra.mrb[0].mxu0 %v2806
      %v2902 = vpop.f32.mrb[0].mxu0
      %v2903 = vadd.f32 0.0, %v2902
      %v2904 = vpop.f32.mrb[0].mxu0
      %v2905 = vpop.f32.mrb[0].mxu0
      %v2906 = vadd.f32 0.0, %v2905
      %v2907 = vpop.f32.mrb[0].mxu0
      %2908 = vdwg.mxu0
      %v2910 = vsel %vm1800, %v2276, 0
      %v2913 = vsel %vm1800, %v2277, 0
      %v2916 = vsel %vm1800, %v2278, 0
      %v2919 = vsel %vm1800, %v2279, 0
      %v2922 = vsel %vm1800, %v2280, 0
      %v2925 = vsel %vm1800, %v2281, 0
      %v2928 = vsel %vm1800, %v2282, 0
      %v2931 = vsel %vm1800, %v2283, 0
      %v2934 = vsel %vm2808, %v2275, 0
      %2936 = vmatprep.subr.bf16.mxu0 0
      %2937 = vmatpush1.bf16.msra.mxu0 %v2934
      %2938 = vmatprep.subr.bf16.mxu0 0
      %2939 = vmatpush1.bf16.msra.mxu0 0
      %2940 = vmatprep.subr.bf16.mxu0 0
      %2941 = vmatpush1.bf16.msra.mxu0 0
      %2942 = vmatprep.subr.bf16.mxu0 0
      %2943 = vmatpush1.bf16.msra.mxu0 0
      %2944 = vmatprep.subr.bf16.mxu0 0
      %2945 = vmatpush1.bf16.msra.mxu0 0
      %2946 = vmatprep.subr.bf16.mxu0 0
      %2947 = vmatpush1.bf16.msra.mxu0 0
      %2948 = vmatprep.subr.bf16.mxu0 0
      %2949 = vmatpush1.bf16.msra.mxu0 0
      %2950 = vmatprep.subr.bf16.mxu0 0
      %2951 = vmatpush1.bf16.msra.mxu0 0
      %2952 = vmatprep.subr.bf16.mxu0 0
      %2953 = vmatpush1.bf16.msra.mxu0 0
      %2954 = vmatprep.subr.bf16.mxu0 0
      %2955 = vmatpush1.bf16.msra.mxu0 0
      %2956 = vmatprep.subr.bf16.mxu0 0
      %2957 = vmatpush1.bf16.msra.mxu0 0
      %2958 = vmatprep.subr.bf16.mxu0 0
      %2959 = vmatpush1.bf16.msra.mxu0 0
      %2960 = vmatprep.subr.bf16.mxu0 0
      %2961 = vmatpush1.bf16.msra.mxu0 0
      %2962 = vmatprep.subr.bf16.mxu0 0
      %2963 = vmatpush1.bf16.msra.mxu0 0
      %2964 = vmatprep.subr.bf16.mxu0 0
      %2965 = vmatpush1.bf16.msra.mxu0 0
      %2966 = vmatprep.subr.bf16.mxu0 0
      %2967 = vmatpush1.bf16.msra.mxu0 0
      %2968 = vmatprep.mubr.bf16.mxu0 0
      %2969 = vmatmul.mubr.bf16.gmra.mrb[0].mxu0 %v2910
      %v2970 = vpop.f32.mrb[0].mxu0
      %v2971 = vadd.f32 %v2847, %v2970
      %v2972 = vpop.f32.mrb[0].mxu0
      %v2973 = vpop.f32.mrb[0].mxu0
      %v2974 = vadd.f32 %v2850, %v2973
      %v2975 = vpop.f32.mrb[0].mxu0
      %2976 = vmatprep.mubr.bf16.mxu0 0
      %2977 = vmatmul.mubr.bf16.gmra.mrb[0].mxu0 %v2913
      %v2978 = vpop.f32.mrb[0].mxu0
      %v2979 = vadd.f32 %v2855, %v2978
      %v2980 = vpop.f32.mrb[0].mxu0
      %v2981 = vpop.f32.mrb[0].mxu0
      %v2982 = vadd.f32 %v2858, %v2981
      %v2983 = vpop.f32.mrb[0].mxu0
      %2984 = vmatprep.mubr.bf16.mxu0 0
      %2985 = vmatmul.mubr.bf16.gmra.mrb[0].mxu0 %v2916
      %v2986 = vpop.f32.mrb[0].mxu0
      %v2987 = vadd.f32 %v2863, %v2986
      %v2988 = vpop.f32.mrb[0].mxu0
      %v2989 = vpop.f32.mrb[0].mxu0
      %v2990 = vadd.f32 %v2866, %v2989
      %v2991 = vpop.f32.mrb[0].mxu0
      %2992 = vmatprep.mubr.bf16.mxu0 0
      %2993 = vmatmul.mubr.bf16.gmra.mrb[0].mxu0 %v2919
      %v2994 = vpop.f32.mrb[0].mxu0
      %v2995 = vadd.f32 %v2871, %v2994
      %v2996 = vpop.f32.mrb[0].mxu0
      %v2997 = vpop.f32.mrb[0].mxu0
      %v2998 = vadd.f32 %v2874, %v2997
      %v2999 = vpop.f32.mrb[0].mxu0
      %3000 = vmatprep.mubr.bf16.mxu0 0
      %3001 = vmatmul.mubr.bf16.gmra.mrb[0].mxu0 %v2922
      %v3002 = vpop.f32.mrb[0].mxu0
      %v3003 = vadd.f32 %v2879, %v3002
      %v3004 = vpop.f32.mrb[0].mxu0
      %v3005 = vpop.f32.mrb[0].mxu0
      %v3006 = vadd.f32 %v2882, %v3005
      %v3007 = vpop.f32.mrb[0].mxu0
      %3008 = vmatprep.mubr.bf16.mxu0 0
      %3009 = vmatmul.mubr.bf16.gmra.mrb[0].mxu0 %v2925
      %v3010 = vpop.f32.mrb[0].mxu0
      %v3011 = vadd.f32 %v2887, %v3010
      %v3012 = vpop.f32.mrb[0].mxu0
      %v3013 = vpop.f32.mrb[0].mxu0
      %v3014 = vadd.f32 %v2890, %v3013
      %v3015 = vpop.f32.mrb[0].mxu0
      %3016 = vmatprep.mubr.bf16.mxu0 0
      %3017 = vmatmul.mubr.bf16.gmra.mrb[0].mxu0 %v2928
      %v3018 = vpop.f32.mrb[0].mxu0
      %v3019 = vadd.f32 %v2895, %v3018
      %v3020 = vpop.f32.mrb[0].mxu0
      %v3021 = vpop.f32.mrb[0].mxu0
      %v3022 = vadd.f32 %v2898, %v3021
      %v3023 = vpop.f32.mrb[0].mxu0
      %3024 = vmatprep.mubr.bf16.mxu0 0
      %3025 = vmatmul.mubr.bf16.gmra.mrb[0].mxu0 %v2931
      %v3026 = vpop.f32.mrb[0].mxu0
      %v3027 = vadd.f32 %v2903, %v3026
      %v3028 = vpop.f32.mrb[0].mxu0
      %v3029 = vpop.f32.mrb[0].mxu0
      %v3030 = vadd.f32 %v2906, %v3029
      %v3031 = vpop.f32.mrb[0].mxu0
      %3032 = vdwg.mxu0
      %3033 = vrot.lane.b32.xlu0 %v1784, 120
      %v3034 = vpop.permute.xlu0 %3033
      %3035 = vrot.lane.b32.xlu0 %v1785, 120
      %v3036 = vpop.permute.xlu0 %3035
      %3037 = vrot.lane.b32.xlu0 %v1786, 120
      %v3038 = vpop.permute.xlu0 %3037
      %3039 = vrot.lane.b32.xlu0 %v1787, 120
      %v3040 = vpop.permute.xlu0 %3039
      %3041 = vrot.lane.b32.xlu0 %v1788, 120
      %v3042 = vpop.permute.xlu0 %3041
      %3043 = vrot.lane.b32.xlu0 %v1789, 120
      %v3044 = vpop.permute.xlu0 %3043
      %3045 = vrot.lane.b32.xlu0 %v1790, 120
      %v3046 = vpop.permute.xlu0 %3045
      %3047 = vrot.lane.b32.xlu0 %v1791, 120
      %v3048 = vpop.permute.xlu0 %3047
      %3049 = vrot.lane.b32.xlu0 %v1792, 120
      %v3050 = vpop.permute.xlu0 %3049
      %3051 = vrot.lane.b32.xlu0 %v1793, 120
      %v3052 = vpop.permute.xlu0 %3051
      %3053 = vrot.lane.b32.xlu0 %v1794, 120
      %v3054 = vpop.permute.xlu0 %3053
      %3055 = vrot.lane.b32.xlu0 %v1795, 120
      %v3056 = vpop.permute.xlu0 %3055
      %3057 = vrot.lane.b32.xlu0 %v1796, 120
      %v3058 = vpop.permute.xlu0 %3057
      %3059 = vrot.lane.b32.xlu0 %v1797, 120
      %v3060 = vpop.permute.xlu0 %3059
      %3061 = vrot.lane.b32.xlu0 %v1798, 120
      %v3062 = vpop.permute.xlu0 %3061
      %3063 = vrot.lane.b32.xlu0 %v1799, 120
      %v3064 = vpop.permute.xlu0 %3063
      %v3066 = vsel %vm1800, %v3034, 0
      %v3069 = vsel %vm1800, %v3036, 0
      %v3072 = vsel %vm1800, %v3038, 0
      %v3075 = vsel %vm1800, %v3040, 0
      %v3078 = vsel %vm1800, %v3042, 0
      %v3081 = vsel %vm1800, %v3044, 0
      %v3084 = vsel %vm1800, %v3046, 0
      %v3087 = vsel %vm1800, %v3048, 0
      %v3090 = vsel %vm1800, %v3050, 0
      %v3093 = vsel %vm1800, %v3052, 0
      %v3096 = vsel %vm1800, %v3054, 0
      %v3099 = vsel %vm1800, %v3056, 0
      %v3102 = vsel %vm1800, %v3058, 0
      %v3105 = vsel %vm1800, %v3060, 0
      %v3108 = vsel %vm1800, %v3062, 0
      %v3111 = vsel %vm1800, %v3064, 0
      %3113 = vmatprep.subr.bf16.mxu0 0
      %3114 = vmatpush1.bf16.xpose.msra.mxu0 %v3090
      %3115 = vmatprep.subr.bf16.mxu0 0
      %3116 = vmatpush1.bf16.xpose.msra.mxu0 %v3093
      %3117 = vmatprep.subr.bf16.mxu0 0
      %3118 = vmatpush1.bf16.xpose.msra.mxu0 %v3096
      %3119 = vmatprep.subr.bf16.mxu0 0
      %3120 = vmatpush1.bf16.xpose.msra.mxu0 %v3099
      %3121 = vmatprep.subr.bf16.mxu0 0
      %3122 = vmatpush1.bf16.xpose.msra.mxu0 %v3102
      %3123 = vmatprep.subr.bf16.mxu0 0
      %3124 = vmatpush1.bf16.xpose.msra.mxu0 %v3105
      %3125 = vmatprep.subr.bf16.mxu0 0
      %3126 = vmatpush1.bf16.xpose.msra.mxu0 %v3108
      %3127 = vmatprep.subr.bf16.mxu0 0
      %3128 = vmatpush1.bf16.xpose.msra.mxu0 %v3111
      %3129 = vmatprep.subr.bf16.mxu0 0
      %3130 = vmatpush1.bf16.xpose.msra.mxu0 0
      %3131 = vmatprep.subr.bf16.mxu0 0
      %3132 = vmatpush1.bf16.xpose.msra.mxu0 0
      %3133 = vmatprep.subr.bf16.mxu0 0
      %3134 = vmatpush1.bf16.xpose.msra.mxu0 0
      %3135 = vmatprep.subr.bf16.mxu0 0
      %3136 = vmatpush1.bf16.xpose.msra.mxu0 0
      %3137 = vmatprep.subr.bf16.mxu0 0
      %3138 = vmatpush1.bf16.xpose.msra.mxu0 0
      %3139 = vmatprep.subr.bf16.mxu0 0
      %3140 = vmatpush1.bf16.xpose.msra.mxu0 0
      %3141 = vmatprep.subr.bf16.mxu0 0
      %3142 = vmatpush1.bf16.xpose.msra.mxu0 0
      %3143 = vmatprep.subr.bf16.mxu0 0
      %3144 = vmatpush1.bf16.xpose.msra.mxu0 0
      %3145 = vmatprep.mubr.bf16.mxu0 0
      %3146 = vmatmul.mubr.bf16.gmra.mrb[0].mxu0 %v3066
      %v3147 = vpop.f32.mrb[0].mxu0
      %v3148 = vadd.f32 0.0, %v3147
      %v3149 = vpop.f32.mrb[0].mxu0
      %v3150 = vpop.f32.mrb[0].mxu0
      %v3151 = vadd.f32 0.0, %v3150
      %v3152 = vpop.f32.mrb[0].mxu0
      %3153 = vmatprep.mubr.bf16.mxu0 0
      %3154 = vmatmul.mubr.bf16.gmra.mrb[0].mxu0 %v3069
      %v3155 = vpop.f32.mrb[0].mxu0
      %v3156 = vadd.f32 0.0, %v3155
      %v3157 = vpop.f32.mrb[0].mxu0
      %v3158 = vpop.f32.mrb[0].mxu0
      %v3159 = vadd.f32 0.0, %v3158
      %v3160 = vpop.f32.mrb[0].mxu0
      %3161 = vmatprep.mubr.bf16.mxu0 0
      %3162 = vmatmul.mubr.bf16.gmra.mrb[0].mxu0 %v3072
      %v3163 = vpop.f32.mrb[0].mxu0
      %v3164 = vadd.f32 0.0, %v3163
      %v3165 = vpop.f32.mrb[0].mxu0
      %v3166 = vpop.f32.mrb[0].mxu0
      %v3167 = vadd.f32 0.0, %v3166
      %v3168 = vpop.f32.mrb[0].mxu0
      %3169 = vmatprep.mubr.bf16.mxu0 0
      %3170 = vmatmul.mubr.bf16.gmra.mrb[0].mxu0 %v3075
      %v3171 = vpop.f32.mrb[0].mxu0
      %v3172 = vadd.f32 0.0, %v3171
      %v3173 = vpop.f32.mrb[0].mxu0
      %v3174 = vpop.f32.mrb[0].mxu0
      %v3175 = vadd.f32 0.0, %v3174
      %v3176 = vpop.f32.mrb[0].mxu0
      %3177 = vmatprep.mubr.bf16.mxu0 0
      %3178 = vmatmul.mubr.bf16.gmra.mrb[0].mxu0 %v3078
      %v3179 = vpop.f32.mrb[0].mxu0
      %v3180 = vadd.f32 0.0, %v3179
      %v3181 = vpop.f32.mrb[0].mxu0
      %v3182 = vpop.f32.mrb[0].mxu0
      %v3183 = vadd.f32 0.0, %v3182
      %v3184 = vpop.f32.mrb[0].mxu0
      %3185 = vmatprep.mubr.bf16.mxu0 0
      %3186 = vmatmul.mubr.bf16.gmra.mrb[0].mxu0 %v3081
      %v3187 = vpop.f32.mrb[0].mxu0
      %v3188 = vadd.f32 0.0, %v3187
      %v3189 = vpop.f32.mrb[0].mxu0
      %v3190 = vpop.f32.mrb[0].mxu0
      %v3191 = vadd.f32 0.0, %v3190
      %v3192 = vpop.f32.mrb[0].mxu0
      %3193 = vmatprep.mubr.bf16.mxu0 0
      %3194 = vmatmul.mubr.bf16.gmra.mrb[0].mxu0 %v3084
      %v3195 = vpop.f32.mrb[0].mxu0
      %v3196 = vadd.f32 0.0, %v3195
      %v3197 = vpop.f32.mrb[0].mxu0
      %v3198 = vpop.f32.mrb[0].mxu0
      %v3199 = vadd.f32 0.0, %v3198
      %v3200 = vpop.f32.mrb[0].mxu0
      %3201 = vmatprep.mubr.bf16.mxu0 0
      %3202 = vmatmul.mubr.bf16.gmra.mrb[0].mxu0 %v3087
      %v3203 = vpop.f32.mrb[0].mxu0
      %v3204 = vadd.f32 0.0, %v3203
      %v3205 = vpop.f32.mrb[0].mxu0
      %v3206 = vpop.f32.mrb[0].mxu0
      %v3207 = vadd.f32 0.0, %v3206
      %v3208 = vpop.f32.mrb[0].mxu0
      %3209 = vdwg.mxu0
      %v3210 = vmul.f32 %v3148, 0.5
      %v3211 = vmul.f32 %v3151, 0.5
      %v3212 = vmul.f32 %v3156, 0.5
      %v3213 = vmul.f32 %v3159, 0.5
      %v3214 = vmul.f32 %v3164, 0.5
      %v3215 = vmul.f32 %v3167, 0.5
      %v3216 = vmul.f32 %v3172, 0.5
      %v3217 = vmul.f32 %v3175, 0.5
      %v3218 = vmul.f32 %v3180, 0.5
      %v3219 = vmul.f32 %v3183, 0.5
      %v3220 = vmul.f32 %v3188, 0.5
      %v3221 = vmul.f32 %v3191, 0.5
      %v3222 = vmul.f32 %v3196, 0.5
      %v3223 = vmul.f32 %v3199, 0.5
      %v3224 = vmul.f32 %v3204, 0.5
      %v3225 = vmul.f32 %v3207, 0.5
      %v3226 = vadd.f32 %v3210, %v1962
      %v3227 = vadd.f32 %v3211, %v1963
      %v3228 = vadd.f32 %v3212, %v1964
      %v3229 = vadd.f32 %v3213, %v1965
      %v3230 = vadd.f32 %v3214, %v1966
      %v3231 = vadd.f32 %v3215, %v1967
      %v3232 = vadd.f32 %v3216, %v1968
      %v3233 = vadd.f32 %v3217, %v1969
      %v3234 = vadd.f32 %v3218, %v1970
      %v3235 = vadd.f32 %v3219, %v1971
      %v3236 = vadd.f32 %v3220, %v1972
      %v3237 = vadd.f32 %v3221, %v1973
      %v3238 = vadd.f32 %v3222, %v1974
      %v3239 = vadd.f32 %v3223, %v1975
      %v3240 = vadd.f32 %v3224, %v1976
      %v3241 = vadd.f32 %v3225, %v1977
      %3242 = vmax.xlane.f32.xlu0 %v3226
      %v3243 = vpop.xlane.xlu0 %3242
      %3244 = vmax.xlane.f32.xlu0 %v3227
      %v3245 = vpop.xlane.xlu0 %3244
      %3246 = vmax.xlane.f32.xlu0 %v3228
      %v3247 = vpop.xlane.xlu0 %3246
      %3248 = vmax.xlane.f32.xlu0 %v3229
      %v3249 = vpop.xlane.xlu0 %3248
      %3250 = vmax.xlane.f32.xlu0 %v3230
      %v3251 = vpop.xlane.xlu0 %3250
      %3252 = vmax.xlane.f32.xlu0 %v3231
      %v3253 = vpop.xlane.xlu0 %3252
      %3254 = vmax.xlane.f32.xlu0 %v3232
      %v3255 = vpop.xlane.xlu0 %3254
      %3256 = vmax.xlane.f32.xlu0 %v3233
      %v3257 = vpop.xlane.xlu0 %3256
      %3258 = vmax.xlane.f32.xlu0 %v3234
      %v3259 = vpop.xlane.xlu0 %3258
      %3260 = vmax.xlane.f32.xlu0 %v3235
      %v3261 = vpop.xlane.xlu0 %3260
      %3262 = vmax.xlane.f32.xlu0 %v3236
      %v3263 = vpop.xlane.xlu0 %3262
      %3264 = vmax.xlane.f32.xlu0 %v3237
      %v3265 = vpop.xlane.xlu0 %3264
      %3266 = vmax.xlane.f32.xlu0 %v3238
      %v3267 = vpop.xlane.xlu0 %3266
      %3268 = vmax.xlane.f32.xlu0 %v3239
      %v3269 = vpop.xlane.xlu0 %3268
      %3270 = vmax.xlane.f32.xlu0 %v3240
      %v3271 = vpop.xlane.xlu0 %3270
      %3272 = vmax.xlane.f32.xlu0 %v3241
      %v3273 = vpop.xlane.xlu0 %3272
      %v3274 = vsub.f32 %v3226, %v3243
      %v3275 = vsub.f32 %v3227, %v3245
      %v3276 = vsub.f32 %v3228, %v3247
      %v3277 = vsub.f32 %v3229, %v3249
      %v3278 = vsub.f32 %v3230, %v3251
      %v3279 = vsub.f32 %v3231, %v3253
      %v3280 = vsub.f32 %v3232, %v3255
      %v3281 = vsub.f32 %v3233, %v3257
      %v3282 = vsub.f32 %v3234, %v3259
      %v3283 = vsub.f32 %v3235, %v3261
      %v3284 = vsub.f32 %v3236, %v3263
      %v3285 = vsub.f32 %v3237, %v3265
      %v3286 = vsub.f32 %v3238, %v3267
      %v3287 = vsub.f32 %v3239, %v3269
      %v3288 = vsub.f32 %v3240, %v3271
      %v3289 = vsub.f32 %v3241, %v3273
      %v3290 = vmul.f32 %v3274, 1.442695
      %v3291 = vpow.pop %v3290
      %v3292 = vmul.f32 %v3275, 1.442695
      %v3293 = vpow.pop %v3292
      %v3294 = vmul.f32 %v3276, 1.442695
      %v3295 = vpow.pop %v3294
      %v3296 = vmul.f32 %v3277, 1.442695
      %v3297 = vpow.pop %v3296
      %v3298 = vmul.f32 %v3278, 1.442695
      %v3299 = vpow.pop %v3298
      %v3300 = vmul.f32 %v3279, 1.442695
      %v3301 = vpow.pop %v3300
      %v3302 = vmul.f32 %v3280, 1.442695
      %v3303 = vpow.pop %v3302
      %v3304 = vmul.f32 %v3281, 1.442695
      %v3305 = vpow.pop %v3304
      %v3306 = vmul.f32 %v3282, 1.442695
      %v3307 = vpow.pop %v3306
      %v3308 = vmul.f32 %v3283, 1.442695
      %v3309 = vpow.pop %v3308
      %v3310 = vmul.f32 %v3284, 1.442695
      %v3311 = vpow.pop %v3310
      %v3312 = vmul.f32 %v3285, 1.442695
      %v3313 = vpow.pop %v3312
      %v3314 = vmul.f32 %v3286, 1.442695
      %v3315 = vpow.pop %v3314
      %v3316 = vmul.f32 %v3287, 1.442695
      %v3317 = vpow.pop %v3316
      %v3318 = vmul.f32 %v3288, 1.442695
      %v3319 = vpow.pop %v3318
      %v3320 = vmul.f32 %v3289, 1.442695
      %v3321 = vpow.pop %v3320
      %3322 = vadd.xlane.f32.xlu0 %v3291
      %v3323 = vpop.xlane.xlu0 %3322
      %3324 = vadd.xlane.f32.xlu0 %v3293
      %v3325 = vpop.xlane.xlu0 %3324
      %3326 = vadd.xlane.f32.xlu0 %v3295
      %v3327 = vpop.xlane.xlu0 %3326
      %3328 = vadd.xlane.f32.xlu0 %v3297
      %v3329 = vpop.xlane.xlu0 %3328
      %3330 = vadd.xlane.f32.xlu0 %v3299
      %v3331 = vpop.xlane.xlu0 %3330
      %3332 = vadd.xlane.f32.xlu0 %v3301
      %v3333 = vpop.xlane.xlu0 %3332
      %3334 = vadd.xlane.f32.xlu0 %v3303
      %v3335 = vpop.xlane.xlu0 %3334
      %3336 = vadd.xlane.f32.xlu0 %v3305
      %v3337 = vpop.xlane.xlu0 %3336
      %3338 = vadd.xlane.f32.xlu0 %v3307
      %v3339 = vpop.xlane.xlu0 %3338
      %3340 = vadd.xlane.f32.xlu0 %v3309
      %v3341 = vpop.xlane.xlu0 %3340
      %3342 = vadd.xlane.f32.xlu0 %v3311
      %v3343 = vpop.xlane.xlu0 %3342
      %3344 = vadd.xlane.f32.xlu0 %v3313
      %v3345 = vpop.xlane.xlu0 %3344
      %3346 = vadd.xlane.f32.xlu0 %v3315
      %v3347 = vpop.xlane.xlu0 %3346
      %3348 = vadd.xlane.f32.xlu0 %v3317
      %v3349 = vpop.xlane.xlu0 %3348
      %3350 = vadd.xlane.f32.xlu0 %v3319
      %v3351 = vpop.xlane.xlu0 %3350
      %3352 = vadd.xlane.f32.xlu0 %v3321
      %v3353 = vpop.xlane.xlu0 %3352
      %v3354 = vrcp.pop %v3323
      %v3355 = vrcp.pop %v3325
      %v3356 = vrcp.pop %v3327
      %v3357 = vrcp.pop %v3329
      %v3358 = vrcp.pop %v3331
      %v3359 = vrcp.pop %v3333
      %v3360 = vrcp.pop %v3335
      %v3361 = vrcp.pop %v3337
      %v3362 = vrcp.pop %v3339
      %v3363 = vrcp.pop %v3341
      %v3364 = vrcp.pop %v3343
      %v3365 = vrcp.pop %v3345
      %v3366 = vrcp.pop %v3347
      %v3367 = vrcp.pop %v3349
      %v3368 = vrcp.pop %v3351
      %v3369 = vrcp.pop %v3353
      %v3370 = vmul.f32 %v3291, %v3354
      %v3371 = vmul.f32 %v3293, %v3355
      %v3372 = vmul.f32 %v3295, %v3356
      %v3373 = vmul.f32 %v3297, %v3357
      %v3374 = vmul.f32 %v3299, %v3358
      %v3375 = vmul.f32 %v3301, %v3359
      %v3376 = vmul.f32 %v3303, %v3360
      %v3377 = vmul.f32 %v3305, %v3361
      %v3378 = vmul.f32 %v3307, %v3362
      %v3379 = vmul.f32 %v3309, %v3363
      %v3380 = vmul.f32 %v3311, %v3364
      %v3381 = vmul.f32 %v3313, %v3365
      %v3382 = vmul.f32 %v3315, %v3366
      %v3383 = vmul.f32 %v3317, %v3367
      %v3384 = vmul.f32 %v3319, %v3368
      %v3385 = vmul.f32 %v3321, %v3369
      %v3386 = vpack.c.bf16 %v3371, %v3370
      %v3387 = vpack.c.bf16 %v3373, %v3372
      %v3388 = vpack.c.bf16 %v3375, %v3374
      %v3389 = vpack.c.bf16 %v3377, %v3376
      %v3390 = vpack.c.bf16 %v3379, %v3378
      %v3391 = vpack.c.bf16 %v3381, %v3380
      %v3392 = vpack.c.bf16 %v3383, %v3382
      %v3393 = vpack.c.bf16 %v3385, %v3384
      %3394 = vrot.lane.b32.xlu0 %v1792, 104
      %v3395 = vpop.permute.xlu0 %3394
      %3396 = vrot.lane.b32.xlu0 %v1793, 104
      %v3397 = vpop.permute.xlu0 %3396
      %3398 = vrot.lane.b32.xlu0 %v1794, 104
      %v3399 = vpop.permute.xlu0 %3398
      %3400 = vrot.lane.b32.xlu0 %v1795, 104
      %v3401 = vpop.permute.xlu0 %3400
      %3402 = vrot.lane.b32.xlu0 %v1796, 104
      %v3403 = vpop.permute.xlu0 %3402
      %3404 = vrot.lane.b32.xlu0 %v1797, 104
      %v3405 = vpop.permute.xlu0 %3404
      %3406 = vrot.lane.b32.xlu0 %v1798, 104
      %v3407 = vpop.permute.xlu0 %3406
      %3408 = vrot.lane.b32.xlu0 %v1799, 104
      %v3409 = vpop.permute.xlu0 %3408
      %3418 = vmatprep.subr.bf16.mxu0 0
      %3419 = vmatpush1.bf16.msra.mxu0 %v3395
      %3420 = vmatprep.subr.bf16.mxu0 0
      %3421 = vmatpush1.bf16.msra.mxu0 %v3397
      %3422 = vmatprep.subr.bf16.mxu0 0
      %3423 = vmatpush1.bf16.msra.mxu0 %v3399
      %3424 = vmatprep.subr.bf16.mxu0 0
      %3425 = vmatpush1.bf16.msra.mxu0 %v3401
      %3426 = vmatprep.subr.bf16.mxu0 0
      %3427 = vmatpush1.bf16.msra.mxu0 %v3403
      %3428 = vmatprep.subr.bf16.mxu0 0
      %3429 = vmatpush1.bf16.msra.mxu0 %v3405
      %3430 = vmatprep.subr.bf16.mxu0 0
      %3431 = vmatpush1.bf16.msra.mxu0 %v3407
      %3432 = vmatprep.subr.bf16.mxu0 0
      %3433 = vmatpush1.bf16.msra.mxu0 %v3409
      %3434 = vmatprep.subr.bf16.mxu0 0
      %3435 = vmatpush1.bf16.msra.mxu0 0
      %3436 = vmatprep.subr.bf16.mxu0 0
      %3437 = vmatpush1.bf16.msra.mxu0 0
      %3438 = vmatprep.subr.bf16.mxu0 0
      %3439 = vmatpush1.bf16.msra.mxu0 0
      %3440 = vmatprep.subr.bf16.mxu0 0
      %3441 = vmatpush1.bf16.msra.mxu0 0
      %3442 = vmatprep.subr.bf16.mxu0 0
      %3443 = vmatpush1.bf16.msra.mxu0 0
      %3444 = vmatprep.subr.bf16.mxu0 0
      %3445 = vmatpush1.bf16.msra.mxu0 0
      %3446 = vmatprep.subr.bf16.mxu0 0
      %3447 = vmatpush1.bf16.msra.mxu0 0
      %3448 = vmatprep.subr.bf16.mxu0 0
      %3449 = vmatpush1.bf16.msra.mxu0 0
      %3450 = vmatprep.mubr.bf16.mxu0 0
      %3451 = vmatmul.mubr.bf16.gmra.mrb[0].mxu0 %v3386
      %v3452 = vpop.f32.mrb[0].mxu0
      %v3453 = vadd.f32 0.0, %v3452
      %v3454 = vpop.f32.mrb[0].mxu0
      %v3455 = vpop.f32.mrb[0].mxu0
      %v3456 = vadd.f32 0.0, %v3455
      %v3457 = vpop.f32.mrb[0].mxu0
      %3458 = vmatprep.mubr.bf16.mxu0 0
      %3459 = vmatmul.mubr.bf16.gmra.mrb[0].mxu0 %v3387
      %v3460 = vpop.f32.mrb[0].mxu0
      %v3461 = vadd.f32 0.0, %v3460
      %v3462 = vpop.f32.mrb[0].mxu0
      %v3463 = vpop.f32.mrb[0].mxu0
      %v3464 = vadd.f32 0.0, %v3463
      %v3465 = vpop.f32.mrb[0].mxu0
      %3466 = vmatprep.mubr.bf16.mxu0 0
      %3467 = vmatmul.mubr.bf16.gmra.mrb[0].mxu0 %v3388
      %v3468 = vpop.f32.mrb[0].mxu0
      %v3469 = vadd.f32 0.0, %v3468
      %v3470 = vpop.f32.mrb[0].mxu0
      %v3471 = vpop.f32.mrb[0].mxu0
      %v3472 = vadd.f32 0.0, %v3471
      %v3473 = vpop.f32.mrb[0].mxu0
      %3474 = vmatprep.mubr.bf16.mxu0 0
      %3475 = vmatmul.mubr.bf16.gmra.mrb[0].mxu0 %v3389
      %v3476 = vpop.f32.mrb[0].mxu0
      %v3477 = vadd.f32 0.0, %v3476
      %v3478 = vpop.f32.mrb[0].mxu0
      %v3479 = vpop.f32.mrb[0].mxu0
      %v3480 = vadd.f32 0.0, %v3479
      %v3481 = vpop.f32.mrb[0].mxu0
      %3482 = vmatprep.mubr.bf16.mxu0 0
      %3483 = vmatmul.mubr.bf16.gmra.mrb[0].mxu0 %v3390
      %v3484 = vpop.f32.mrb[0].mxu0
      %v3485 = vadd.f32 0.0, %v3484
      %v3486 = vpop.f32.mrb[0].mxu0
      %v3487 = vpop.f32.mrb[0].mxu0
      %v3488 = vadd.f32 0.0, %v3487
      %v3489 = vpop.f32.mrb[0].mxu0
      %3490 = vmatprep.mubr.bf16.mxu0 0
      %3491 = vmatmul.mubr.bf16.gmra.mrb[0].mxu0 %v3391
      %v3492 = vpop.f32.mrb[0].mxu0
      %v3493 = vadd.f32 0.0, %v3492
      %v3494 = vpop.f32.mrb[0].mxu0
      %v3495 = vpop.f32.mrb[0].mxu0
      %v3496 = vadd.f32 0.0, %v3495
      %v3497 = vpop.f32.mrb[0].mxu0
      %3498 = vmatprep.mubr.bf16.mxu0 0
      %3499 = vmatmul.mubr.bf16.gmra.mrb[0].mxu0 %v3392
      %v3500 = vpop.f32.mrb[0].mxu0
      %v3501 = vadd.f32 0.0, %v3500
      %v3502 = vpop.f32.mrb[0].mxu0
      %v3503 = vpop.f32.mrb[0].mxu0
      %v3504 = vadd.f32 0.0, %v3503
      %v3505 = vpop.f32.mrb[0].mxu0
      %3506 = vmatprep.mubr.bf16.mxu0 0
      %3507 = vmatmul.mubr.bf16.gmra.mrb[0].mxu0 %v3393
      %v3508 = vpop.f32.mrb[0].mxu0
      %v3509 = vadd.f32 0.0, %v3508
      %v3510 = vpop.f32.mrb[0].mxu0
      %v3511 = vpop.f32.mrb[0].mxu0
      %v3512 = vadd.f32 0.0, %v3511
      %v3513 = vpop.f32.mrb[0].mxu0
      %3514 = vdwg.mxu0
      %s3515 = scalar_lea.vmem %s10, 4
      %v3516 = vld [vmem:[%s3515] sm:$0x3]
      %v3517 = vpack.c.bf16 %v3456, %v3453
      %v3518 = vpack.c.bf16 %v3464, %v3461
      %v3519 = vpack.c.bf16 %v3472, %v3469
      %v3520 = vpack.c.bf16 %v3480, %v3477
      %v3521 = vpack.c.bf16 %v3488, %v3485
      %v3522 = vpack.c.bf16 %v3496, %v3493
      %v3523 = vpack.c.bf16 %v3504, %v3501
      %v3524 = vpack.c.bf16 %v3512, %v3509
      %v3526 = vsel %vm1800, %v3517, 0
      %v3529 = vsel %vm1800, %v3518, 0
      %v3532 = vsel %vm1800, %v3519, 0
      %v3535 = vsel %vm1800, %v3520, 0
      %v3538 = vsel %vm1800, %v3521, 0
      %v3541 = vsel %vm1800, %v3522, 0
      %v3544 = vsel %vm1800, %v3523, 0
      %v3547 = vsel %vm1800, %v3524, 0
      %v3550 = vsel %vm2808, %v3516, 0
      %3552 = vmatprep.subr.bf16.mxu0 0
      %3553 = vmatpush1.bf16.msra.mxu0 %v3550
      %3554 = vmatprep.subr.bf16.mxu0 0
      %3555 = vmatpush1.bf16.msra.mxu0 0
      %3556 = vmatprep.subr.bf16.mxu0 0
      %3557 = vmatpush1.bf16.msra.mxu0 0
      %3558 = vmatprep.subr.bf16.mxu0 0
      %3559 = vmatpush1.bf16.msra.mxu0 0
      %3560 = vmatprep.subr.bf16.mxu0 0
      %3561 = vmatpush1.bf16.msra.mxu0 0
      %3562 = vmatprep.subr.bf16.mxu0 0
      %3563 = vmatpush1.bf16.msra.mxu0 0
      %3564 = vmatprep.subr.bf16.mxu0 0
      %3565 = vmatpush1.bf16.msra.mxu0 0
      %3566 = vmatprep.subr.bf16.mxu0 0
      %3567 = vmatpush1.bf16.msra.mxu0 0
      %3568 = vmatprep.subr.bf16.mxu0 0
      %3569 = vmatpush1.bf16.msra.mxu0 0
      %3570 = vmatprep.subr.bf16.mxu0 0
      %3571 = vmatpush1.bf16.msra.mxu0 0
      %3572 = vmatprep.subr.bf16.mxu0 0
      %3573 = vmatpush1.bf16.msra.mxu0 0
      %3574 = vmatprep.subr.bf16.mxu0 0
      %3575 = vmatpush1.bf16.msra.mxu0 0
      %3576 = vmatprep.subr.bf16.mxu0 0
      %3577 = vmatpush1.bf16.msra.mxu0 0
      %3578 = vmatprep.subr.bf16.mxu0 0
      %3579 = vmatpush1.bf16.msra.mxu0 0
      %3580 = vmatprep.subr.bf16.mxu0 0
      %3581 = vmatpush1.bf16.msra.mxu0 0
      %3582 = vmatprep.subr.bf16.mxu0 0
      %3583 = vmatpush1.bf16.msra.mxu0 0
      %3584 = vmatprep.mubr.bf16.mxu0 0
      %3585 = vmatmul.mubr.bf16.gmra.mrb[0].mxu0 %v3526
      %v3586 = vpop.f32.mrb[0].mxu0
      %v3587 = vadd.f32 0.0, %v3586
      %v3588 = vpop.f32.mrb[0].mxu0
      %v3589 = vpop.f32.mrb[0].mxu0
      %v3590 = vadd.f32 0.0, %v3589
      %v3591 = vpop.f32.mrb[0].mxu0
      %3592 = vmatprep.mubr.bf16.mxu0 0
      %3593 = vmatmul.mubr.bf16.gmra.mrb[0].mxu0 %v3529
      %v3594 = vpop.f32.mrb[0].mxu0
      %v3595 = vadd.f32 0.0, %v3594
      %v3596 = vpop.f32.mrb[0].mxu0
      %v3597 = vpop.f32.mrb[0].mxu0
      %v3598 = vadd.f32 0.0, %v3597
      %v3599 = vpop.f32.mrb[0].mxu0
      %3600 = vmatprep.mubr.bf16.mxu0 0
      %3601 = vmatmul.mubr.bf16.gmra.mrb[0].mxu0 %v3532
      %v3602 = vpop.f32.mrb[0].mxu0
      %v3603 = vadd.f32 0.0, %v3602
      %v3604 = vpop.f32.mrb[0].mxu0
      %v3605 = vpop.f32.mrb[0].mxu0
      %v3606 = vadd.f32 0.0, %v3605
      %v3607 = vpop.f32.mrb[0].mxu0
      %3608 = vmatprep.mubr.bf16.mxu0 0
      %3609 = vmatmul.mubr.bf16.gmra.mrb[0].mxu0 %v3535
      %v3610 = vpop.f32.mrb[0].mxu0
      %v3611 = vadd.f32 0.0, %v3610
      %v3612 = vpop.f32.mrb[0].mxu0
      %v3613 = vpop.f32.mrb[0].mxu0
      %v3614 = vadd.f32 0.0, %v3613
      %v3615 = vpop.f32.mrb[0].mxu0
      %3616 = vmatprep.mubr.bf16.mxu0 0
      %3617 = vmatmul.mubr.bf16.gmra.mrb[0].mxu0 %v3538
      %v3618 = vpop.f32.mrb[0].mxu0
      %v3619 = vadd.f32 0.0, %v3618
      %v3620 = vpop.f32.mrb[0].mxu0
      %v3621 = vpop.f32.mrb[0].mxu0
      %v3622 = vadd.f32 0.0, %v3621
      %v3623 = vpop.f32.mrb[0].mxu0
      %3624 = vmatprep.mubr.bf16.mxu0 0
      %3625 = vmatmul.mubr.bf16.gmra.mrb[0].mxu0 %v3541
      %v3626 = vpop.f32.mrb[0].mxu0
      %v3627 = vadd.f32 0.0, %v3626
      %v3628 = vpop.f32.mrb[0].mxu0
      %v3629 = vpop.f32.mrb[0].mxu0
      %v3630 = vadd.f32 0.0, %v3629
      %v3631 = vpop.f32.mrb[0].mxu0
      %3632 = vmatprep.mubr.bf16.mxu0 0
      %3633 = vmatmul.mubr.bf16.gmra.mrb[0].mxu0 %v3544
      %v3634 = vpop.f32.mrb[0].mxu0
      %v3635 = vadd.f32 0.0, %v3634
      %v3636 = vpop.f32.mrb[0].mxu0
      %v3637 = vpop.f32.mrb[0].mxu0
      %v3638 = vadd.f32 0.0, %v3637
      %v3639 = vpop.f32.mrb[0].mxu0
      %3640 = vmatprep.mubr.bf16.mxu0 0
      %3641 = vmatmul.mubr.bf16.gmra.mrb[0].mxu0 %v3547
      %v3642 = vpop.f32.mrb[0].mxu0
      %v3643 = vadd.f32 0.0, %v3642
      %v3644 = vpop.f32.mrb[0].mxu0
      %v3645 = vpop.f32.mrb[0].mxu0
      %v3646 = vadd.f32 0.0, %v3645
      %v3647 = vpop.f32.mrb[0].mxu0
      %3648 = vdwg.mxu0
      %v3649 = vadd.f32 %v2971, %v3587
      %v3650 = vadd.f32 %v2974, %v3590
      %v3651 = vadd.f32 %v2979, %v3595
      %v3652 = vadd.f32 %v2982, %v3598
      %v3653 = vadd.f32 %v2987, %v3603
      %v3654 = vadd.f32 %v2990, %v3606
      %v3655 = vadd.f32 %v2995, %v3611
      %v3656 = vadd.f32 %v2998, %v3614
      %v3657 = vadd.f32 %v3003, %v3619
      %v3658 = vadd.f32 %v3006, %v3622
      %v3659 = vadd.f32 %v3011, %v3627
      %v3660 = vadd.f32 %v3014, %v3630
      %v3661 = vadd.f32 %v3019, %v3635
      %v3662 = vadd.f32 %v3022, %v3638
      %v3663 = vadd.f32 %v3027, %v3643
      %v3664 = vadd.f32 %v3030, %v3646
      %3665 = vrot.lane.b32.xlu0 %v1784, 116
      %v3666 = vpop.permute.xlu0 %3665
      %3667 = vrot.lane.b32.xlu0 %v1785, 116
      %v3668 = vpop.permute.xlu0 %3667
      %3669 = vrot.lane.b32.xlu0 %v1786, 116
      %v3670 = vpop.permute.xlu0 %3669
      %3671 = vrot.lane.b32.xlu0 %v1787, 116
      %v3672 = vpop.permute.xlu0 %3671
      %3673 = vrot.lane.b32.xlu0 %v1788, 116
      %v3674 = vpop.permute.xlu0 %3673
      %3675 = vrot.lane.b32.xlu0 %v1789, 116
      %v3676 = vpop.permute.xlu0 %3675
      %3677 = vrot.lane.b32.xlu0 %v1790, 116
      %v3678 = vpop.permute.xlu0 %3677
      %3679 = vrot.lane.b32.xlu0 %v1791, 116
      %v3680 = vpop.permute.xlu0 %3679
      %3681 = vrot.lane.b32.xlu0 %v1792, 116
      %v3682 = vpop.permute.xlu0 %3681
      %3683 = vrot.lane.b32.xlu0 %v1793, 116
      %v3684 = vpop.permute.xlu0 %3683
      %3685 = vrot.lane.b32.xlu0 %v1794, 116
      %v3686 = vpop.permute.xlu0 %3685
      %3687 = vrot.lane.b32.xlu0 %v1795, 116
      %v3688 = vpop.permute.xlu0 %3687
      %3689 = vrot.lane.b32.xlu0 %v1796, 116
      %v3690 = vpop.permute.xlu0 %3689
      %3691 = vrot.lane.b32.xlu0 %v1797, 116
      %v3692 = vpop.permute.xlu0 %3691
      %3693 = vrot.lane.b32.xlu0 %v1798, 116
      %v3694 = vpop.permute.xlu0 %3693
      %3695 = vrot.lane.b32.xlu0 %v1799, 116
      %v3696 = vpop.permute.xlu0 %3695
      %v3698 = vsel %vm1800, %v3666, 0
      %v3701 = vsel %vm1800, %v3668, 0
      %v3704 = vsel %vm1800, %v3670, 0
      %v3707 = vsel %vm1800, %v3672, 0
      %v3710 = vsel %vm1800, %v3674, 0
      %v3713 = vsel %vm1800, %v3676, 0
      %v3716 = vsel %vm1800, %v3678, 0
      %v3719 = vsel %vm1800, %v3680, 0
      %v3722 = vsel %vm1800, %v3682, 0
      %v3725 = vsel %vm1800, %v3684, 0
      %v3728 = vsel %vm1800, %v3686, 0
      %v3731 = vsel %vm1800, %v3688, 0
      %v3734 = vsel %vm1800, %v3690, 0
      %v3737 = vsel %vm1800, %v3692, 0
      %v3740 = vsel %vm1800, %v3694, 0
      %v3743 = vsel %vm1800, %v3696, 0
      %3745 = vmatprep.subr.bf16.mxu0 0
      %3746 = vmatpush1.bf16.xpose.msra.mxu0 %v3722
      %3747 = vmatprep.subr.bf16.mxu0 0
      %3748 = vmatpush1.bf16.xpose.msra.mxu0 %v3725
      %3749 = vmatprep.subr.bf16.mxu0 0
      %3750 = vmatpush1.bf16.xpose.msra.mxu0 %v3728
      %3751 = vmatprep.subr.bf16.mxu0 0
      %3752 = vmatpush1.bf16.xpose.msra.mxu0 %v3731
      %3753 = vmatprep.subr.bf16.mxu0 0
      %3754 = vmatpush1.bf16.xpose.msra.mxu0 %v3734
      %3755 = vmatprep.subr.bf16.mxu0 0
      %3756 = vmatpush1.bf16.xpose.msra.mxu0 %v3737
      %3757 = vmatprep.subr.bf16.mxu0 0
      %3758 = vmatpush1.bf16.xpose.msra.mxu0 %v3740
      %3759 = vmatprep.subr.bf16.mxu0 0
      %3760 = vmatpush1.bf16.xpose.msra.mxu0 %v3743
      %3761 = vmatprep.subr.bf16.mxu0 0
      %3762 = vmatpush1.bf16.xpose.msra.mxu0 0
      %3763 = vmatprep.subr.bf16.mxu0 0
      %3764 = vmatpush1.bf16.xpose.msra.mxu0 0
      %3765 = vmatprep.subr.bf16.mxu0 0
      %3766 = vmatpush1.bf16.xpose.msra.mxu0 0
      %3767 = vmatprep.subr.bf16.mxu0 0
      %3768 = vmatpush1.bf16.xpose.msra.mxu0 0
      %3769 = vmatprep.subr.bf16.mxu0 0
      %3770 = vmatpush1.bf16.xpose.msra.mxu0 0
      %3771 = vmatprep.subr.bf16.mxu0 0
      %3772 = vmatpush1.bf16.xpose.msra.mxu0 0
      %3773 = vmatprep.subr.bf16.mxu0 0
      %3774 = vmatpush1.bf16.xpose.msra.mxu0 0
      %3775 = vmatprep.subr.bf16.mxu0 0
      %3776 = vmatpush1.bf16.xpose.msra.mxu0 0
      %3777 = vmatprep.mubr.bf16.mxu0 0
      %3778 = vmatmul.mubr.bf16.gmra.mrb[0].mxu0 %v3698
      %v3779 = vpop.f32.mrb[0].mxu0
      %v3780 = vadd.f32 0.0, %v3779
      %v3781 = vpop.f32.mrb[0].mxu0
      %v3782 = vpop.f32.mrb[0].mxu0
      %v3783 = vadd.f32 0.0, %v3782
      %v3784 = vpop.f32.mrb[0].mxu0
      %3785 = vmatprep.mubr.bf16.mxu0 0
      %3786 = vmatmul.mubr.bf16.gmra.mrb[0].mxu0 %v3701
      %v3787 = vpop.f32.mrb[0].mxu0
      %v3788 = vadd.f32 0.0, %v3787
      %v3789 = vpop.f32.mrb[0].mxu0
      %v3790 = vpop.f32.mrb[0].mxu0
      %v3791 = vadd.f32 0.0, %v3790
      %v3792 = vpop.f32.mrb[0].mxu0
      %3793 = vmatprep.mubr.bf16.mxu0 0
      %3794 = vmatmul.mubr.bf16.gmra.mrb[0].mxu0 %v3704
      %v3795 = vpop.f32.mrb[0].mxu0
      %v3796 = vadd.f32 0.0, %v3795
      %v3797 = vpop.f32.mrb[0].mxu0
      %v3798 = vpop.f32.mrb[0].mxu0
      %v3799 = vadd.f32 0.0, %v3798
      %v3800 = vpop.f32.mrb[0].mxu0
      %3801 = vmatprep.mubr.bf16.mxu0 0
      %3802 = vmatmul.mubr.bf16.gmra.mrb[0].mxu0 %v3707
      %v3803 = vpop.f32.mrb[0].mxu0
      %v3804 = vadd.f32 0.0, %v3803
      %v3805 = vpop.f32.mrb[0].mxu0
      %v3806 = vpop.f32.mrb[0].mxu0
      %v3807 = vadd.f32 0.0, %v3806
      %v3808 = vpop.f32.mrb[0].mxu0
      %3809 = vmatprep.mubr.bf16.mxu0 0
      %3810 = vmatmul.mubr.bf16.gmra.mrb[0].mxu0 %v3710
      %v3811 = vpop.f32.mrb[0].mxu0
      %v3812 = vadd.f32 0.0, %v3811
      %v3813 = vpop.f32.mrb[0].mxu0
      %v3814 = vpop.f32.mrb[0].mxu0
      %v3815 = vadd.f32 0.0, %v3814
      %v3816 = vpop.f32.mrb[0].mxu0
      %3817 = vmatprep.mubr.bf16.mxu0 0
      %3818 = vmatmul.mubr.bf16.gmra.mrb[0].mxu0 %v3713
      %v3819 = vpop.f32.mrb[0].mxu0
      %v3820 = vadd.f32 0.0, %v3819
      %v3821 = vpop.f32.mrb[0].mxu0
      %v3822 = vpop.f32.mrb[0].mxu0
      %v3823 = vadd.f32 0.0, %v3822
      %v3824 = vpop.f32.mrb[0].mxu0
      %3825 = vmatprep.mubr.bf16.mxu0 0
      %3826 = vmatmul.mubr.bf16.gmra.mrb[0].mxu0 %v3716
      %v3827 = vpop.f32.mrb[0].mxu0
      %v3828 = vadd.f32 0.0, %v3827
      %v3829 = vpop.f32.mrb[0].mxu0
      %v3830 = vpop.f32.mrb[0].mxu0
      %v3831 = vadd.f32 0.0, %v3830
      %v3832 = vpop.f32.mrb[0].mxu0
      %3833 = vmatprep.mubr.bf16.mxu0 0
      %3834 = vmatmul.mubr.bf16.gmra.mrb[0].mxu0 %v3719
      %v3835 = vpop.f32.mrb[0].mxu0
      %v3836 = vadd.f32 0.0, %v3835
      %v3837 = vpop.f32.mrb[0].mxu0
      %v3838 = vpop.f32.mrb[0].mxu0
      %v3839 = vadd.f32 0.0, %v3838
      %v3840 = vpop.f32.mrb[0].mxu0
      %3841 = vdwg.mxu0
      %v3842 = vmul.f32 %v3780, 0.5
      %v3843 = vmul.f32 %v3783, 0.5
      %v3844 = vmul.f32 %v3788, 0.5
      %v3845 = vmul.f32 %v3791, 0.5
      %v3846 = vmul.f32 %v3796, 0.5
      %v3847 = vmul.f32 %v3799, 0.5
      %v3848 = vmul.f32 %v3804, 0.5
      %v3849 = vmul.f32 %v3807, 0.5
      %v3850 = vmul.f32 %v3812, 0.5
      %v3851 = vmul.f32 %v3815, 0.5
      %v3852 = vmul.f32 %v3820, 0.5
      %v3853 = vmul.f32 %v3823, 0.5
      %v3854 = vmul.f32 %v3828, 0.5
      %v3855 = vmul.f32 %v3831, 0.5
      %v3856 = vmul.f32 %v3836, 0.5
      %v3857 = vmul.f32 %v3839, 0.5
      %v3858 = vadd.f32 %v3842, %v1962
      %v3859 = vadd.f32 %v3843, %v1963
      %v3860 = vadd.f32 %v3844, %v1964
      %v3861 = vadd.f32 %v3845, %v1965
      %v3862 = vadd.f32 %v3846, %v1966
      %v3863 = vadd.f32 %v3847, %v1967
      %v3864 = vadd.f32 %v3848, %v1968
      %v3865 = vadd.f32 %v3849, %v1969
      %v3866 = vadd.f32 %v3850, %v1970
      %v3867 = vadd.f32 %v3851, %v1971
      %v3868 = vadd.f32 %v3852, %v1972
      %v3869 = vadd.f32 %v3853, %v1973
      %v3870 = vadd.f32 %v3854, %v1974
      %v3871 = vadd.f32 %v3855, %v1975
      %v3872 = vadd.f32 %v3856, %v1976
      %v3873 = vadd.f32 %v3857, %v1977
      %3874 = vmax.xlane.f32.xlu0 %v3858
      %v3875 = vpop.xlane.xlu0 %3874
      %3876 = vmax.xlane.f32.xlu0 %v3859
      %v3877 = vpop.xlane.xlu0 %3876
      %3878 = vmax.xlane.f32.xlu0 %v3860
      %v3879 = vpop.xlane.xlu0 %3878
      %3880 = vmax.xlane.f32.xlu0 %v3861
      %v3881 = vpop.xlane.xlu0 %3880
      %3882 = vmax.xlane.f32.xlu0 %v3862
      %v3883 = vpop.xlane.xlu0 %3882
      %3884 = vmax.xlane.f32.xlu0 %v3863
      %v3885 = vpop.xlane.xlu0 %3884
      %3886 = vmax.xlane.f32.xlu0 %v3864
      %v3887 = vpop.xlane.xlu0 %3886
      %3888 = vmax.xlane.f32.xlu0 %v3865
      %v3889 = vpop.xlane.xlu0 %3888
      %3890 = vmax.xlane.f32.xlu0 %v3866
      %v3891 = vpop.xlane.xlu0 %3890
      %3892 = vmax.xlane.f32.xlu0 %v3867
      %v3893 = vpop.xlane.xlu0 %3892
      %3894 = vmax.xlane.f32.xlu0 %v3868
      %v3895 = vpop.xlane.xlu0 %3894
      %3896 = vmax.xlane.f32.xlu0 %v3869
      %v3897 = vpop.xlane.xlu0 %3896
      %3898 = vmax.xlane.f32.xlu0 %v3870
      %v3899 = vpop.xlane.xlu0 %3898
      %3900 = vmax.xlane.f32.xlu0 %v3871
      %v3901 = vpop.xlane.xlu0 %3900
      %3902 = vmax.xlane.f32.xlu0 %v3872
      %v3903 = vpop.xlane.xlu0 %3902
      %3904 = vmax.xlane.f32.xlu0 %v3873
      %v3905 = vpop.xlane.xlu0 %3904
      %v3906 = vsub.f32 %v3858, %v3875
      %v3907 = vsub.f32 %v3859, %v3877
      %v3908 = vsub.f32 %v3860, %v3879
      %v3909 = vsub.f32 %v3861, %v3881
      %v3910 = vsub.f32 %v3862, %v3883
      %v3911 = vsub.f32 %v3863, %v3885
      %v3912 = vsub.f32 %v3864, %v3887
      %v3913 = vsub.f32 %v3865, %v3889
      %v3914 = vsub.f32 %v3866, %v3891
      %v3915 = vsub.f32 %v3867, %v3893
      %v3916 = vsub.f32 %v3868, %v3895
      %v3917 = vsub.f32 %v3869, %v3897
      %v3918 = vsub.f32 %v3870, %v3899
      %v3919 = vsub.f32 %v3871, %v3901
      %v3920 = vsub.f32 %v3872, %v3903
      %v3921 = vsub.f32 %v3873, %v3905
      %v3922 = vmul.f32 %v3906, 1.442695
      %v3923 = vpow.pop %v3922
      %v3924 = vmul.f32 %v3907, 1.442695
      %v3925 = vpow.pop %v3924
      %v3926 = vmul.f32 %v3908, 1.442695
      %v3927 = vpow.pop %v3926
      %v3928 = vmul.f32 %v3909, 1.442695
      %v3929 = vpow.pop %v3928
      %v3930 = vmul.f32 %v3910, 1.442695
      %v3931 = vpow.pop %v3930
      %v3932 = vmul.f32 %v3911, 1.442695
      %v3933 = vpow.pop %v3932
      %v3934 = vmul.f32 %v3912, 1.442695
      %v3935 = vpow.pop %v3934
      %v3936 = vmul.f32 %v3913, 1.442695
      %v3937 = vpow.pop %v3936
      %v3938 = vmul.f32 %v3914, 1.442695
      %v3939 = vpow.pop %v3938
      %v3940 = vmul.f32 %v3915, 1.442695
      %v3941 = vpow.pop %v3940
      %v3942 = vmul.f32 %v3916, 1.442695
      %v3943 = vpow.pop %v3942
      %v3944 = vmul.f32 %v3917, 1.442695
      %v3945 = vpow.pop %v3944
      %v3946 = vmul.f32 %v3918, 1.442695
      %v3947 = vpow.pop %v3946
      %v3948 = vmul.f32 %v3919, 1.442695
      %v3949 = vpow.pop %v3948
      %v3950 = vmul.f32 %v3920, 1.442695
      %v3951 = vpow.pop %v3950
      %v3952 = vmul.f32 %v3921, 1.442695
      %v3953 = vpow.pop %v3952
      %3954 = vadd.xlane.f32.xlu0 %v3923
      %v3955 = vpop.xlane.xlu0 %3954
      %3956 = vadd.xlane.f32.xlu0 %v3925
      %v3957 = vpop.xlane.xlu0 %3956
      %3958 = vadd.xlane.f32.xlu0 %v3927
      %v3959 = vpop.xlane.xlu0 %3958
      %3960 = vadd.xlane.f32.xlu0 %v3929
      %v3961 = vpop.xlane.xlu0 %3960
      %3962 = vadd.xlane.f32.xlu0 %v3931
      %v3963 = vpop.xlane.xlu0 %3962
      %3964 = vadd.xlane.f32.xlu0 %v3933
      %v3965 = vpop.xlane.xlu0 %3964
      %3966 = vadd.xlane.f32.xlu0 %v3935
      %v3967 = vpop.xlane.xlu0 %3966
      %3968 = vadd.xlane.f32.xlu0 %v3937
      %v3969 = vpop.xlane.xlu0 %3968
      %3970 = vadd.xlane.f32.xlu0 %v3939
      %v3971 = vpop.xlane.xlu0 %3970
      %3972 = vadd.xlane.f32.xlu0 %v3941
      %v3973 = vpop.xlane.xlu0 %3972
      %3974 = vadd.xlane.f32.xlu0 %v3943
      %v3975 = vpop.xlane.xlu0 %3974
      %3976 = vadd.xlane.f32.xlu0 %v3945
      %v3977 = vpop.xlane.xlu0 %3976
      %3978 = vadd.xlane.f32.xlu0 %v3947
      %v3979 = vpop.xlane.xlu0 %3978
      %3980 = vadd.xlane.f32.xlu0 %v3949
      %v3981 = vpop.xlane.xlu0 %3980
      %3982 = vadd.xlane.f32.xlu0 %v3951
      %v3983 = vpop.xlane.xlu0 %3982
      %3984 = vadd.xlane.f32.xlu0 %v3953
      %v3985 = vpop.xlane.xlu0 %3984
      %v3986 = vrcp.pop %v3955
      %v3987 = vrcp.pop %v3957
      %v3988 = vrcp.pop %v3959
      %v3989 = vrcp.pop %v3961
      %v3990 = vrcp.pop %v3963
      %v3991 = vrcp.pop %v3965
      %v3992 = vrcp.pop %v3967
      %v3993 = vrcp.pop %v3969
      %v3994 = vrcp.pop %v3971
      %v3995 = vrcp.pop %v3973
      %v3996 = vrcp.pop %v3975
      %v3997 = vrcp.pop %v3977
      %v3998 = vrcp.pop %v3979
      %v3999 = vrcp.pop %v3981
      %v4000 = vrcp.pop %v3983
      %v4001 = vrcp.pop %v3985
      %v4002 = vmul.f32 %v3923, %v3986
      %v4003 = vmul.f32 %v3925, %v3987
      %v4004 = vmul.f32 %v3927, %v3988
      %v4005 = vmul.f32 %v3929, %v3989
      %v4006 = vmul.f32 %v3931, %v3990
      %v4007 = vmul.f32 %v3933, %v3991
      %v4008 = vmul.f32 %v3935, %v3992
      %v4009 = vmul.f32 %v3937, %v3993
      %v4010 = vmul.f32 %v3939, %v3994
      %v4011 = vmul.f32 %v3941, %v3995
      %v4012 = vmul.f32 %v3943, %v3996
      %v4013 = vmul.f32 %v3945, %v3997
      %v4014 = vmul.f32 %v3947, %v3998
      %v4015 = vmul.f32 %v3949, %v3999
      %v4016 = vmul.f32 %v3951, %v4000
      %v4017 = vmul.f32 %v3953, %v4001
      %v4018 = vpack.c.bf16 %v4003, %v4002
      %v4019 = vpack.c.bf16 %v4005, %v4004
      %v4020 = vpack.c.bf16 %v4007, %v4006
      %v4021 = vpack.c.bf16 %v4009, %v4008
      %v4022 = vpack.c.bf16 %v4011, %v4010
      %v4023 = vpack.c.bf16 %v4013, %v4012
      %v4024 = vpack.c.bf16 %v4015, %v4014
      %v4025 = vpack.c.bf16 %v4017, %v4016
      %4026 = vrot.lane.b32.xlu0 %v1792, 100
      %v4027 = vpop.permute.xlu0 %4026
      %4028 = vrot.lane.b32.xlu0 %v1793, 100
      %v4029 = vpop.permute.xlu0 %4028
      %4030 = vrot.lane.b32.xlu0 %v1794, 100
      %v4031 = vpop.permute.xlu0 %4030
      %4032 = vrot.lane.b32.xlu0 %v1795, 100
      %v4033 = vpop.permute.xlu0 %4032
      %4034 = vrot.lane.b32.xlu0 %v1796, 100
      %v4035 = vpop.permute.xlu0 %4034
      %4036 = vrot.lane.b32.xlu0 %v1797, 100
      %v4037 = vpop.permute.xlu0 %4036
      %4038 = vrot.lane.b32.xlu0 %v1798, 100
      %v4039 = vpop.permute.xlu0 %4038
      %4040 = vrot.lane.b32.xlu0 %v1799, 100
      %v4041 = vpop.permute.xlu0 %4040
      %4050 = vmatprep.subr.bf16.mxu0 0
      %4051 = vmatpush1.bf16.msra.mxu0 %v4027
      %4052 = vmatprep.subr.bf16.mxu0 0
      %4053 = vmatpush1.bf16.msra.mxu0 %v4029
      %4054 = vmatprep.subr.bf16.mxu0 0
      %4055 = vmatpush1.bf16.msra.mxu0 %v4031
      %4056 = vmatprep.subr.bf16.mxu0 0
      %4057 = vmatpush1.bf16.msra.mxu0 %v4033
      %4058 = vmatprep.subr.bf16.mxu0 0
      %4059 = vmatpush1.bf16.msra.mxu0 %v4035
      %4060 = vmatprep.subr.bf16.mxu0 0
      %4061 = vmatpush1.bf16.msra.mxu0 %v4037
      %4062 = vmatprep.subr.bf16.mxu0 0
      %4063 = vmatpush1.bf16.msra.mxu0 %v4039
      %4064 = vmatprep.subr.bf16.mxu0 0
      %4065 = vmatpush1.bf16.msra.mxu0 %v4041
      %4066 = vmatprep.subr.bf16.mxu0 0
      %4067 = vmatpush1.bf16.msra.mxu0 0
      %4068 = vmatprep.subr.bf16.mxu0 0
      %4069 = vmatpush1.bf16.msra.mxu0 0
      %4070 = vmatprep.subr.bf16.mxu0 0
      %4071 = vmatpush1.bf16.msra.mxu0 0
      %4072 = vmatprep.subr.bf16.mxu0 0
      %4073 = vmatpush1.bf16.msra.mxu0 0
      %4074 = vmatprep.subr.bf16.mxu0 0
      %4075 = vmatpush1.bf16.msra.mxu0 0
      %4076 = vmatprep.subr.bf16.mxu0 0
      %4077 = vmatpush1.bf16.msra.mxu0 0
      %4078 = vmatprep.subr.bf16.mxu0 0
      %4079 = vmatpush1.bf16.msra.mxu0 0
      %4080 = vmatprep.subr.bf16.mxu0 0
      %4081 = vmatpush1.bf16.msra.mxu0 0
      %4082 = vmatprep.mubr.bf16.mxu0 0
      %4083 = vmatmul.mubr.bf16.gmra.mrb[0].mxu0 %v4018
      %v4084 = vpop.f32.mrb[0].mxu0
      %v4085 = vadd.f32 0.0, %v4084
      %v4086 = vpop.f32.mrb[0].mxu0
      %v4087 = vpop.f32.mrb[0].mxu0
      %v4088 = vadd.f32 0.0, %v4087
      %v4089 = vpop.f32.mrb[0].mxu0
      %4090 = vmatprep.mubr.bf16.mxu0 0
      %4091 = vmatmul.mubr.bf16.gmra.mrb[0].mxu0 %v4019
      %v4092 = vpop.f32.mrb[0].mxu0
      %v4093 = vadd.f32 0.0, %v4092
      %v4094 = vpop.f32.mrb[0].mxu0
      %v4095 = vpop.f32.mrb[0].mxu0
      %v4096 = vadd.f32 0.0, %v4095
      %v4097 = vpop.f32.mrb[0].mxu0
      %4098 = vmatprep.mubr.bf16.mxu0 0
      %4099 = vmatmul.mubr.bf16.gmra.mrb[0].mxu0 %v4020
      %v4100 = vpop.f32.mrb[0].mxu0
      %v4101 = vadd.f32 0.0, %v4100
      %v4102 = vpop.f32.mrb[0].mxu0
      %v4103 = vpop.f32.mrb[0].mxu0
      %v4104 = vadd.f32 0.0, %v4103
      %v4105 = vpop.f32.mrb[0].mxu0
      %4106 = vmatprep.mubr.bf16.mxu0 0
      %4107 = vmatmul.mubr.bf16.gmra.mrb[0].mxu0 %v4021
      %v4108 = vpop.f32.mrb[0].mxu0
      %v4109 = vadd.f32 0.0, %v4108
      %v4110 = vpop.f32.mrb[0].mxu0
      %v4111 = vpop.f32.mrb[0].mxu0
      %v4112 = vadd.f32 0.0, %v4111
      %v4113 = vpop.f32.mrb[0].mxu0
      %4114 = vmatprep.mubr.bf16.mxu0 0
      %4115 = vmatmul.mubr.bf16.gmra.mrb[0].mxu0 %v4022
      %v4116 = vpop.f32.mrb[0].mxu0
      %v4117 = vadd.f32 0.0, %v4116
      %v4118 = vpop.f32.mrb[0].mxu0
      %v4119 = vpop.f32.mrb[0].mxu0
      %v4120 = vadd.f32 0.0, %v4119
      %v4121 = vpop.f32.mrb[0].mxu0
      %4122 = vmatprep.mubr.bf16.mxu0 0
      %4123 = vmatmul.mubr.bf16.gmra.mrb[0].mxu0 %v4023
      %v4124 = vpop.f32.mrb[0].mxu0
      %v4125 = vadd.f32 0.0, %v4124
      %v4126 = vpop.f32.mrb[0].mxu0
      %v4127 = vpop.f32.mrb[0].mxu0
      %v4128 = vadd.f32 0.0, %v4127
      %v4129 = vpop.f32.mrb[0].mxu0
      %4130 = vmatprep.mubr.bf16.mxu0 0
      %4131 = vmatmul.mubr.bf16.gmra.mrb[0].mxu0 %v4024
      %v4132 = vpop.f32.mrb[0].mxu0
      %v4133 = vadd.f32 0.0, %v4132
      %v4134 = vpop.f32.mrb[0].mxu0
      %v4135 = vpop.f32.mrb[0].mxu0
      %v4136 = vadd.f32 0.0, %v4135
      %v4137 = vpop.f32.mrb[0].mxu0
      %4138 = vmatprep.mubr.bf16.mxu0 0
      %4139 = vmatmul.mubr.bf16.gmra.mrb[0].mxu0 %v4025
      %v4140 = vpop.f32.mrb[0].mxu0
      %v4141 = vadd.f32 0.0, %v4140
      %v4142 = vpop.f32.mrb[0].mxu0
      %v4143 = vpop.f32.mrb[0].mxu0
      %v4144 = vadd.f32 0.0, %v4143
      %v4145 = vpop.f32.mrb[0].mxu0
      %4146 = vdwg.mxu0
      %s4147 = scalar_lea.vmem %s10, 6
      %v4148 = vld [vmem:[%s4147] sm:$0x3]
      %v4149 = vpack.c.bf16 %v4088, %v4085
      %v4150 = vpack.c.bf16 %v4096, %v4093
      %v4151 = vpack.c.bf16 %v4104, %v4101
      %v4152 = vpack.c.bf16 %v4112, %v4109
      %v4153 = vpack.c.bf16 %v4120, %v4117
      %v4154 = vpack.c.bf16 %v4128, %v4125
      %v4155 = vpack.c.bf16 %v4136, %v4133
      %v4156 = vpack.c.bf16 %v4144, %v4141
      %v4158 = vsel %vm1800, %v4149, 0
      %v4161 = vsel %vm1800, %v4150, 0
      %v4164 = vsel %vm1800, %v4151, 0
      %v4167 = vsel %vm1800, %v4152, 0
      %v4170 = vsel %vm1800, %v4153, 0
      %v4173 = vsel %vm1800, %v4154, 0
      %v4176 = vsel %vm1800, %v4155, 0
      %v4179 = vsel %vm1800, %v4156, 0
      %v4182 = vsel %vm2808, %v4148, 0
      %4184 = vmatprep.subr.bf16.mxu0 0
      %4185 = vmatpush1.bf16.msra.mxu0 %v4182
      %4186 = vmatprep.subr.bf16.mxu0 0
      %4187 = vmatpush1.bf16.msra.mxu0 0
      %4188 = vmatprep.subr.bf16.mxu0 0
      %4189 = vmatpush1.bf16.msra.mxu0 0
      %4190 = vmatprep.subr.bf16.mxu0 0
      %4191 = vmatpush1.bf16.msra.mxu0 0
      %4192 = vmatprep.subr.bf16.mxu0 0
      %4193 = vmatpush1.bf16.msra.mxu0 0
      %4194 = vmatprep.subr.bf16.mxu0 0
      %4195 = vmatpush1.bf16.msra.mxu0 0
      %4196 = vmatprep.subr.bf16.mxu0 0
      %4197 = vmatpush1.bf16.msra.mxu0 0
      %4198 = vmatprep.subr.bf16.mxu0 0
      %4199 = vmatpush1.bf16.msra.mxu0 0
      %4200 = vmatprep.subr.bf16.mxu0 0
      %4201 = vmatpush1.bf16.msra.mxu0 0
      %4202 = vmatprep.subr.bf16.mxu0 0
      %4203 = vmatpush1.bf16.msra.mxu0 0
      %4204 = vmatprep.subr.bf16.mxu0 0
      %4205 = vmatpush1.bf16.msra.mxu0 0
      %4206 = vmatprep.subr.bf16.mxu0 0
      %4207 = vmatpush1.bf16.msra.mxu0 0
      %4208 = vmatprep.subr.bf16.mxu0 0
      %4209 = vmatpush1.bf16.msra.mxu0 0
      %4210 = vmatprep.subr.bf16.mxu0 0
      %4211 = vmatpush1.bf16.msra.mxu0 0
      %4212 = vmatprep.subr.bf16.mxu0 0
      %4213 = vmatpush1.bf16.msra.mxu0 0
      %4214 = vmatprep.subr.bf16.mxu0 0
      %4215 = vmatpush1.bf16.msra.mxu0 0
      %4216 = vmatprep.mubr.bf16.mxu0 0
      %4217 = vmatmul.mubr.bf16.gmra.mrb[0].mxu0 %v4158
      %v4218 = vpop.f32.mrb[0].mxu0
      %v4219 = vadd.f32 0.0, %v4218
      %v4220 = vpop.f32.mrb[0].mxu0
      %v4221 = vpop.f32.mrb[0].mxu0
      %v4222 = vadd.f32 0.0, %v4221
      %v4223 = vpop.f32.mrb[0].mxu0
      %4224 = vmatprep.mubr.bf16.mxu0 0
      %4225 = vmatmul.mubr.bf16.gmra.mrb[0].mxu0 %v4161
      %v4226 = vpop.f32.mrb[0].mxu0
      %v4227 = vadd.f32 0.0, %v4226
      %v4228 = vpop.f32.mrb[0].mxu0
      %v4229 = vpop.f32.mrb[0].mxu0
      %v4230 = vadd.f32 0.0, %v4229
      %v4231 = vpop.f32.mrb[0].mxu0
      %4232 = vmatprep.mubr.bf16.mxu0 0
      %4233 = vmatmul.mubr.bf16.gmra.mrb[0].mxu0 %v4164
      %v4234 = vpop.f32.mrb[0].mxu0
      %v4235 = vadd.f32 0.0, %v4234
      %v4236 = vpop.f32.mrb[0].mxu0
      %v4237 = vpop.f32.mrb[0].mxu0
      %v4238 = vadd.f32 0.0, %v4237
      %v4239 = vpop.f32.mrb[0].mxu0
      %4240 = vmatprep.mubr.bf16.mxu0 0
      %4241 = vmatmul.mubr.bf16.gmra.mrb[0].mxu0 %v4167
      %v4242 = vpop.f32.mrb[0].mxu0
      %v4243 = vadd.f32 0.0, %v4242
      %v4244 = vpop.f32.mrb[0].mxu0
      %v4245 = vpop.f32.mrb[0].mxu0
      %v4246 = vadd.f32 0.0, %v4245
      %v4247 = vpop.f32.mrb[0].mxu0
      %4248 = vmatprep.mubr.bf16.mxu0 0
      %4249 = vmatmul.mubr.bf16.gmra.mrb[0].mxu0 %v4170
      %v4250 = vpop.f32.mrb[0].mxu0
      %v4251 = vadd.f32 0.0, %v4250
      %v4252 = vpop.f32.mrb[0].mxu0
      %v4253 = vpop.f32.mrb[0].mxu0
      %v4254 = vadd.f32 0.0, %v4253
      %v4255 = vpop.f32.mrb[0].mxu0
      %4256 = vmatprep.mubr.bf16.mxu0 0
      %4257 = vmatmul.mubr.bf16.gmra.mrb[0].mxu0 %v4173
      %v4258 = vpop.f32.mrb[0].mxu0
      %v4259 = vadd.f32 0.0, %v4258
      %v4260 = vpop.f32.mrb[0].mxu0
      %v4261 = vpop.f32.mrb[0].mxu0
      %v4262 = vadd.f32 0.0, %v4261
      %v4263 = vpop.f32.mrb[0].mxu0
      %4264 = vmatprep.mubr.bf16.mxu0 0
      %4265 = vmatmul.mubr.bf16.gmra.mrb[0].mxu0 %v4176
      %v4266 = vpop.f32.mrb[0].mxu0
      %v4267 = vadd.f32 0.0, %v4266
      %v4268 = vpop.f32.mrb[0].mxu0
      %v4269 = vpop.f32.mrb[0].mxu0
      %v4270 = vadd.f32 0.0, %v4269
      %v4271 = vpop.f32.mrb[0].mxu0
      %4272 = vmatprep.mubr.bf16.mxu0 0
      %4273 = vmatmul.mubr.bf16.gmra.mrb[0].mxu0 %v4179
      %v4274 = vpop.f32.mrb[0].mxu0
      %v4275 = vadd.f32 0.0, %v4274
      %v4276 = vpop.f32.mrb[0].mxu0
      %v4277 = vpop.f32.mrb[0].mxu0
      %v4278 = vadd.f32 0.0, %v4277
      %v4279 = vpop.f32.mrb[0].mxu0
      %4280 = vdwg.mxu0
      %v4281 = vadd.f32 %v3649, %v4219
      %v4282 = vadd.f32 %v3650, %v4222
      %v4283 = vadd.f32 %v3651, %v4227
      %v4284 = vadd.f32 %v3652, %v4230
      %v4285 = vadd.f32 %v3653, %v4235
      %v4286 = vadd.f32 %v3654, %v4238
      %v4287 = vadd.f32 %v3655, %v4243
      %v4288 = vadd.f32 %v3656, %v4246
      %v4289 = vadd.f32 %v3657, %v4251
      %v4290 = vadd.f32 %v3658, %v4254
      %v4291 = vadd.f32 %v3659, %v4259
      %v4292 = vadd.f32 %v3660, %v4262
      %v4293 = vadd.f32 %v3661, %v4267
      %v4294 = vadd.f32 %v3662, %v4270
      %v4295 = vadd.f32 %v3663, %v4275
      %v4296 = vadd.f32 %v3664, %v4278
      %v4297 = vadd.f32 %v4281, %v624
      %v4298 = vadd.f32 %v4282, %v625
      %v4299 = vadd.f32 %v4283, %v626
      %v4300 = vadd.f32 %v4284, %v627
      %v4301 = vadd.f32 %v4285, %v628
      %v4302 = vadd.f32 %v4286, %v629
      %v4303 = vadd.f32 %v4287, %v630
      %v4304 = vadd.f32 %v4288, %v631
      %v4305 = vadd.f32 %v4289, %v632
      %v4306 = vadd.f32 %v4290, %v633
      %v4307 = vadd.f32 %v4291, %v634
      %v4308 = vadd.f32 %v4292, %v635
      %v4309 = vadd.f32 %v4293, %v636
      %v4310 = vadd.f32 %v4294, %v637
      %v4311 = vadd.f32 %v4295, %v638
      %v4312 = vadd.f32 %v4296, %v639
      %s4313 = sld [smem:[#allocation3]]
      %v4314 = vstv %s4313
      %v4315 = vmul.f32 %v4297, %v4314
      %v4316 = vmul.f32 %v4298, %v4314
      %v4317 = vmul.f32 %v4299, %v4314
      %v4318 = vmul.f32 %v4300, %v4314
      %v4319 = vmul.f32 %v4301, %v4314
      %v4320 = vmul.f32 %v4302, %v4314
      %v4321 = vmul.f32 %v4303, %v4314
      %v4322 = vmul.f32 %v4304, %v4314
      %v4323 = vmul.f32 %v4305, %v4314
      %v4324 = vmul.f32 %v4306, %v4314
      %v4325 = vmul.f32 %v4307, %v4314
      %v4326 = vmul.f32 %v4308, %v4314
      %v4327 = vmul.f32 %v4309, %v4314
      %v4328 = vmul.f32 %v4310, %v4314
      %v4329 = vmul.f32 %v4311, %v4314
      %v4330 = vmul.f32 %v4312, %v4314
      %v4331 = vadd.f32 %v4315, %v1376
      %v4332 = vadd.f32 %v4316, %v1377
      %v4333 = vadd.f32 %v4317, %v1378
      %v4334 = vadd.f32 %v4318, %v1379
      %v4335 = vadd.f32 %v4319, %v1380
      %v4336 = vadd.f32 %v4320, %v1381
      %v4337 = vadd.f32 %v4321, %v1382
      %v4338 = vadd.f32 %v4322, %v1383
      %v4339 = vadd.f32 %v4323, %v1384
      %v4340 = vadd.f32 %v4324, %v1385
      %v4341 = vadd.f32 %v4325, %v1386
      %v4342 = vadd.f32 %v4326, %v1387
      %v4343 = vadd.f32 %v4327, %v1388
      %v4344 = vadd.f32 %v4328, %v1389
      %v4345 = vadd.f32 %v4329, %v1390
      %v4346 = vadd.f32 %v4330, %v1391
      %v4347 = vmul.f32 %v4331, 0.5
      %v4348 = vmul.f32 %v4332, 0.5
      %v4349 = vmul.f32 %v4333, 0.5
      %v4350 = vmul.f32 %v4334, 0.5
      %v4351 = vmul.f32 %v4335, 0.5
      %v4352 = vmul.f32 %v4336, 0.5
      %v4353 = vmul.f32 %v4337, 0.5
      %v4354 = vmul.f32 %v4338, 0.5
      %v4355 = vmul.f32 %v4339, 0.5
      %v4356 = vmul.f32 %v4340, 0.5
      %v4357 = vmul.f32 %v4341, 0.5
      %v4358 = vmul.f32 %v4342, 0.5
      %v4359 = vmul.f32 %v4343, 0.5
      %v4360 = vmul.f32 %v4344, 0.5
      %v4361 = vmul.f32 %v4345, 0.5
      %v4362 = vmul.f32 %v4346, 0.5
      %v4363 = vld [vmem:[%s12] sm:$0x1]
      %v4365 = vlaneseq
      %v4366 = vshrl.u32 %v4365, 7
      %v4367 = vsub.s32 0, %v4366
      %v4368 = vrot.slane %v4363, %v4367
      %v4370 = vmul.f32 %v4347, %v4368
      %v4371 = vmul.f32 %v4348, %v4368
      %v4372 = vmul.f32 %v4349, %v4368
      %v4373 = vmul.f32 %v4350, %v4368
      %v4374 = vmul.f32 %v4351, %v4368
      %v4375 = vmul.f32 %v4352, %v4368
      %v4376 = vmul.f32 %v4353, %v4368
      %v4377 = vmul.f32 %v4354, %v4368
      %v4378 = vmul.f32 %v4355, %v4368
      %v4379 = vmul.f32 %v4356, %v4368
      %v4380 = vmul.f32 %v4357, %v4368
      %v4381 = vmul.f32 %v4358, %v4368
      %v4382 = vmul.f32 %v4359, %v4368
      %v4383 = vmul.f32 %v4360, %v4368
      %v4384 = vmul.f32 %v4361, %v4368
      %v4385 = vmul.f32 %v4362, %v4368
      %v4386 = vld [vmem:[%s13] sm:$0x1]
      %v4388 = vlaneseq
      %v4389 = vshrl.u32 %v4388, 7
      %v4390 = vsub.s32 0, %v4389
      %v4391 = vrot.slane %v4386, %v4390
      %v4393 = vadd.f32 %v4370, %v4391
      %v4394 = vadd.f32 %v4371, %v4391
      %v4395 = vadd.f32 %v4372, %v4391
      %v4396 = vadd.f32 %v4373, %v4391
      %v4397 = vadd.f32 %v4374, %v4391
      %v4398 = vadd.f32 %v4375, %v4391
      %v4399 = vadd.f32 %v4376, %v4391
      %v4400 = vadd.f32 %v4377, %v4391
      %v4401 = vadd.f32 %v4378, %v4391
      %v4402 = vadd.f32 %v4379, %v4391
      %v4403 = vadd.f32 %v4380, %v4391
      %v4404 = vadd.f32 %v4381, %v4391
      %v4405 = vadd.f32 %v4382, %v4391
      %v4406 = vadd.f32 %v4383, %v4391
      %v4407 = vadd.f32 %v4384, %v4391
      %v4408 = vadd.f32 %v4385, %v4391
      %v4409 = vmax.f32 %v4393, 0.0
      %v4410 = vmax.f32 %v4394, 0.0
      %v4411 = vmax.f32 %v4395, 0.0
      %v4412 = vmax.f32 %v4396, 0.0
      %v4413 = vmax.f32 %v4397, 0.0
      %v4414 = vmax.f32 %v4398, 0.0
      %v4415 = vmax.f32 %v4399, 0.0
      %v4416 = vmax.f32 %v4400, 0.0
      %v4417 = vmax.f32 %v4401, 0.0
      %v4418 = vmax.f32 %v4402, 0.0
      %v4419 = vmax.f32 %v4403, 0.0
      %v4420 = vmax.f32 %v4404, 0.0
      %v4421 = vmax.f32 %v4405, 0.0
      %v4422 = vmax.f32 %v4406, 0.0
      %v4423 = vmax.f32 %v4407, 0.0
      %v4424 = vmax.f32 %v4408, 0.0
      %vm4425 = vcmask 392192
      %4426 = vst.msk [vmem:[#allocation2] sm:$0xff] %vm4425, 0.0
      %4427 = vst.msk [vmem:[#allocation2 + $0x8] sm:$0xff] %vm4425, 0.0
      %4428 = vst.msk [vmem:[#allocation2 + $0x10] sm:$0xff] %vm4425, 0.0
      %4429 = vst.msk [vmem:[#allocation2 + $0x18] sm:$0xff] %vm4425, 0.0
      %4430 = vst.msk [vmem:[#allocation2 + $0x20] sm:$0xff] %vm4425, 0.0
      %4431 = vst.msk [vmem:[#allocation2 + $0x28] sm:$0xff] %vm4425, 0.0
      %4432 = vst.msk [vmem:[#allocation2 + $0x30] sm:$0xff] %vm4425, 0.0
      %4433 = vst.msk [vmem:[#allocation2 + $0x38] sm:$0xff] %vm4425, 0.0
      %4434 = vst.msk [vmem:[#allocation2 + $0x40] sm:$0xff] %vm4425, 0.0
      %4435 = vst.msk [vmem:[#allocation2 + $0x48] sm:$0xff] %vm4425, 0.0
      %4436 = vst.msk [vmem:[#allocation2 + $0x50] sm:$0xff] %vm4425, 0.0
      %4437 = vst.msk [vmem:[#allocation2 + $0x58] sm:$0xff] %vm4425, 0.0
      %4438 = vst.msk [vmem:[#allocation2 + $0x60] sm:$0xff] %vm4425, 0.0
      %4439 = vst.msk [vmem:[#allocation2 + $0x68] sm:$0xff] %vm4425, 0.0
      %4440 = vst.msk [vmem:[#allocation2 + $0x70] sm:$0xff] %vm4425, 0.0
      %4441 = vst.msk [vmem:[#allocation2 + $0x78] sm:$0xff] %vm4425, 0.0
      %4442 = vst.msk [vmem:[#allocation2 + $0x8] sm:$0xff] %vm656, %v4409
      %4443 = vst.msk [vmem:[#allocation2 + $0x10] sm:$0xff] %vm656, %v4410
      %4444 = vst.msk [vmem:[#allocation2 + $0x18] sm:$0xff] %vm656, %v4411
      %4445 = vst.msk [vmem:[#allocation2 + $0x20] sm:$0xff] %vm656, %v4412
      %4446 = vst.msk [vmem:[#allocation2 + $0x28] sm:$0xff] %vm656, %v4413
      %4447 = vst.msk [vmem:[#allocation2 + $0x30] sm:$0xff] %vm656, %v4414
      %4448 = vst.msk [vmem:[#allocation2 + $0x38] sm:$0xff] %vm656, %v4415
      %4449 = vst.msk [vmem:[#allocation2 + $0x40] sm:$0xff] %vm656, %v4416
      %4450 = vst.msk [vmem:[#allocation2 + $0x48] sm:$0xff] %vm656, %v4417
      %4451 = vst.msk [vmem:[#allocation2 + $0x50] sm:$0xff] %vm656, %v4418
      %4452 = vst.msk [vmem:[#allocation2 + $0x58] sm:$0xff] %vm656, %v4419
      %4453 = vst.msk [vmem:[#allocation2 + $0x60] sm:$0xff] %vm656, %v4420
      %4454 = vst.msk [vmem:[#allocation2 + $0x68] sm:$0xff] %vm656, %v4421
      %4455 = vst.msk [vmem:[#allocation2 + $0x70] sm:$0xff] %vm656, %v4422
      %4456 = vst.msk [vmem:[#allocation2 + $0x78] sm:$0xff] %vm656, %v4423
      %4473 = vrot.lane.b32.xlu0 %v4409, 16
      %v4474 = vpop.permute.xlu0 %4473
      %4475 = vrot.lane.b32.xlu0 %v4410, 16
      %v4476 = vpop.permute.xlu0 %4475
      %4477 = vrot.lane.b32.xlu0 %v4411, 16
      %v4478 = vpop.permute.xlu0 %4477
      %4479 = vrot.lane.b32.xlu0 %v4412, 16
      %v4480 = vpop.permute.xlu0 %4479
      %4481 = vrot.lane.b32.xlu0 %v4413, 16
      %v4482 = vpop.permute.xlu0 %4481
      %4483 = vrot.lane.b32.xlu0 %v4414, 16
      %v4484 = vpop.permute.xlu0 %4483
      %4485 = vrot.lane.b32.xlu0 %v4415, 16
      %v4486 = vpop.permute.xlu0 %4485
      %4487 = vrot.lane.b32.xlu0 %v4416, 16
      %v4488 = vpop.permute.xlu0 %4487
      %4489 = vrot.lane.b32.xlu0 %v4417, 16
      %v4490 = vpop.permute.xlu0 %4489
      %4491 = vrot.lane.b32.xlu0 %v4418, 16
      %v4492 = vpop.permute.xlu0 %4491
      %4493 = vrot.lane.b32.xlu0 %v4419, 16
      %v4494 = vpop.permute.xlu0 %4493
      %4495 = vrot.lane.b32.xlu0 %v4420, 16
      %v4496 = vpop.permute.xlu0 %4495
      %4497 = vrot.lane.b32.xlu0 %v4421, 16
      %v4498 = vpop.permute.xlu0 %4497
      %4499 = vrot.lane.b32.xlu0 %v4422, 16
      %v4500 = vpop.permute.xlu0 %4499
      %4501 = vrot.lane.b32.xlu0 %v4423, 16
      %v4502 = vpop.permute.xlu0 %4501
      %4503 = vrot.lane.b32.xlu0 %v4424, 16
      %v4504 = vpop.permute.xlu0 %4503
      %vm4521 = vcmask 261248
      %4522 = vst.msk [vmem:[#allocation2] sm:$0xff] %vm4521, %v4474
      %4523 = vst.msk [vmem:[#allocation2 + $0x8] sm:$0xff] %vm4521, %v4476
      %4524 = vst.msk [vmem:[#allocation2 + $0x10] sm:$0xff] %vm4521, %v4478
      %4525 = vst.msk [vmem:[#allocation2 + $0x18] sm:$0xff] %vm4521, %v4480
      %4526 = vst.msk [vmem:[#allocation2 + $0x20] sm:$0xff] %vm4521, %v4482
      %4527 = vst.msk [vmem:[#allocation2 + $0x28] sm:$0xff] %vm4521, %v4484
      %4528 = vst.msk [vmem:[#allocation2 + $0x30] sm:$0xff] %vm4521, %v4486
      %4529 = vst.msk [vmem:[#allocation2 + $0x38] sm:$0xff] %vm4521, %v4488
      %4530 = vst.msk [vmem:[#allocation2 + $0x40] sm:$0xff] %vm4521, %v4490
      %4531 = vst.msk [vmem:[#allocation2 + $0x48] sm:$0xff] %vm4521, %v4492
      %4532 = vst.msk [vmem:[#allocation2 + $0x50] sm:$0xff] %vm4521, %v4494
      %4533 = vst.msk [vmem:[#allocation2 + $0x58] sm:$0xff] %vm4521, %v4496
      %4534 = vst.msk [vmem:[#allocation2 + $0x60] sm:$0xff] %vm4521, %v4498
      %4535 = vst.msk [vmem:[#allocation2 + $0x68] sm:$0xff] %vm4521, %v4500
      %4536 = vst.msk [vmem:[#allocation2 + $0x70] sm:$0xff] %vm4521, %v4502
      %4537 = vst.msk [vmem:[#allocation2 + $0x78] sm:$0xff] %vm4521, %v4504
      %4538 = vrot.lane.b32.xlu0 %v4410, 32
      %v4539 = vpop.permute.xlu0 %4538
      %4540 = vrot.lane.b32.xlu0 %v4411, 32
      %v4541 = vpop.permute.xlu0 %4540
      %4542 = vrot.lane.b32.xlu0 %v4412, 32
      %v4543 = vpop.permute.xlu0 %4542
      %4544 = vrot.lane.b32.xlu0 %v4413, 32
      %v4545 = vpop.permute.xlu0 %4544
      %4546 = vrot.lane.b32.xlu0 %v4414, 32
      %v4547 = vpop.permute.xlu0 %4546
      %4548 = vrot.lane.b32.xlu0 %v4415, 32
      %v4549 = vpop.permute.xlu0 %4548
      %4550 = vrot.lane.b32.xlu0 %v4416, 32
      %v4551 = vpop.permute.xlu0 %4550
      %4552 = vrot.lane.b32.xlu0 %v4417, 32
      %v4553 = vpop.permute.xlu0 %4552
      %4554 = vrot.lane.b32.xlu0 %v4418, 32
      %v4555 = vpop.permute.xlu0 %4554
      %4556 = vrot.lane.b32.xlu0 %v4419, 32
      %v4557 = vpop.permute.xlu0 %4556
      %4558 = vrot.lane.b32.xlu0 %v4420, 32
      %v4559 = vpop.permute.xlu0 %4558
      %4560 = vrot.lane.b32.xlu0 %v4421, 32
      %v4561 = vpop.permute.xlu0 %4560
      %4562 = vrot.lane.b32.xlu0 %v4422, 32
      %v4563 = vpop.permute.xlu0 %4562
      %4564 = vrot.lane.b32.xlu0 %v4423, 32
      %v4565 = vpop.permute.xlu0 %4564
      %4566 = vrot.lane.b32.xlu0 %v4424, 32
      %v4567 = vpop.permute.xlu0 %4566
      %vm4583 = vcmask 392448
      %4584 = vst.msk [vmem:[#allocation2] sm:$0xff] %vm4583, %v4539
      %4585 = vst.msk [vmem:[#allocation2 + $0x8] sm:$0xff] %vm4583, %v4541
      %4586 = vst.msk [vmem:[#allocation2 + $0x10] sm:$0xff] %vm4583, %v4543
      %4587 = vst.msk [vmem:[#allocation2 + $0x18] sm:$0xff] %vm4583, %v4545
      %4588 = vst.msk [vmem:[#allocation2 + $0x20] sm:$0xff] %vm4583, %v4547
      %4589 = vst.msk [vmem:[#allocation2 + $0x28] sm:$0xff] %vm4583, %v4549
      %4590 = vst.msk [vmem:[#allocation2 + $0x30] sm:$0xff] %vm4583, %v4551
      %4591 = vst.msk [vmem:[#allocation2 + $0x38] sm:$0xff] %vm4583, %v4553
      %4592 = vst.msk [vmem:[#allocation2 + $0x40] sm:$0xff] %vm4583, %v4555
      %4593 = vst.msk [vmem:[#allocation2 + $0x48] sm:$0xff] %vm4583, %v4557
      %4594 = vst.msk [vmem:[#allocation2 + $0x50] sm:$0xff] %vm4583, %v4559
      %4595 = vst.msk [vmem:[#allocation2 + $0x58] sm:$0xff] %vm4583, %v4561
      %4596 = vst.msk [vmem:[#allocation2 + $0x60] sm:$0xff] %vm4583, %v4563
      %4597 = vst.msk [vmem:[#allocation2 + $0x68] sm:$0xff] %vm4583, %v4565
      %4598 = vst.msk [vmem:[#allocation2 + $0x70] sm:$0xff] %vm4583, %v4567
      %v4599 = vld [vmem:[#allocation2] sm:$0xff]
      %v4600 = vld [vmem:[#allocation2 + $0x8] sm:$0xff]
      %v4601 = vld [vmem:[#allocation2 + $0x10] sm:$0xff]
      %v4602 = vld [vmem:[#allocation2 + $0x18] sm:$0xff]
      %v4603 = vld [vmem:[#allocation2 + $0x20] sm:$0xff]
      %v4604 = vld [vmem:[#allocation2 + $0x28] sm:$0xff]
      %v4605 = vld [vmem:[#allocation2 + $0x30] sm:$0xff]
      %v4606 = vld [vmem:[#allocation2 + $0x38] sm:$0xff]
      %v4607 = vld [vmem:[#allocation2 + $0x40] sm:$0xff]
      %v4608 = vld [vmem:[#allocation2 + $0x48] sm:$0xff]
      %v4609 = vld [vmem:[#allocation2 + $0x50] sm:$0xff]
      %v4610 = vld [vmem:[#allocation2 + $0x58] sm:$0xff]
      %v4611 = vld [vmem:[#allocation2 + $0x60] sm:$0xff]
      %v4612 = vld [vmem:[#allocation2 + $0x68] sm:$0xff]
      %v4613 = vld [vmem:[#allocation2 + $0x70] sm:$0xff]
      %v4614 = vld [vmem:[#allocation2 + $0x78] sm:$0xff]
      %v4615 = vld [vmem:[%s14] sm:$0xf]
      %v4616 = vld [vmem:[%s14 + $0x4] sm:$0xf]
      %v4617 = vld [vmem:[%s14 + $0x8] sm:$0xf]
      %v4618 = vld [vmem:[%s14 + $0xc] sm:$0xf]
      %v4619 = vld [vmem:[%s14 + $0x10] sm:$0xf]
      %v4620 = vld [vmem:[%s14 + $0x14] sm:$0xf]
      %v4621 = vpack.c.bf16 %v4600, %v4599
      %v4622 = vpack.c.bf16 %v4602, %v4601
      %v4623 = vpack.c.bf16 %v4604, %v4603
      %v4624 = vpack.c.bf16 %v4606, %v4605
      %v4625 = vpack.c.bf16 %v4608, %v4607
      %v4626 = vpack.c.bf16 %v4610, %v4609
      %v4627 = vpack.c.bf16 %v4612, %v4611
      %v4628 = vpack.c.bf16 %v4614, %v4613
      %v4629 = vld [vmem:[%s15] sm:$0x1]
      %v4631 = vlaneseq
      %v4632 = vshrl.u32 %v4631, 7
      %v4633 = vsub.s32 0, %v4632
      %v4634 = vrot.slane %v4629, %v4633
      %v4642 = vunpack.c.l.b16 %v4615
      %v4643 = vunpack.c.l.b16 %v4616
      %v4644 = vunpack.c.l.b16 %v4617
      %v4645 = vunpack.c.l.b16 %v4618
      %v4646 = vunpack.c.l.b16 %v4619
      %v4647 = vunpack.c.l.b16 %v4620
      %v4648 = vpack.c.b16 %v4643, %v4642
      %v4649 = vpack.c.b16 %v4645, %v4644
      %v4650 = vpack.c.b16 %v4647, %v4646
      %v4655 = vsel %vm4425, %v4621, 0
      %v4658 = vsel %vm4425, %v4622, 0
      %v4661 = vsel %vm4425, %v4623, 0
      %v4664 = vsel %vm4425, %v4624, 0
      %v4667 = vsel %vm4425, %v4625, 0
      %v4670 = vsel %vm4425, %v4626, 0
      %v4673 = vsel %vm4425, %v4627, 0
      %v4676 = vsel %vm4425, %v4628, 0
      %4678 = vmatprep.subr.bf16.mxu0 0
      %4679 = vmatpush1.bf16.msra.mxu0 %v4648
      %4680 = vmatprep.subr.bf16.mxu0 0
      %4681 = vmatpush1.bf16.msra.mxu0 %v4649
      %4682 = vmatprep.subr.bf16.mxu0 0
      %4683 = vmatpush1.bf16.msra.mxu0 %v4650
      %4684 = vmatprep.subr.bf16.mxu0 0
      %4685 = vmatpush1.bf16.msra.mxu0 0
      %4686 = vmatprep.subr.bf16.mxu0 0
      %4687 = vmatpush1.bf16.msra.mxu0 0
      %4688 = vmatprep.subr.bf16.mxu0 0
      %4689 = vmatpush1.bf16.msra.mxu0 0
      %4690 = vmatprep.subr.bf16.mxu0 0
      %4691 = vmatpush1.bf16.msra.mxu0 0
      %4692 = vmatprep.subr.bf16.mxu0 0
      %4693 = vmatpush1.bf16.msra.mxu0 0
      %4694 = vmatprep.subr.bf16.mxu0 0
      %4695 = vmatpush1.bf16.msra.mxu0 0
      %4696 = vmatprep.subr.bf16.mxu0 0
      %4697 = vmatpush1.bf16.msra.mxu0 0
      %4698 = vmatprep.subr.bf16.mxu0 0
      %4699 = vmatpush1.bf16.msra.mxu0 0
      %4700 = vmatprep.subr.bf16.mxu0 0
      %4701 = vmatpush1.bf16.msra.mxu0 0
      %4702 = vmatprep.subr.bf16.mxu0 0
      %4703 = vmatpush1.bf16.msra.mxu0 0
      %4704 = vmatprep.subr.bf16.mxu0 0
      %4705 = vmatpush1.bf16.msra.mxu0 0
      %4706 = vmatprep.subr.bf16.mxu0 0
      %4707 = vmatpush1.bf16.msra.mxu0 0
      %4708 = vmatprep.subr.bf16.mxu0 0
      %4709 = vmatpush1.bf16.msra.mxu0 0
      %4710 = vmatprep.mubr.bf16.mxu0 0
      %4711 = vmatmul.mubr.bf16.gmra.mrb[0].mxu0 %v4655
      %v4712 = vpop.f32.mrb[0].mxu0
      %v4713 = vadd.f32 %v4634, %v4712
      %v4714 = vpop.f32.mrb[0].mxu0
      %v4715 = vpop.f32.mrb[0].mxu0
      %v4716 = vadd.f32 %v4634, %v4715
      %v4717 = vpop.f32.mrb[0].mxu0
      %4718 = vmatprep.mubr.bf16.mxu0 0
      %4719 = vmatmul.mubr.bf16.gmra.mrb[0].mxu0 %v4658
      %v4720 = vpop.f32.mrb[0].mxu0
      %v4721 = vadd.f32 %v4634, %v4720
      %v4722 = vpop.f32.mrb[0].mxu0
      %v4723 = vpop.f32.mrb[0].mxu0
      %v4724 = vadd.f32 %v4634, %v4723
      %v4725 = vpop.f32.mrb[0].mxu0
      %4726 = vmatprep.mubr.bf16.mxu0 0
      %4727 = vmatmul.mubr.bf16.gmra.mrb[0].mxu0 %v4661
      %v4728 = vpop.f32.mrb[0].mxu0
      %v4729 = vadd.f32 %v4634, %v4728
      %v4730 = vpop.f32.mrb[0].mxu0
      %v4731 = vpop.f32.mrb[0].mxu0
      %v4732 = vadd.f32 %v4634, %v4731
      %v4733 = vpop.f32.mrb[0].mxu0
      %4734 = vmatprep.mubr.bf16.mxu0 0
      %4735 = vmatmul.mubr.bf16.gmra.mrb[0].mxu0 %v4664
      %v4736 = vpop.f32.mrb[0].mxu0
      %v4737 = vadd.f32 %v4634, %v4736
      %v4738 = vpop.f32.mrb[0].mxu0
      %v4739 = vpop.f32.mrb[0].mxu0
      %v4740 = vadd.f32 %v4634, %v4739
      %v4741 = vpop.f32.mrb[0].mxu0
      %4742 = vmatprep.mubr.bf16.mxu0 0
      %4743 = vmatmul.mubr.bf16.gmra.mrb[0].mxu0 %v4667
      %v4744 = vpop.f32.mrb[0].mxu0
      %v4745 = vadd.f32 %v4634, %v4744
      %v4746 = vpop.f32.mrb[0].mxu0
      %v4747 = vpop.f32.mrb[0].mxu0
      %v4748 = vadd.f32 %v4634, %v4747
      %v4749 = vpop.f32.mrb[0].mxu0
      %4750 = vmatprep.mubr.bf16.mxu0 0
      %4751 = vmatmul.mubr.bf16.gmra.mrb[0].mxu0 %v4670
      %v4752 = vpop.f32.mrb[0].mxu0
      %v4753 = vadd.f32 %v4634, %v4752
      %v4754 = vpop.f32.mrb[0].mxu0
      %v4755 = vpop.f32.mrb[0].mxu0
      %v4756 = vadd.f32 %v4634, %v4755
      %v4757 = vpop.f32.mrb[0].mxu0
      %4758 = vmatprep.mubr.bf16.mxu0 0
      %4759 = vmatmul.mubr.bf16.gmra.mrb[0].mxu0 %v4673
      %v4760 = vpop.f32.mrb[0].mxu0
      %v4761 = vadd.f32 %v4634, %v4760
      %v4762 = vpop.f32.mrb[0].mxu0
      %v4763 = vpop.f32.mrb[0].mxu0
      %v4764 = vadd.f32 %v4634, %v4763
      %v4765 = vpop.f32.mrb[0].mxu0
      %4766 = vmatprep.mubr.bf16.mxu0 0
      %4767 = vmatmul.mubr.bf16.gmra.mrb[0].mxu0 %v4676
      %v4768 = vpop.f32.mrb[0].mxu0
      %v4769 = vadd.f32 %v4634, %v4768
      %v4770 = vpop.f32.mrb[0].mxu0
      %v4771 = vpop.f32.mrb[0].mxu0
      %v4772 = vadd.f32 %v4634, %v4771
      %v4773 = vpop.f32.mrb[0].mxu0
      %4774 = vdwg.mxu0
      %v4775 = vld [vmem:[%s16] sm:$0x1]
      %v4777 = vlaneseq
      %v4778 = vshrl.u32 %v4777, 7
      %v4779 = vsub.s32 0, %v4778
      %v4780 = vrot.slane %v4775, %v4779
      %v4782 = vmul.f32 %v4713, %v4780
      %v4783 = vmul.f32 %v4716, %v4780
      %v4784 = vmul.f32 %v4721, %v4780
      %v4785 = vmul.f32 %v4724, %v4780
      %v4786 = vmul.f32 %v4729, %v4780
      %v4787 = vmul.f32 %v4732, %v4780
      %v4788 = vmul.f32 %v4737, %v4780
      %v4789 = vmul.f32 %v4740, %v4780
      %v4790 = vmul.f32 %v4745, %v4780
      %v4791 = vmul.f32 %v4748, %v4780
      %v4792 = vmul.f32 %v4753, %v4780
      %v4793 = vmul.f32 %v4756, %v4780
      %v4794 = vmul.f32 %v4761, %v4780
      %v4795 = vmul.f32 %v4764, %v4780
      %v4796 = vmul.f32 %v4769, %v4780
      %v4797 = vmul.f32 %v4772, %v4780
      %v4798 = vld [vmem:[%s17] sm:$0x1]
      %v4800 = vlaneseq
      %v4801 = vshrl.u32 %v4800, 7
      %v4802 = vsub.s32 0, %v4801
      %v4803 = vrot.slane %v4798, %v4802
      %v4805 = vadd.f32 %v4782, %v4803
      %v4806 = vadd.f32 %v4783, %v4803
      %v4807 = vadd.f32 %v4784, %v4803
      %v4808 = vadd.f32 %v4785, %v4803
      %v4809 = vadd.f32 %v4786, %v4803
      %v4810 = vadd.f32 %v4787, %v4803
      %v4811 = vadd.f32 %v4788, %v4803
      %v4812 = vadd.f32 %v4789, %v4803
      %v4813 = vadd.f32 %v4790, %v4803
      %v4814 = vadd.f32 %v4791, %v4803
      %v4815 = vadd.f32 %v4792, %v4803
      %v4816 = vadd.f32 %v4793, %v4803
      %v4817 = vadd.f32 %v4794, %v4803
      %v4818 = vadd.f32 %v4795, %v4803
      %v4819 = vadd.f32 %v4796, %v4803
      %v4820 = vadd.f32 %v4797, %v4803
      %v4821 = vadd.f32 %v4805, %v578
      %v4822 = vadd.f32 %v4806, %v579
      %v4823 = vadd.f32 %v4807, %v580
      %v4824 = vadd.f32 %v4808, %v581
      %v4825 = vadd.f32 %v4809, %v582
      %v4826 = vadd.f32 %v4810, %v583
      %v4827 = vadd.f32 %v4811, %v584
      %v4828 = vadd.f32 %v4812, %v585
      %v4829 = vadd.f32 %v4813, %v586
      %v4830 = vadd.f32 %v4814, %v587
      %v4831 = vadd.f32 %v4815, %v588
      %v4832 = vadd.f32 %v4816, %v589
      %v4833 = vadd.f32 %v4817, %v590
      %v4834 = vadd.f32 %v4818, %v591
      %v4835 = vadd.f32 %v4819, %v592
      %v4836 = vadd.f32 %v4820, %v593
      %v4837 = vmax.f32 %v4821, 0.0
      %v4838 = vmax.f32 %v4822, 0.0
      %v4839 = vmax.f32 %v4823, 0.0
      %v4840 = vmax.f32 %v4824, 0.0
      %v4841 = vmax.f32 %v4825, 0.0
      %v4842 = vmax.f32 %v4826, 0.0
      %v4843 = vmax.f32 %v4827, 0.0
      %v4844 = vmax.f32 %v4828, 0.0
      %v4845 = vmax.f32 %v4829, 0.0
      %v4846 = vmax.f32 %v4830, 0.0
      %v4847 = vmax.f32 %v4831, 0.0
      %v4848 = vmax.f32 %v4832, 0.0
      %v4849 = vmax.f32 %v4833, 0.0
      %v4850 = vmax.f32 %v4834, 0.0
      %v4851 = vmax.f32 %v4835, 0.0
      %v4852 = vmax.f32 %v4836, 0.0
      %4853 = vst.msk [vmem:[%s576] sm:$0xff] %vm656, %v4837
      %4854 = vst.msk [vmem:[%s576 + $0x8] sm:$0xff] %vm656, %v4838
      %4855 = vst.msk [vmem:[%s576 + $0x10] sm:$0xff] %vm656, %v4839
      %4856 = vst.msk [vmem:[%s576 + $0x18] sm:$0xff] %vm656, %v4840
      %4857 = vst.msk [vmem:[%s576 + $0x20] sm:$0xff] %vm656, %v4841
      %4858 = vst.msk [vmem:[%s576 + $0x28] sm:$0xff] %vm656, %v4842
      %4859 = vst.msk [vmem:[%s576 + $0x30] sm:$0xff] %vm656, %v4843
      %4860 = vst.msk [vmem:[%s576 + $0x38] sm:$0xff] %vm656, %v4844
      %4861 = vst.msk [vmem:[%s576 + $0x40] sm:$0xff] %vm656, %v4845
      %4862 = vst.msk [vmem:[%s576 + $0x48] sm:$0xff] %vm656, %v4846
      %4863 = vst.msk [vmem:[%s576 + $0x50] sm:$0xff] %vm656, %v4847
      %4864 = vst.msk [vmem:[%s576 + $0x58] sm:$0xff] %vm656, %v4848
      %4865 = vst.msk [vmem:[%s576 + $0x60] sm:$0xff] %vm656, %v4849
      %4866 = vst.msk [vmem:[%s576 + $0x68] sm:$0xff] %vm656, %v4850
      %4867 = vst.msk [vmem:[%s576 + $0x70] sm:$0xff] %vm656, %v4851
      %4868 = vst.msk [vmem:[%s576 + $0x78] sm:$0xff] %vm656, %v4852
      %p4869 = scmp.lt.s32.totalorder %s30, 1
      %s4870 = scalar_select %p4869, %s30, 1
      %s4871 = smul.addr %s4870, 16
      %s4872 = smul.addr %s4871, 8
      %s4873 = scalar_lea.vmem %s18, %s4872
      // Predicated region
      $region93: #{graph_conv_block_forward.1} parent=91 // pred_check
        %p4874 = pneg %p431
      $region94: #{graph_conv_block_forward.1} parent=91 // pred_check_branch
        %4876 = sbr.rel (%p4874) target = $region96
      $region95: #{graph_conv_block_forward.1} parent=91 // pred_region
        _
      $region96: #{graph_conv_block_forward.1} parent=91 // pred_fallthru
        _
    $region92: #{graph_conv_block_forward.1} parent=5 // pred_fallthru
      _
    %p4877 = scmp.le.s32.totalorder 2, %s25
    // Predicated region
    $region97: #{graph_conv_block_forward.1} parent=5 // pred_check
      %p4878 = pneg %p4877
    $region98: #{graph_conv_block_forward.1} parent=5 // pred_check_branch
      %4880 = sbr.rel (%p4878) target = $region100
    $region99: #{graph_conv_block_forward.1} parent=5 // pred_region
      %s4881 = ssub.s32 %s25, 2
      // Predicated region
      $region101: #{graph_conv_block_forward.1} parent=99 // pred_check
        %p4882 = pneg %p437
      $region102: #{graph_conv_block_forward.1} parent=99 // pred_check_branch
        %4884 = sbr.rel (%p4882) target = $region104
      $region103: #{graph_conv_block_forward.1} parent=99 // pred_region
        %p4885 = scmp.lt.s32.totalorder %s31, 1
        %s4886 = scalar_select %p4885, %s31, 1
        %s4887 = smul.addr %s4886, 16
        %s4888 = smul.addr %s4887, 8
        %s4889 = scalar_lea.vmem %s18, %s4888
      $region104: #{graph_conv_block_forward.1} parent=99 // pred_fallthru
        _
    $region100: #{graph_conv_block_forward.1} parent=5 // pred_fallthru
      _
  $region6: #{graph_conv_block_forward.1} parent=0 // loop_footer
    %s29 = sadd.s32 1, %s25
  $region7: #{graph_conv_block_forward.1} parent=0 // loop_footer_branch
    %24 = sbr.rel target = $region3
  $region8: #{graph_conv_block_forward.1} parent=0 // loop_exit
    _

</llo_original>
